<compile_context>
chip_gen: v6e
topology: v6e:2x2x1
jax: 0.10.0
libtpu: 0.0.40
codegen_flags: <defaults>
</compile_context>

<pallas_src>
import functools

import numpy as np
import jax
import jax.numpy as jnp
from jax import lax
from jax.experimental import pallas as pl
from jax.experimental.pallas import tpu as pltpu


def _round_up(n, m):
    return -(-n // m) * m


@functools.lru_cache(maxsize=1)
def _vmem_limit():
    """Per-generation scoped-VMEM limit (~48 MiB v7x, ~96 MiB v5e/v6e)."""
    try:
        cap = int(pltpu.get_tpu_info().vmem_capacity_bytes)
        return int(min(max((cap * 3) // 4, 32 * 1024 * 1024), 100 * 1024 * 1024))
    except Exception:
        return 48 * 1024 * 1024


# -----------------------------------------------------------------------------
# Fused multi-layer LSTM kernel (grid = parallel batch blocks, time in-kernel)
# -----------------------------------------------------------------------------
def _fused_lstm_kernel(*refs, nlayers, hg, seq_len, bb):
    """refs = (x, [w_ih, w_hh, b] * nlayers, out, gates_scratch).

    x:     (T*bb, E)    bf16  rows = t*bb + batch-within-block
    w_ih:  (in_l, 4Hg)  bf16  gate columns padded to 128-lane boundaries
    w_hh:  (Hg, 4Hg)    bf16
    b:     (1, 4Hg)     f32   bias_ih + bias_hh (padded lanes = 0)
    out:   (T*bb, Hg)   bf16  per-layer activations; last layer survives
    gates: (T*bb, 4Hg)  f32   hoisted input projection (VMEM scratch)
    """
    T, Bb, Hg = seq_len, bb, hg

    x_ref = refs[0]
    out_ref = refs[1 + 3 * nlayers]
    gates_sc = refs[2 + 3 * nlayers]

    for layer in range(nlayers):
        w_ih_ref = refs[1 + 3 * layer]
        w_hh_ref = refs[2 + 3 * layer]
        b_ref = refs[3 + 3 * layer]

        # ---- Phase 1 (hoisted): one big MXU matmul for the input projection
        #      of all timesteps; bias folded in here, not per step. -----------
        inp = x_ref[...] if layer == 0 else out_ref[...]          # bf16, no cast
        gates_sc[...] = (
            jnp.dot(inp, w_ih_ref[...], preferred_element_type=jnp.float32)
            + b_ref[...])                                         # (T*bb, 4Hg) f32

        # ---- Phase 2: recurrence — only the small recurrent matmul and the
        #      gate math remain inside the time loop. -------------------------
        w_hh = w_hh_ref[...]                                      # bf16 (Hg, 4Hg)

        def step(t, carry, w_hh=w_hh):
            h, c = carry                                          # f32 (Bb, Hg)
            row = pl.multiple_of(t * Bb, Bb)                      # tile-aligned start
            g = (gates_sc[pl.ds(row, Bb), :]
                 + jnp.dot(h.astype(jnp.bfloat16), w_hh,
                           preferred_element_type=jnp.float32))
            # Gate slices start on 128-lane boundaries (Hg % 128 == 0).
            i_g = jax.nn.sigmoid(g[:, 0 * Hg:1 * Hg])
            f_g = jax.nn.sigmoid(g[:, 1 * Hg:2 * Hg])
            g_g = jnp.tanh(g[:, 2 * Hg:3 * Hg])
            o_g = jax.nn.sigmoid(g[:, 3 * Hg:4 * Hg])
            c_new = f_g * c + i_g * g_g
            h_new = o_g * jnp.tanh(c_new)
            out_ref[pl.ds(row, Bb), :] = h_new.astype(out_ref.dtype)  # bf16 store
            return h_new, c_new

        init = (jnp.zeros((Bb, Hg), jnp.float32),
                jnp.zeros((Bb, Hg), jnp.float32))
        lax.fori_loop(0, T, step, init, unroll=(T if T <= 32 else 8))


def fused_lstm(x_blocks, layers, *, seq_len, bb, hg):
    """x_blocks: (NB, T*bb, E) bf16.  Returns (NB, T*bb, Hg) bf16."""
    NB, TB, E = x_blocks.shape
    assert TB == seq_len * bb and bb % 16 == 0
    L = len(layers)

    in_specs = [pl.BlockSpec((None, TB, E), lambda i: (i, 0, 0))]
    args = [x_blocks]
    for layer in layers:
        in_dim = layer["w_ih_t"].shape[0]
        in_specs += [
            pl.BlockSpec((in_dim, 4 * hg), lambda i: (0, 0)),
            pl.BlockSpec((hg, 4 * hg), lambda i: (0, 0)),
            pl.BlockSpec((1, 4 * hg), lambda i: (0, 0)),
        ]
        args += [layer["w_ih_t"], layer["w_hh_t"], layer["b"]]

    kernel = functools.partial(_fused_lstm_kernel, nlayers=L, hg=hg,
                               seq_len=seq_len, bb=bb)

    return pl.pallas_call(
        kernel,
        out_shape=jax.ShapeDtypeStruct((NB, TB, hg), jnp.bfloat16),
        grid_spec=pltpu.PrefetchScalarGridSpec(
            num_scalar_prefetch=0,
            grid=(NB,),                      # independent batch blocks
            in_specs=in_specs,
            out_specs=pl.BlockSpec((None, TB, hg), lambda i: (i, 0, 0)),
            scratch_shapes=[pltpu.VMEM((TB, 4 * hg), jnp.float32)],
        ),
        compiler_params=pltpu.CompilerParams(
            dimension_semantics=("parallel",),   # v7x: 2 TCs split batch blocks
            vmem_limit_bytes=_vmem_limit(),
        ),
    )(*args)


# -----------------------------------------------------------------------------
# Scoring (Linear) kernel: lane-dense tiled matmul, both grid axes parallel
# -----------------------------------------------------------------------------
def _scoring_kernel(x_ref, w_ref, b_ref, o_ref):
    # x is already bf16 (no in-kernel cast); accumulate in f32.
    o_ref[...] = (jnp.dot(x_ref[...], w_ref[...],
                          preferred_element_type=jnp.float32)
                  + b_ref[...]).astype(o_ref.dtype)


def _pick_tile(n):
    for cand in (512, 256, 128):
        if n % cand == 0:
            return cand
    return n   # unreachable when n is padded to a multiple of 128


def scoring(x, w_t, b):
    """x: (Np, Hg) bf16, w_t: (Hg, Vp) bf16, b: (1, Vp) f32 -> (Np, Vp) f32."""
    Np, Hg = x.shape
    Vp = w_t.shape[1]
    tn = _pick_tile(Np)
    tv = _pick_tile(Vp)
    return pl.pallas_call(
        _scoring_kernel,
        out_shape=jax.ShapeDtypeStruct((Np, Vp), jnp.float32),
        grid_spec=pltpu.PrefetchScalarGridSpec(
            num_scalar_prefetch=0,
            grid=(Np // tn, Vp // tv),
            in_specs=[
                pl.BlockSpec((tn, Hg), lambda i, j: (i, 0)),
                pl.BlockSpec((Hg, tv), lambda i, j: (0, j)),
                pl.BlockSpec((1, tv), lambda i, j: (0, j)),
            ],
            out_specs=pl.BlockSpec((tn, tv), lambda i, j: (i, j)),
        ),
        compiler_params=pltpu.CompilerParams(
            dimension_semantics=("parallel", "parallel"),
            vmem_limit_bytes=_vmem_limit(),
        ),
    )(x, w_t, b)


# -----------------------------------------------------------------------------
# Full forward (glue: embedding gather, batch-block packing, valid-row gather)
# -----------------------------------------------------------------------------
def packed_language_model_forward(kparams, seq_list, *, batch_block=16):
    lens = [int(s.shape[0]) for s in seq_list]
    B = len(seq_list)
    T = max(lens)
    bb = max(16, _round_up(batch_block, 16))   # bf16 packed-tile aligned blocks
    NB = -(-B // bb)
    Bp = NB * bb
    Hg = kparams["Hg"]
    E = kparams["embedding"].shape[1]

    # Pack token ids time-major with end padding (pad id 0).  LSTM is causal and
    # only t < lens[b] rows of real batch columns are kept, so padded inputs /
    # padded batch columns never affect the returned scores.
    tokens = np.zeros((T, Bp), np.int32)
    for b, s in enumerate(seq_list):
        tokens[: lens[b], b] = np.asarray(s)

    emb = jnp.take(kparams["embedding"], jnp.asarray(tokens), axis=0)  # (T,Bp,E) bf16
    # Batch-block-major, time-major-within-block layout: (NB, T*bb, E)
    x_blocks = (emb.reshape(T, NB, bb, E)
                   .transpose(1, 0, 2, 3)
                   .reshape(NB, T * bb, E))

    h = fused_lstm(x_blocks, kparams["lstm"], seq_len=T, bb=bb, hg=Hg)  # bf16
    h_flat = h.reshape(NB * T * bb, Hg)

    # Flatten valid timesteps (seq0[:l0], seq1[:l1], ...) with ONE gather.
    flat_idx = np.concatenate([
        (b // bb) * (T * bb) + np.arange(lens[b], dtype=np.int32) * bb + (b % bb)
        for b in range(B)])
    out_valid = jnp.take(h_flat, jnp.asarray(flat_idx), axis=0)         # (N, Hg) bf16

    N = int(flat_idx.shape[0])
    Np = _round_up(N, 128)                       # lane/sublane-dense scoring tiles
    x_pad = jnp.pad(out_valid, ((0, Np - N), (0, 0)))
    scores_p = scoring(x_pad, kparams["score_w_t"], kparams["score_b"])
    return scores_p[:N, :kparams["V"]]


# -----------------------------------------------------------------------------
# Parameter init (raw PyTorch-layout f32) + kernel-ready packing
# -----------------------------------------------------------------------------
def init_params(key, vocab_size, embed_size, hidden_size, nlayers):
    keys = jax.random.split(key, 3 + 4 * nlayers)
    params = {
        "embedding": jax.random.normal(keys[0], (vocab_size, embed_size)) * 0.1,
        "score_w": jax.random.normal(keys[1], (vocab_size, hidden_size)) * 0.1,
        "score_b": jax.random.normal(keys[2], (vocab_size,)) * 0.1,
        "lstm": [],
    }
    for l in range(nlayers):
        in_size = embed_size if l == 0 else hidden_size
        k = keys[3 + 4 * l: 3 + 4 * (l + 1)]
        params["lstm"].append({
            "w_ih": jax.random.normal(k[0], (4 * hidden_size, in_size)) * 0.1,
            "w_hh": jax.random.normal(k[1], (4 * hidden_size, hidden_size)) * 0.1,
            "b_ih": jax.random.normal(k[2], (4 * hidden_size,)) * 0.1,
            "b_hh": jax.random.normal(k[3], (4 * hidden_size,)) * 0.1,
        })
    return params


def prepare_params(params):
    """Transpose, gate-pad to 128-lane boundaries, cast matmul operands to bf16."""
    H = params["lstm"][0]["w_hh"].shape[1]
    Hg = _round_up(H, 128)

    def pack_gate_cols(w_t):
        # (rows, 4H) gate-major [i|f|g|o] -> (rows, 4Hg), each gate zero-padded.
        rows = w_t.shape[0]
        w4 = w_t.reshape(rows, 4, H)
        w4 = jnp.pad(w4, ((0, 0), (0, 0), (0, Hg - H)))
        return w4.reshape(rows, 4 * Hg)

    kp = {"embedding": params["embedding"].astype(jnp.bfloat16), "lstm": []}
    for l, layer in enumerate(params["lstm"]):
        in_dim = layer["w_ih"].shape[1]
        in_pad = in_dim if l == 0 else Hg
        w_ih_t = pack_gate_cols(layer["w_ih"].T)                   # (in_dim, 4Hg)
        w_ih_t = jnp.pad(w_ih_t, ((0, in_pad - in_dim), (0, 0)))
        w_hh_t = pack_gate_cols(layer["w_hh"].T)                   # (H, 4Hg)
        w_hh_t = jnp.pad(w_hh_t, ((0, Hg - H), (0, 0)))
        bias = pack_gate_cols((layer["b_ih"] + layer["b_hh"]).reshape(1, -1))
        kp["lstm"].append({
            "w_ih_t": w_ih_t.astype(jnp.bfloat16),
            "w_hh_t": w_hh_t.astype(jnp.bfloat16),
            "b": bias,                                             # (1, 4Hg) f32
        })

    V = params["score_w"].shape[0]
    Vp = _round_up(V, 128)
    w_t = jnp.pad(params["score_w"].T, ((0, Hg - H), (0, Vp - V)))  # (Hg, Vp)
    kp["score_w_t"] = w_t.astype(jnp.bfloat16)
    kp["score_b"] = jnp.pad(params["score_b"], (0, Vp - V)).reshape(1, Vp)
    kp.update(H=H, Hg=Hg, V=V, Vp=Vp)
    return kp


# -----------------------------------------------------------------------------
# Pure-JAX f32 reference (same gate order / bias handling as torch.nn.LSTM)
# -----------------------------------------------------------------------------
def reference_forward(params, seq_list):
    H = params["lstm"][0]["w_hh"].shape[1]
    outs = []
    for s in seq_list:
        x = jnp.take(params["embedding"], s, axis=0)               # (L, E) f32
        for layer in params["lstm"]:
            w_ih, w_hh = layer["w_ih"], layer["w_hh"]
            bias = layer["b_ih"] + layer["b_hh"]
            h = jnp.zeros((H,), jnp.float32)
            c = jnp.zeros((H,), jnp.float32)
            hs = []
            for t in range(x.shape[0]):
                g = w_ih @ x[t] + w_hh @ h + bias
                i_g = jax.nn.sigmoid(g[0:H])
                f_g = jax.nn.sigmoid(g[H:2 * H])
                g_g = jnp.tanh(g[2 * H:3 * H])
                o_g = jax.nn.sigmoid(g[3 * H:4 * H])
                c = f_g * c + i_g * g_g
                h = o_g * jnp.tanh(c)
                hs.append(h)
            x = jnp.stack(hs)
        outs.append(x)
    flat = jnp.concatenate(outs, axis=0)
    return flat @ params["score_w"].T + params["score_b"]


if __name__ == "__main__":
    vocab_size = 32
    embed_size = 16
    hidden_size = 32
    nlayers = 2
    # `stop` only affects generate(), not forward()

    key = jax.random.PRNGKey(0)
    pkey, s0, s1 = jax.random.split(key, 3)
    params = init_params(pkey, vocab_size, embed_size, hidden_size, nlayers)
    kparams = prepare_params(params)

    # Two variable-length integer sequences (the "packed" input)
    seq_list = [
        jax.random.randint(s0, (8,), 0, vocab_size, jnp.int32),
        jax.random.randint(s1, (6,), 0, vocab_size, jnp.int32),
    ]

    scores_flatten = packed_language_model_forward(kparams, seq_list)
    scores_flatten = jax.block_until_ready(scores_flatten)

    expected_rows = sum(int(s.shape[0]) for s in seq_list)
    assert scores_flatten.shape == (expected_rows, vocab_size), scores_flatten.shape
    assert bool(jnp.all(jnp.isfinite(scores_flatten)))

    # bf16 MXU inputs + f32 accumulation => tolerance-close, not bit-exact.
    ref = reference_forward(params, seq_list)
    max_err = float(jnp.max(jnp.abs(scores_flatten - ref)))
    assert max_err < 5e-2, max_err

    print("KERNEL_OK")
</pallas_src>

<mosaic_0001>
module attributes {stable_mosaic.version = 11 : i64} {
  func.func @_fused_lstm_kernel(%arg0: i32, %arg1: memref<1x128x16xbf16, #tpu.memory_space<vmem>>, %arg2: memref<16x512xbf16, #tpu.memory_space<vmem>>, %arg3: memref<128x512xbf16, #tpu.memory_space<vmem>>, %arg4: memref<1x512xf32, #tpu.memory_space<vmem>>, %arg5: memref<128x512xbf16, #tpu.memory_space<vmem>>, %arg6: memref<128x512xbf16, #tpu.memory_space<vmem>>, %arg7: memref<1x512xf32, #tpu.memory_space<vmem>>, %arg8: memref<1x128x128xbf16, #tpu.memory_space<vmem>>, %arg9: memref<128x512xf32, #tpu.memory_space<vmem>>) attributes {dimension_semantics = [#tpu.dimension_semantics<parallel>], iteration_bounds = array<i64: 1>, scalar_prefetch = 0 : i64, scratch_operands = 1 : i64, tpu.core_type = #tpu.core_type<tc>, window_params = [{transform_indices = @transform_0, window_bounds = array<i64: 1, 128, 16>}, {pipeline_mode = #tpu.pipeline_mode<synchronous>, transform_indices = @transform_1, window_bounds = array<i64: 16, 512>}, {pipeline_mode = #tpu.pipeline_mode<synchronous>, transform_indices = @transform_2, window_bounds = array<i64: 128, 512>}, {pipeline_mode = #tpu.pipeline_mode<synchronous>, transform_indices = @transform_3, window_bounds = array<i64: 1, 512>}, {pipeline_mode = #tpu.pipeline_mode<synchronous>, transform_indices = @transform_4, window_bounds = array<i64: 128, 512>}, {pipeline_mode = #tpu.pipeline_mode<synchronous>, transform_indices = @transform_5, window_bounds = array<i64: 128, 512>}, {pipeline_mode = #tpu.pipeline_mode<synchronous>, transform_indices = @transform_6, window_bounds = array<i64: 1, 512>}, {transform_indices = @transform_7, window_bounds = array<i64: 1, 128, 128>}]} {
    %c0 = arith.constant 0 : index
    %c0_0 = arith.constant 0 : index
    %c0_1 = arith.constant 0 : index
    %0 = vector.load %arg1[%c0, %c0_0, %c0_1] : memref<1x128x16xbf16, #tpu.memory_space<vmem>>, vector<1x128x16xbf16>
    %1 = vector.shape_cast %0 : vector<1x128x16xbf16> to vector<128x16xbf16>
    %c0_2 = arith.constant 0 : index
    %c0_3 = arith.constant 0 : index
    %2 = vector.load %arg2[%c0_2, %c0_3] : memref<16x512xbf16, #tpu.memory_space<vmem>>, vector<16x512xbf16>
    %cst = arith.constant dense<0.000000e+00> : vector<128x512xf32>
    %3 = tpu.matmul %1, %2, %cst {dimension_numbers = #tpu.dot_dimension_numbers<[1], [0], [0], [1], [0, 0, 1, 1], [], []>} : vector<128x16xbf16>, vector<16x512xbf16>, vector<128x512xf32> -> vector<128x512xf32>
    %c0_4 = arith.constant 0 : index
    %c0_5 = arith.constant 0 : index
    %4 = vector.load %arg4[%c0_4, %c0_5] : memref<1x512xf32, #tpu.memory_space<vmem>>, vector<1x512xf32>
    %5 = vector.broadcast %4 : vector<1x512xf32> to vector<128x512xf32>
    %6 = arith.addf %3, %5 : vector<128x512xf32>
    %c0_6 = arith.constant 0 : index
    %c0_7 = arith.constant 0 : index
    %7 = vector.load %arg9[%c0_6, %c0_7] : memref<128x512xf32, #tpu.memory_space<vmem>>, vector<128x512xf32>
    tpu.vector_store %arg9[%c0_6, %c0_7], %6 {strides = array<i32>} : memref<128x512xf32, #tpu.memory_space<vmem>>, vector<128x512xf32>,
    %c0_8 = arith.constant 0 : index
    %c0_9 = arith.constant 0 : index
    %8 = vector.load %arg3[%c0_8, %c0_9] : memref<128x512xbf16, #tpu.memory_space<vmem>>, vector<128x512xbf16>
    %cst_10 = arith.constant 0.000000e+00 : f32
    %9 = vector.broadcast %cst_10 : f32 to vector<16x128xf32>
    %cst_11 = arith.constant 0.000000e+00 : f32
    %10 = vector.broadcast %cst_11 : f32 to vector<16x128xf32>
    %c0_i32 = arith.constant 0 : i32
    %c16_i32 = arith.constant 16 : i32
    %11 = arith.muli %c0_i32, %c16_i32 : i32
    %12 = tpu.assume_multiple %11, 16 : i32
    %13 = arith.index_cast %12 : i32 to index
    %c0_12 = arith.constant 0 : index
    %14 = vector.load %arg9[%13, %c0_12] : memref<128x512xf32, #tpu.memory_space<vmem>>, vector<16x512xf32>
    %15 = arith.truncf %9 : vector<16x128xf32> to vector<16x128xbf16>
    %cst_13 = arith.constant dense<0.000000e+00> : vector<16x512xf32>
    %16 = tpu.matmul %15, %8, %cst_13 {dimension_numbers = #tpu.dot_dimension_numbers<[1], [0], [0], [1], [0, 0, 1, 1], [], []>} : vector<16x128xbf16>, vector<128x512xbf16>, vector<16x512xf32> -> vector<16x512xf32>
    %17 = arith.addf %14, %16 : vector<16x512xf32>
    %18 = vector.extract_strided_slice %17 {offsets = [0, 0], sizes = [16, 128], strides = [1, 1]} : vector<16x512xf32> to vector<16x128xf32>
    %19 = arith.negf %18 : vector<16x128xf32>
    %20 = math.exp %19 : vector<16x128xf32>
    %cst_14 = arith.constant 1.000000e+00 : f32
    %21 = vector.broadcast %cst_14 : f32 to vector<16x128xf32>
    %22 = arith.addf %21, %20 : vector<16x128xf32>
    %23 = arith.divf %21, %22 : vector<16x128xf32>
    %24 = vector.extract_strided_slice %17 {offsets = [0, 128], sizes = [16, 128], strides = [1, 1]} : vector<16x512xf32> to vector<16x128xf32>
    %25 = arith.negf %24 : vector<16x128xf32>
    %26 = math.exp %25 : vector<16x128xf32>
    %cst_15 = arith.constant 1.000000e+00 : f32
    %27 = vector.broadcast %cst_15 : f32 to vector<16x128xf32>
    %28 = arith.addf %27, %26 : vector<16x128xf32>
    %29 = arith.divf %27, %28 : vector<16x128xf32>
    %30 = vector.extract_strided_slice %17 {offsets = [0, 256], sizes = [16, 128], strides = [1, 1]} : vector<16x512xf32> to vector<16x128xf32>
    %31 = math.tanh %30 : vector<16x128xf32>
    %32 = vector.extract_strided_slice %17 {offsets = [0, 384], sizes = [16, 128], strides = [1, 1]} : vector<16x512xf32> to vector<16x128xf32>
    %33 = arith.negf %32 : vector<16x128xf32>
    %34 = math.exp %33 : vector<16x128xf32>
    %cst_16 = arith.constant 1.000000e+00 : f32
    %35 = vector.broadcast %cst_16 : f32 to vector<16x128xf32>
    %36 = arith.addf %35, %34 : vector<16x128xf32>
    %37 = arith.divf %35, %36 : vector<16x128xf32>
    %38 = arith.mulf %29, %10 : vector<16x128xf32>
    %39 = arith.mulf %23, %31 : vector<16x128xf32>
    %40 = arith.addf %38, %39 : vector<16x128xf32>
    %41 = math.tanh %40 : vector<16x128xf32>
    %42 = arith.mulf %37, %41 : vector<16x128xf32>
    %43 = arith.truncf %42 : vector<16x128xf32> to vector<16x128xbf16>
    %c0_17 = arith.constant 0 : index
    %44 = arith.index_cast %12 : i32 to index
    %c0_18 = arith.constant 0 : index
    %45 = vector.load %arg8[%c0_17, %44, %c0_18] : memref<1x128x128xbf16, #tpu.memory_space<vmem>>, vector<1x16x128xbf16>
    %46 = vector.shape_cast %45 : vector<1x16x128xbf16> to vector<16x128xbf16>
    %47 = vector.shape_cast %43 : vector<16x128xbf16> to vector<1x16x128xbf16>
    tpu.vector_store %arg8[%c0_17, %44, %c0_18], %47 {strides = array<i32>} : memref<1x128x128xbf16, #tpu.memory_space<vmem>>, vector<1x16x128xbf16>,
    %c1_i32 = arith.constant 1 : i32
    %c16_i32_19 = arith.constant 16 : i32
    %48 = arith.muli %c1_i32, %c16_i32_19 : i32
    %49 = tpu.assume_multiple %48, 16 : i32
    %50 = arith.index_cast %49 : i32 to index
    %c0_20 = arith.constant 0 : index
    %51 = vector.load %arg9[%50, %c0_20] : memref<128x512xf32, #tpu.memory_space<vmem>>, vector<16x512xf32>
    %52 = arith.truncf %42 : vector<16x128xf32> to vector<16x128xbf16>
    %cst_21 = arith.constant dense<0.000000e+00> : vector<16x512xf32>
    %53 = tpu.matmul %52, %8, %cst_21 {dimension_numbers = #tpu.dot_dimension_numbers<[1], [0], [0], [1], [0, 0, 1, 1], [], []>} : vector<16x128xbf16>, vector<128x512xbf16>, vector<16x512xf32> -> vector<16x512xf32>
    %54 = arith.addf %51, %53 : vector<16x512xf32>
    %55 = vector.extract_strided_slice %54 {offsets = [0, 0], sizes = [16, 128], strides = [1, 1]} : vector<16x512xf32> to vector<16x128xf32>
    %56 = arith.negf %55 : vector<16x128xf32>
    %57 = math.exp %56 : vector<16x128xf32>
    %cst_22 = arith.constant 1.000000e+00 : f32
    %58 = vector.broadcast %cst_22 : f32 to vector<16x128xf32>
    %59 = arith.addf %58, %57 : vector<16x128xf32>
    %60 = arith.divf %58, %59 : vector<16x128xf32>
    %61 = vector.extract_strided_slice %54 {offsets = [0, 128], sizes = [16, 128], strides = [1, 1]} : vector<16x512xf32> to vector<16x128xf32>
    %62 = arith.negf %61 : vector<16x128xf32>
    %63 = math.exp %62 : vector<16x128xf32>
    %cst_23 = arith.constant 1.000000e+00 : f32
    %64 = vector.broadcast %cst_23 : f32 to vector<16x128xf32>
    %65 = arith.addf %64, %63 : vector<16x128xf32>
    %66 = arith.divf %64, %65 : vector<16x128xf32>
    %67 = vector.extract_strided_slice %54 {offsets = [0, 256], sizes = [16, 128], strides = [1, 1]} : vector<16x512xf32> to vector<16x128xf32>
    %68 = math.tanh %67 : vector<16x128xf32>
    %69 = vector.extract_strided_slice %54 {offsets = [0, 384], sizes = [16, 128], strides = [1, 1]} : vector<16x512xf32> to vector<16x128xf32>
    %70 = arith.negf %69 : vector<16x128xf32>
    %71 = math.exp %70 : vector<16x128xf32>
    %cst_24 = arith.constant 1.000000e+00 : f32
    %72 = vector.broadcast %cst_24 : f32 to vector<16x128xf32>
    %73 = arith.addf %72, %71 : vector<16x128xf32>
    %74 = arith.divf %72, %73 : vector<16x128xf32>
    %75 = arith.mulf %66, %40 : vector<16x128xf32>
    %76 = arith.mulf %60, %68 : vector<16x128xf32>
    %77 = arith.addf %75, %76 : vector<16x128xf32>
    %78 = math.tanh %77 : vector<16x128xf32>
    %79 = arith.mulf %74, %78 : vector<16x128xf32>
    %80 = arith.truncf %79 : vector<16x128xf32> to vector<16x128xbf16>
    %c0_25 = arith.constant 0 : index
    %81 = arith.index_cast %49 : i32 to index
    %c0_26 = arith.constant 0 : index
    %82 = vector.load %arg8[%c0_25, %81, %c0_26] : memref<1x128x128xbf16, #tpu.memory_space<vmem>>, vector<1x16x128xbf16>
    %83 = vector.shape_cast %82 : vector<1x16x128xbf16> to vector<16x128xbf16>
    %84 = vector.shape_cast %80 : vector<16x128xbf16> to vector<1x16x128xbf16>
    tpu.vector_store %arg8[%c0_25, %81, %c0_26], %84 {strides = array<i32>} : memref<1x128x128xbf16, #tpu.memory_space<vmem>>, vector<1x16x128xbf16>,
    %c2_i32 = arith.constant 2 : i32
    %c16_i32_27 = arith.constant 16 : i32
    %85 = arith.muli %c2_i32, %c16_i32_27 : i32
    %86 = tpu.assume_multiple %85, 16 : i32
    %87 = arith.index_cast %86 : i32 to index
    %c0_28 = arith.constant 0 : index
    %88 = vector.load %arg9[%87, %c0_28] : memref<128x512xf32, #tpu.memory_space<vmem>>, vector<16x512xf32>
    %89 = arith.truncf %79 : vector<16x128xf32> to vector<16x128xbf16>
    %cst_29 = arith.constant dense<0.000000e+00> : vector<16x512xf32>
    %90 = tpu.matmul %89, %8, %cst_29 {dimension_numbers = #tpu.dot_dimension_numbers<[1], [0], [0], [1], [0, 0, 1, 1], [], []>} : vector<16x128xbf16>, vector<128x512xbf16>, vector<16x512xf32> -> vector<16x512xf32>
    %91 = arith.addf %88, %90 : vector<16x512xf32>
    %92 = vector.extract_strided_slice %91 {offsets = [0, 0], sizes = [16, 128], strides = [1, 1]} : vector<16x512xf32> to vector<16x128xf32>
    %93 = arith.negf %92 : vector<16x128xf32>
    %94 = math.exp %93 : vector<16x128xf32>
    %cst_30 = arith.constant 1.000000e+00 : f32
    %95 = vector.broadcast %cst_30 : f32 to vector<16x128xf32>
    %96 = arith.addf %95, %94 : vector<16x128xf32>
    %97 = arith.divf %95, %96 : vector<16x128xf32>
    %98 = vector.extract_strided_slice %91 {offsets = [0, 128], sizes = [16, 128], strides = [1, 1]} : vector<16x512xf32> to vector<16x128xf32>
    %99 = arith.negf %98 : vector<16x128xf32>
    %100 = math.exp %99 : vector<16x128xf32>
    %cst_31 = arith.constant 1.000000e+00 : f32
    %101 = vector.broadcast %cst_31 : f32 to vector<16x128xf32>
    %102 = arith.addf %101, %100 : vector<16x128xf32>
    %103 = arith.divf %101, %102 : vector<16x128xf32>
    %104 = vector.extract_strided_slice %91 {offsets = [0, 256], sizes = [16, 128], strides = [1, 1]} : vector<16x512xf32> to vector<16x128xf32>
    %105 = math.tanh %104 : vector<16x128xf32>
    %106 = vector.extract_strided_slice %91 {offsets = [0, 384], sizes = [16, 128], strides = [1, 1]} : vector<16x512xf32> to vector<16x128xf32>
    %107 = arith.negf %106 : vector<16x128xf32>
    %108 = math.exp %107 : vector<16x128xf32>
    %cst_32 = arith.constant 1.000000e+00 : f32
    %109 = vector.broadcast %cst_32 : f32 to vector<16x128xf32>
    %110 = arith.addf %109, %108 : vector<16x128xf32>
    %111 = arith.divf %109, %110 : vector<16x128xf32>
    %112 = arith.mulf %103, %77 : vector<16x128xf32>
    %113 = arith.mulf %97, %105 : vector<16x128xf32>
    %114 = arith.addf %112, %113 : vector<16x128xf32>
    %115 = math.tanh %114 : vector<16x128xf32>
    %116 = arith.mulf %111, %115 : vector<16x128xf32>
    %117 = arith.truncf %116 : vector<16x128xf32> to vector<16x128xbf16>
    %c0_33 = arith.constant 0 : index
    %118 = arith.index_cast %86 : i32 to index
    %c0_34 = arith.constant 0 : index
    %119 = vector.load %arg8[%c0_33, %118, %c0_34] : memref<1x128x128xbf16, #tpu.memory_space<vmem>>, vector<1x16x128xbf16>
    %120 = vector.shape_cast %119 : vector<1x16x128xbf16> to vector<16x128xbf16>
    %121 = vector.shape_cast %117 : vector<16x128xbf16> to vector<1x16x128xbf16>
    tpu.vector_store %arg8[%c0_33, %118, %c0_34], %121 {strides = array<i32>} : memref<1x128x128xbf16, #tpu.memory_space<vmem>>, vector<1x16x128xbf16>,
    %c3_i32 = arith.constant 3 : i32
    %c16_i32_35 = arith.constant 16 : i32
    %122 = arith.muli %c3_i32, %c16_i32_35 : i32
    %123 = tpu.assume_multiple %122, 16 : i32
    %124 = arith.index_cast %123 : i32 to index
    %c0_36 = arith.constant 0 : index
    %125 = vector.load %arg9[%124, %c0_36] : memref<128x512xf32, #tpu.memory_space<vmem>>, vector<16x512xf32>
    %126 = arith.truncf %116 : vector<16x128xf32> to vector<16x128xbf16>
    %cst_37 = arith.constant dense<0.000000e+00> : vector<16x512xf32>
    %127 = tpu.matmul %126, %8, %cst_37 {dimension_numbers = #tpu.dot_dimension_numbers<[1], [0], [0], [1], [0, 0, 1, 1], [], []>} : vector<16x128xbf16>, vector<128x512xbf16>, vector<16x512xf32> -> vector<16x512xf32>
    %128 = arith.addf %125, %127 : vector<16x512xf32>
    %129 = vector.extract_strided_slice %128 {offsets = [0, 0], sizes = [16, 128], strides = [1, 1]} : vector<16x512xf32> to vector<16x128xf32>
    %130 = arith.negf %129 : vector<16x128xf32>
    %131 = math.exp %130 : vector<16x128xf32>
    %cst_38 = arith.constant 1.000000e+00 : f32
    %132 = vector.broadcast %cst_38 : f32 to vector<16x128xf32>
    %133 = arith.addf %132, %131 : vector<16x128xf32>
    %134 = arith.divf %132, %133 : vector<16x128xf32>
    %135 = vector.extract_strided_slice %128 {offsets = [0, 128], sizes = [16, 128], strides = [1, 1]} : vector<16x512xf32> to vector<16x128xf32>
    %136 = arith.negf %135 : vector<16x128xf32>
    %137 = math.exp %136 : vector<16x128xf32>
    %cst_39 = arith.constant 1.000000e+00 : f32
    %138 = vector.broadcast %cst_39 : f32 to vector<16x128xf32>
    %139 = arith.addf %138, %137 : vector<16x128xf32>
    %140 = arith.divf %138, %139 : vector<16x128xf32>
    %141 = vector.extract_strided_slice %128 {offsets = [0, 256], sizes = [16, 128], strides = [1, 1]} : vector<16x512xf32> to vector<16x128xf32>
    %142 = math.tanh %141 : vector<16x128xf32>
    %143 = vector.extract_strided_slice %128 {offsets = [0, 384], sizes = [16, 128], strides = [1, 1]} : vector<16x512xf32> to vector<16x128xf32>
    %144 = arith.negf %143 : vector<16x128xf32>
    %145 = math.exp %144 : vector<16x128xf32>
    %cst_40 = arith.constant 1.000000e+00 : f32
    %146 = vector.broadcast %cst_40 : f32 to vector<16x128xf32>
    %147 = arith.addf %146, %145 : vector<16x128xf32>
    %148 = arith.divf %146, %147 : vector<16x128xf32>
    %149 = arith.mulf %140, %114 : vector<16x128xf32>
    %150 = arith.mulf %134, %142 : vector<16x128xf32>
    %151 = arith.addf %149, %150 : vector<16x128xf32>
    %152 = math.tanh %151 : vector<16x128xf32>
    %153 = arith.mulf %148, %152 : vector<16x128xf32>
    %154 = arith.truncf %153 : vector<16x128xf32> to vector<16x128xbf16>
    %c0_41 = arith.constant 0 : index
    %155 = arith.index_cast %123 : i32 to index
    %c0_42 = arith.constant 0 : index
    %156 = vector.load %arg8[%c0_41, %155, %c0_42] : memref<1x128x128xbf16, #tpu.memory_space<vmem>>, vector<1x16x128xbf16>
    %157 = vector.shape_cast %156 : vector<1x16x128xbf16> to vector<16x128xbf16>
    %158 = vector.shape_cast %154 : vector<16x128xbf16> to vector<1x16x128xbf16>
    tpu.vector_store %arg8[%c0_41, %155, %c0_42], %158 {strides = array<i32>} : memref<1x128x128xbf16, #tpu.memory_space<vmem>>, vector<1x16x128xbf16>,
    %c4_i32 = arith.constant 4 : i32
    %c16_i32_43 = arith.constant 16 : i32
    %159 = arith.muli %c4_i32, %c16_i32_43 : i32
    %160 = tpu.assume_multiple %159, 16 : i32
    %161 = arith.index_cast %160 : i32 to index
    %c0_44 = arith.constant 0 : index
    %162 = vector.load %arg9[%161, %c0_44] : memref<128x512xf32, #tpu.memory_space<vmem>>, vector<16x512xf32>
    %163 = arith.truncf %153 : vector<16x128xf32> to vector<16x128xbf16>
    %cst_45 = arith.constant dense<0.000000e+00> : vector<16x512xf32>
    %164 = tpu.matmul %163, %8, %cst_45 {dimension_numbers = #tpu.dot_dimension_numbers<[1], [0], [0], [1], [0, 0, 1, 1], [], []>} : vector<16x128xbf16>, vector<128x512xbf16>, vector<16x512xf32> -> vector<16x512xf32>
    %165 = arith.addf %162, %164 : vector<16x512xf32>
    %166 = vector.extract_strided_slice %165 {offsets = [0, 0], sizes = [16, 128], strides = [1, 1]} : vector<16x512xf32> to vector<16x128xf32>
    %167 = arith.negf %166 : vector<16x128xf32>
    %168 = math.exp %167 : vector<16x128xf32>
    %cst_46 = arith.constant 1.000000e+00 : f32
    %169 = vector.broadcast %cst_46 : f32 to vector<16x128xf32>
    %170 = arith.addf %169, %168 : vector<16x128xf32>
    %171 = arith.divf %169, %170 : vector<16x128xf32>
    %172 = vector.extract_strided_slice %165 {offsets = [0, 128], sizes = [16, 128], strides = [1, 1]} : vector<16x512xf32> to vector<16x128xf32>
    %173 = arith.negf %172 : vector<16x128xf32>
    %174 = math.exp %173 : vector<16x128xf32>
    %cst_47 = arith.constant 1.000000e+00 : f32
    %175 = vector.broadcast %cst_47 : f32 to vector<16x128xf32>
    %176 = arith.addf %175, %174 : vector<16x128xf32>
    %177 = arith.divf %175, %176 : vector<16x128xf32>
    %178 = vector.extract_strided_slice %165 {offsets = [0, 256], sizes = [16, 128], strides = [1, 1]} : vector<16x512xf32> to vector<16x128xf32>
    %179 = math.tanh %178 : vector<16x128xf32>
    %180 = vector.extract_strided_slice %165 {offsets = [0, 384], sizes = [16, 128], strides = [1, 1]} : vector<16x512xf32> to vector<16x128xf32>
    %181 = arith.negf %180 : vector<16x128xf32>
    %182 = math.exp %181 : vector<16x128xf32>
    %cst_48 = arith.constant 1.000000e+00 : f32
    %183 = vector.broadcast %cst_48 : f32 to vector<16x128xf32>
    %184 = arith.addf %183, %182 : vector<16x128xf32>
    %185 = arith.divf %183, %184 : vector<16x128xf32>
    %186 = arith.mulf %177, %151 : vector<16x128xf32>
    %187 = arith.mulf %171, %179 : vector<16x128xf32>
    %188 = arith.addf %186, %187 : vector<16x128xf32>
    %189 = math.tanh %188 : vector<16x128xf32>
    %190 = arith.mulf %185, %189 : vector<16x128xf32>
    %191 = arith.truncf %190 : vector<16x128xf32> to vector<16x128xbf16>
    %c0_49 = arith.constant 0 : index
    %192 = arith.index_cast %160 : i32 to index
    %c0_50 = arith.constant 0 : index
    %193 = vector.load %arg8[%c0_49, %192, %c0_50] : memref<1x128x128xbf16, #tpu.memory_space<vmem>>, vector<1x16x128xbf16>
    %194 = vector.shape_cast %193 : vector<1x16x128xbf16> to vector<16x128xbf16>
    %195 = vector.shape_cast %191 : vector<16x128xbf16> to vector<1x16x128xbf16>
    tpu.vector_store %arg8[%c0_49, %192, %c0_50], %195 {strides = array<i32>} : memref<1x128x128xbf16, #tpu.memory_space<vmem>>, vector<1x16x128xbf16>,
    %c5_i32 = arith.constant 5 : i32
    %c16_i32_51 = arith.constant 16 : i32
    %196 = arith.muli %c5_i32, %c16_i32_51 : i32
    %197 = tpu.assume_multiple %196, 16 : i32
    %198 = arith.index_cast %197 : i32 to index
    %c0_52 = arith.constant 0 : index
    %199 = vector.load %arg9[%198, %c0_52] : memref<128x512xf32, #tpu.memory_space<vmem>>, vector<16x512xf32>
    %200 = arith.truncf %190 : vector<16x128xf32> to vector<16x128xbf16>
    %cst_53 = arith.constant dense<0.000000e+00> : vector<16x512xf32>
    %201 = tpu.matmul %200, %8, %cst_53 {dimension_numbers = #tpu.dot_dimension_numbers<[1], [0], [0], [1], [0, 0, 1, 1], [], []>} : vector<16x128xbf16>, vector<128x512xbf16>, vector<16x512xf32> -> vector<16x512xf32>
    %202 = arith.addf %199, %201 : vector<16x512xf32>
    %203 = vector.extract_strided_slice %202 {offsets = [0, 0], sizes = [16, 128], strides = [1, 1]} : vector<16x512xf32> to vector<16x128xf32>
    %204 = arith.negf %203 : vector<16x128xf32>
    %205 = math.exp %204 : vector<16x128xf32>
    %cst_54 = arith.constant 1.000000e+00 : f32
    %206 = vector.broadcast %cst_54 : f32 to vector<16x128xf32>
    %207 = arith.addf %206, %205 : vector<16x128xf32>
    %208 = arith.divf %206, %207 : vector<16x128xf32>
    %209 = vector.extract_strided_slice %202 {offsets = [0, 128], sizes = [16, 128], strides = [1, 1]} : vector<16x512xf32> to vector<16x128xf32>
    %210 = arith.negf %209 : vector<16x128xf32>
    %211 = math.exp %210 : vector<16x128xf32>
    %cst_55 = arith.constant 1.000000e+00 : f32
    %212 = vector.broadcast %cst_55 : f32 to vector<16x128xf32>
    %213 = arith.addf %212, %211 : vector<16x128xf32>
    %214 = arith.divf %212, %213 : vector<16x128xf32>
    %215 = vector.extract_strided_slice %202 {offsets = [0, 256], sizes = [16, 128], strides = [1, 1]} : vector<16x512xf32> to vector<16x128xf32>
    %216 = math.tanh %215 : vector<16x128xf32>
    %217 = vector.extract_strided_slice %202 {offsets = [0, 384], sizes = [16, 128], strides = [1, 1]} : vector<16x512xf32> to vector<16x128xf32>
    %218 = arith.negf %217 : vector<16x128xf32>
    %219 = math.exp %218 : vector<16x128xf32>
    %cst_56 = arith.constant 1.000000e+00 : f32
    %220 = vector.broadcast %cst_56 : f32 to vector<16x128xf32>
    %221 = arith.addf %220, %219 : vector<16x128xf32>
    %222 = arith.divf %220, %221 : vector<16x128xf32>
    %223 = arith.mulf %214, %188 : vector<16x128xf32>
    %224 = arith.mulf %208, %216 : vector<16x128xf32>
    %225 = arith.addf %223, %224 : vector<16x128xf32>
    %226 = math.tanh %225 : vector<16x128xf32>
    %227 = arith.mulf %222, %226 : vector<16x128xf32>
    %228 = arith.truncf %227 : vector<16x128xf32> to vector<16x128xbf16>
    %c0_57 = arith.constant 0 : index
    %229 = arith.index_cast %197 : i32 to index
    %c0_58 = arith.constant 0 : index
    %230 = vector.load %arg8[%c0_57, %229, %c0_58] : memref<1x128x128xbf16, #tpu.memory_space<vmem>>, vector<1x16x128xbf16>
    %231 = vector.shape_cast %230 : vector<1x16x128xbf16> to vector<16x128xbf16>
    %232 = vector.shape_cast %228 : vector<16x128xbf16> to vector<1x16x128xbf16>
    tpu.vector_store %arg8[%c0_57, %229, %c0_58], %232 {strides = array<i32>} : memref<1x128x128xbf16, #tpu.memory_space<vmem>>, vector<1x16x128xbf16>,
    %c6_i32 = arith.constant 6 : i32
    %c16_i32_59 = arith.constant 16 : i32
    %233 = arith.muli %c6_i32, %c16_i32_59 : i32
    %234 = tpu.assume_multiple %233, 16 : i32
    %235 = arith.index_cast %234 : i32 to index
    %c0_60 = arith.constant 0 : index
    %236 = vector.load %arg9[%235, %c0_60] : memref<128x512xf32, #tpu.memory_space<vmem>>, vector<16x512xf32>
    %237 = arith.truncf %227 : vector<16x128xf32> to vector<16x128xbf16>
    %cst_61 = arith.constant dense<0.000000e+00> : vector<16x512xf32>
    %238 = tpu.matmul %237, %8, %cst_61 {dimension_numbers = #tpu.dot_dimension_numbers<[1], [0], [0], [1], [0, 0, 1, 1], [], []>} : vector<16x128xbf16>, vector<128x512xbf16>, vector<16x512xf32> -> vector<16x512xf32>
    %239 = arith.addf %236, %238 : vector<16x512xf32>
    %240 = vector.extract_strided_slice %239 {offsets = [0, 0], sizes = [16, 128], strides = [1, 1]} : vector<16x512xf32> to vector<16x128xf32>
    %241 = arith.negf %240 : vector<16x128xf32>
    %242 = math.exp %241 : vector<16x128xf32>
    %cst_62 = arith.constant 1.000000e+00 : f32
    %243 = vector.broadcast %cst_62 : f32 to vector<16x128xf32>
    %244 = arith.addf %243, %242 : vector<16x128xf32>
    %245 = arith.divf %243, %244 : vector<16x128xf32>
    %246 = vector.extract_strided_slice %239 {offsets = [0, 128], sizes = [16, 128], strides = [1, 1]} : vector<16x512xf32> to vector<16x128xf32>
    %247 = arith.negf %246 : vector<16x128xf32>
    %248 = math.exp %247 : vector<16x128xf32>
    %cst_63 = arith.constant 1.000000e+00 : f32
    %249 = vector.broadcast %cst_63 : f32 to vector<16x128xf32>
    %250 = arith.addf %249, %248 : vector<16x128xf32>
    %251 = arith.divf %249, %250 : vector<16x128xf32>
    %252 = vector.extract_strided_slice %239 {offsets = [0, 256], sizes = [16, 128], strides = [1, 1]} : vector<16x512xf32> to vector<16x128xf32>
    %253 = math.tanh %252 : vector<16x128xf32>
    %254 = vector.extract_strided_slice %239 {offsets = [0, 384], sizes = [16, 128], strides = [1, 1]} : vector<16x512xf32> to vector<16x128xf32>
    %255 = arith.negf %254 : vector<16x128xf32>
    %256 = math.exp %255 : vector<16x128xf32>
    %cst_64 = arith.constant 1.000000e+00 : f32
    %257 = vector.broadcast %cst_64 : f32 to vector<16x128xf32>
    %258 = arith.addf %257, %256 : vector<16x128xf32>
    %259 = arith.divf %257, %258 : vector<16x128xf32>
    %260 = arith.mulf %251, %225 : vector<16x128xf32>
    %261 = arith.mulf %245, %253 : vector<16x128xf32>
    %262 = arith.addf %260, %261 : vector<16x128xf32>
    %263 = math.tanh %262 : vector<16x128xf32>
    %264 = arith.mulf %259, %263 : vector<16x128xf32>
    %265 = arith.truncf %264 : vector<16x128xf32> to vector<16x128xbf16>
    %c0_65 = arith.constant 0 : index
    %266 = arith.index_cast %234 : i32 to index
    %c0_66 = arith.constant 0 : index
    %267 = vector.load %arg8[%c0_65, %266, %c0_66] : memref<1x128x128xbf16, #tpu.memory_space<vmem>>, vector<1x16x128xbf16>
    %268 = vector.shape_cast %267 : vector<1x16x128xbf16> to vector<16x128xbf16>
    %269 = vector.shape_cast %265 : vector<16x128xbf16> to vector<1x16x128xbf16>
    tpu.vector_store %arg8[%c0_65, %266, %c0_66], %269 {strides = array<i32>} : memref<1x128x128xbf16, #tpu.memory_space<vmem>>, vector<1x16x128xbf16>,
    %c7_i32 = arith.constant 7 : i32
    %c16_i32_67 = arith.constant 16 : i32
    %270 = arith.muli %c7_i32, %c16_i32_67 : i32
    %271 = tpu.assume_multiple %270, 16 : i32
    %272 = arith.index_cast %271 : i32 to index
    %c0_68 = arith.constant 0 : index
    %273 = vector.load %arg9[%272, %c0_68] : memref<128x512xf32, #tpu.memory_space<vmem>>, vector<16x512xf32>
    %274 = arith.truncf %264 : vector<16x128xf32> to vector<16x128xbf16>
    %cst_69 = arith.constant dense<0.000000e+00> : vector<16x512xf32>
    %275 = tpu.matmul %274, %8, %cst_69 {dimension_numbers = #tpu.dot_dimension_numbers<[1], [0], [0], [1], [0, 0, 1, 1], [], []>} : vector<16x128xbf16>, vector<128x512xbf16>, vector<16x512xf32> -> vector<16x512xf32>
    %276 = arith.addf %273, %275 : vector<16x512xf32>
    %277 = vector.extract_strided_slice %276 {offsets = [0, 0], sizes = [16, 128], strides = [1, 1]} : vector<16x512xf32> to vector<16x128xf32>
    %278 = arith.negf %277 : vector<16x128xf32>
    %279 = math.exp %278 : vector<16x128xf32>
    %cst_70 = arith.constant 1.000000e+00 : f32
    %280 = vector.broadcast %cst_70 : f32 to vector<16x128xf32>
    %281 = arith.addf %280, %279 : vector<16x128xf32>
    %282 = arith.divf %280, %281 : vector<16x128xf32>
    %283 = vector.extract_strided_slice %276 {offsets = [0, 128], sizes = [16, 128], strides = [1, 1]} : vector<16x512xf32> to vector<16x128xf32>
    %284 = arith.negf %283 : vector<16x128xf32>
    %285 = math.exp %284 : vector<16x128xf32>
    %cst_71 = arith.constant 1.000000e+00 : f32
    %286 = vector.broadcast %cst_71 : f32 to vector<16x128xf32>
    %287 = arith.addf %286, %285 : vector<16x128xf32>
    %288 = arith.divf %286, %287 : vector<16x128xf32>
    %289 = vector.extract_strided_slice %276 {offsets = [0, 256], sizes = [16, 128], strides = [1, 1]} : vector<16x512xf32> to vector<16x128xf32>
    %290 = math.tanh %289 : vector<16x128xf32>
    %291 = vector.extract_strided_slice %276 {offsets = [0, 384], sizes = [16, 128], strides = [1, 1]} : vector<16x512xf32> to vector<16x128xf32>
    %292 = arith.negf %291 : vector<16x128xf32>
    %293 = math.exp %292 : vector<16x128xf32>
    %cst_72 = arith.constant 1.000000e+00 : f32
    %294 = vector.broadcast %cst_72 : f32 to vector<16x128xf32>
    %295 = arith.addf %294, %293 : vector<16x128xf32>
    %296 = arith.divf %294, %295 : vector<16x128xf32>
    %297 = arith.mulf %288, %262 : vector<16x128xf32>
    %298 = arith.mulf %282, %290 : vector<16x128xf32>
    %299 = arith.addf %297, %298 : vector<16x128xf32>
    %300 = math.tanh %299 : vector<16x128xf32>
    %301 = arith.mulf %296, %300 : vector<16x128xf32>
    %302 = arith.truncf %301 : vector<16x128xf32> to vector<16x128xbf16>
    %c0_73 = arith.constant 0 : index
    %303 = arith.index_cast %271 : i32 to index
    %c0_74 = arith.constant 0 : index
    %304 = vector.load %arg8[%c0_73, %303, %c0_74] : memref<1x128x128xbf16, #tpu.memory_space<vmem>>, vector<1x16x128xbf16>
    %305 = vector.shape_cast %304 : vector<1x16x128xbf16> to vector<16x128xbf16>
    %306 = vector.shape_cast %302 : vector<16x128xbf16> to vector<1x16x128xbf16>
    tpu.vector_store %arg8[%c0_73, %303, %c0_74], %306 {strides = array<i32>} : memref<1x128x128xbf16, #tpu.memory_space<vmem>>, vector<1x16x128xbf16>,
    %c8_i32 = arith.constant 8 : i32
    %c0_75 = arith.constant 0 : index
    %c0_76 = arith.constant 0 : index
    %c0_77 = arith.constant 0 : index
    %307 = vector.load %arg8[%c0_75, %c0_76, %c0_77] : memref<1x128x128xbf16, #tpu.memory_space<vmem>>, vector<1x128x128xbf16>
    %308 = vector.shape_cast %307 : vector<1x128x128xbf16> to vector<128x128xbf16>
    %c0_78 = arith.constant 0 : index
    %c0_79 = arith.constant 0 : index
    %309 = vector.load %arg5[%c0_78, %c0_79] : memref<128x512xbf16, #tpu.memory_space<vmem>>, vector<128x512xbf16>
    %cst_80 = arith.constant dense<0.000000e+00> : vector<128x512xf32>
    %310 = tpu.matmul %308, %309, %cst_80 {dimension_numbers = #tpu.dot_dimension_numbers<[1], [0], [0], [1], [0, 0, 1, 1], [], []>} : vector<128x128xbf16>, vector<128x512xbf16>, vector<128x512xf32> -> vector<128x512xf32>
    %c0_81 = arith.constant 0 : index
    %c0_82 = arith.constant 0 : index
    %311 = vector.load %arg7[%c0_81, %c0_82] : memref<1x512xf32, #tpu.memory_space<vmem>>, vector<1x512xf32>
    %312 = vector.broadcast %311 : vector<1x512xf32> to vector<128x512xf32>
    %313 = arith.addf %310, %312 : vector<128x512xf32>
    %c0_83 = arith.constant 0 : index
    %c0_84 = arith.constant 0 : index
    %314 = vector.load %arg9[%c0_83, %c0_84] : memref<128x512xf32, #tpu.memory_space<vmem>>, vector<128x512xf32>
    tpu.vector_store %arg9[%c0_83, %c0_84], %313 {strides = array<i32>} : memref<128x512xf32, #tpu.memory_space<vmem>>, vector<128x512xf32>,
    %c0_85 = arith.constant 0 : index
    %c0_86 = arith.constant 0 : index
    %315 = vector.load %arg6[%c0_85, %c0_86] : memref<128x512xbf16, #tpu.memory_space<vmem>>, vector<128x512xbf16>
    %cst_87 = arith.constant 0.000000e+00 : f32
    %316 = vector.broadcast %cst_87 : f32 to vector<16x128xf32>
    %cst_88 = arith.constant 0.000000e+00 : f32
    %317 = vector.broadcast %cst_88 : f32 to vector<16x128xf32>
    %c0_i32_89 = arith.constant 0 : i32
    %c16_i32_90 = arith.constant 16 : i32
    %318 = arith.muli %c0_i32_89, %c16_i32_90 : i32
    %319 = tpu.assume_multiple %318, 16 : i32
    %320 = arith.index_cast %319 : i32 to index
    %c0_91 = arith.constant 0 : index
    %321 = vector.load %arg9[%320, %c0_91] : memref<128x512xf32, #tpu.memory_space<vmem>>, vector<16x512xf32>
    %322 = arith.truncf %316 : vector<16x128xf32> to vector<16x128xbf16>
    %cst_92 = arith.constant dense<0.000000e+00> : vector<16x512xf32>
    %323 = tpu.matmul %322, %315, %cst_92 {dimension_numbers = #tpu.dot_dimension_numbers<[1], [0], [0], [1], [0, 0, 1, 1], [], []>} : vector<16x128xbf16>, vector<128x512xbf16>, vector<16x512xf32> -> vector<16x512xf32>
    %324 = arith.addf %321, %323 : vector<16x512xf32>
    %325 = vector.extract_strided_slice %324 {offsets = [0, 0], sizes = [16, 128], strides = [1, 1]} : vector<16x512xf32> to vector<16x128xf32>
    %326 = arith.negf %325 : vector<16x128xf32>
    %327 = math.exp %326 : vector<16x128xf32>
    %cst_93 = arith.constant 1.000000e+00 : f32
    %328 = vector.broadcast %cst_93 : f32 to vector<16x128xf32>
    %329 = arith.addf %328, %327 : vector<16x128xf32>
    %330 = arith.divf %328, %329 : vector<16x128xf32>
    %331 = vector.extract_strided_slice %324 {offsets = [0, 128], sizes = [16, 128], strides = [1, 1]} : vector<16x512xf32> to vector<16x128xf32>
    %332 = arith.negf %331 : vector<16x128xf32>
    %333 = math.exp %332 : vector<16x128xf32>
    %cst_94 = arith.constant 1.000000e+00 : f32
    %334 = vector.broadcast %cst_94 : f32 to vector<16x128xf32>
    %335 = arith.addf %334, %333 : vector<16x128xf32>
    %336 = arith.divf %334, %335 : vector<16x128xf32>
    %337 = vector.extract_strided_slice %324 {offsets = [0, 256], sizes = [16, 128], strides = [1, 1]} : vector<16x512xf32> to vector<16x128xf32>
    %338 = math.tanh %337 : vector<16x128xf32>
    %339 = vector.extract_strided_slice %324 {offsets = [0, 384], sizes = [16, 128], strides = [1, 1]} : vector<16x512xf32> to vector<16x128xf32>
    %340 = arith.negf %339 : vector<16x128xf32>
    %341 = math.exp %340 : vector<16x128xf32>
    %cst_95 = arith.constant 1.000000e+00 : f32
    %342 = vector.broadcast %cst_95 : f32 to vector<16x128xf32>
    %343 = arith.addf %342, %341 : vector<16x128xf32>
    %344 = arith.divf %342, %343 : vector<16x128xf32>
    %345 = arith.mulf %336, %317 : vector<16x128xf32>
    %346 = arith.mulf %330, %338 : vector<16x128xf32>
    %347 = arith.addf %345, %346 : vector<16x128xf32>
    %348 = math.tanh %347 : vector<16x128xf32>
    %349 = arith.mulf %344, %348 : vector<16x128xf32>
    %350 = arith.truncf %349 : vector<16x128xf32> to vector<16x128xbf16>
    %c0_96 = arith.constant 0 : index
    %351 = arith.index_cast %319 : i32 to index
    %c0_97 = arith.constant 0 : index
    %352 = vector.load %arg8[%c0_96, %351, %c0_97] : memref<1x128x128xbf16, #tpu.memory_space<vmem>>, vector<1x16x128xbf16>
    %353 = vector.shape_cast %352 : vector<1x16x128xbf16> to vector<16x128xbf16>
    %354 = vector.shape_cast %350 : vector<16x128xbf16> to vector<1x16x128xbf16>
    tpu.vector_store %arg8[%c0_96, %351, %c0_97], %354 {strides = array<i32>} : memref<1x128x128xbf16, #tpu.memory_space<vmem>>, vector<1x16x128xbf16>,
    %c1_i32_98 = arith.constant 1 : i32
    %c16_i32_99 = arith.constant 16 : i32
    %355 = arith.muli %c1_i32_98, %c16_i32_99 : i32
    %356 = tpu.assume_multiple %355, 16 : i32
    %357 = arith.index_cast %356 : i32 to index
    %c0_100 = arith.constant 0 : index
    %358 = vector.load %arg9[%357, %c0_100] : memref<128x512xf32, #tpu.memory_space<vmem>>, vector<16x512xf32>
    %359 = arith.truncf %349 : vector<16x128xf32> to vector<16x128xbf16>
    %cst_101 = arith.constant dense<0.000000e+00> : vector<16x512xf32>
    %360 = tpu.matmul %359, %315, %cst_101 {dimension_numbers = #tpu.dot_dimension_numbers<[1], [0], [0], [1], [0, 0, 1, 1], [], []>} : vector<16x128xbf16>, vector<128x512xbf16>, vector<16x512xf32> -> vector<16x512xf32>
    %361 = arith.addf %358, %360 : vector<16x512xf32>
    %362 = vector.extract_strided_slice %361 {offsets = [0, 0], sizes = [16, 128], strides = [1, 1]} : vector<16x512xf32> to vector<16x128xf32>
    %363 = arith.negf %362 : vector<16x128xf32>
    %364 = math.exp %363 : vector<16x128xf32>
    %cst_102 = arith.constant 1.000000e+00 : f32
    %365 = vector.broadcast %cst_102 : f32 to vector<16x128xf32>
    %366 = arith.addf %365, %364 : vector<16x128xf32>
    %367 = arith.divf %365, %366 : vector<16x128xf32>
    %368 = vector.extract_strided_slice %361 {offsets = [0, 128], sizes = [16, 128], strides = [1, 1]} : vector<16x512xf32> to vector<16x128xf32>
    %369 = arith.negf %368 : vector<16x128xf32>
    %370 = math.exp %369 : vector<16x128xf32>
    %cst_103 = arith.constant 1.000000e+00 : f32
    %371 = vector.broadcast %cst_103 : f32 to vector<16x128xf32>
    %372 = arith.addf %371, %370 : vector<16x128xf32>
    %373 = arith.divf %371, %372 : vector<16x128xf32>
    %374 = vector.extract_strided_slice %361 {offsets = [0, 256], sizes = [16, 128], strides = [1, 1]} : vector<16x512xf32> to vector<16x128xf32>
    %375 = math.tanh %374 : vector<16x128xf32>
    %376 = vector.extract_strided_slice %361 {offsets = [0, 384], sizes = [16, 128], strides = [1, 1]} : vector<16x512xf32> to vector<16x128xf32>
    %377 = arith.negf %376 : vector<16x128xf32>
    %378 = math.exp %377 : vector<16x128xf32>
    %cst_104 = arith.constant 1.000000e+00 : f32
    %379 = vector.broadcast %cst_104 : f32 to vector<16x128xf32>
    %380 = arith.addf %379, %378 : vector<16x128xf32>
    %381 = arith.divf %379, %380 : vector<16x128xf32>
    %382 = arith.mulf %373, %347 : vector<16x128xf32>
    %383 = arith.mulf %367, %375 : vector<16x128xf32>
    %384 = arith.addf %382, %383 : vector<16x128xf32>
    %385 = math.tanh %384 : vector<16x128xf32>
    %386 = arith.mulf %381, %385 : vector<16x128xf32>
    %387 = arith.truncf %386 : vector<16x128xf32> to vector<16x128xbf16>
    %c0_105 = arith.constant 0 : index
    %388 = arith.index_cast %356 : i32 to index
    %c0_106 = arith.constant 0 : index
    %389 = vector.load %arg8[%c0_105, %388, %c0_106] : memref<1x128x128xbf16, #tpu.memory_space<vmem>>, vector<1x16x128xbf16>
    %390 = vector.shape_cast %389 : vector<1x16x128xbf16> to vector<16x128xbf16>
    %391 = vector.shape_cast %387 : vector<16x128xbf16> to vector<1x16x128xbf16>
    tpu.vector_store %arg8[%c0_105, %388, %c0_106], %391 {strides = array<i32>} : memref<1x128x128xbf16, #tpu.memory_space<vmem>>, vector<1x16x128xbf16>,
    %c2_i32_107 = arith.constant 2 : i32
    %c16_i32_108 = arith.constant 16 : i32
    %392 = arith.muli %c2_i32_107, %c16_i32_108 : i32
    %393 = tpu.assume_multiple %392, 16 : i32
    %394 = arith.index_cast %393 : i32 to index
    %c0_109 = arith.constant 0 : index
    %395 = vector.load %arg9[%394, %c0_109] : memref<128x512xf32, #tpu.memory_space<vmem>>, vector<16x512xf32>
    %396 = arith.truncf %386 : vector<16x128xf32> to vector<16x128xbf16>
    %cst_110 = arith.constant dense<0.000000e+00> : vector<16x512xf32>
    %397 = tpu.matmul %396, %315, %cst_110 {dimension_numbers = #tpu.dot_dimension_numbers<[1], [0], [0], [1], [0, 0, 1, 1], [], []>} : vector<16x128xbf16>, vector<128x512xbf16>, vector<16x512xf32> -> vector<16x512xf32>
    %398 = arith.addf %395, %397 : vector<16x512xf32>
    %399 = vector.extract_strided_slice %398 {offsets = [0, 0], sizes = [16, 128], strides = [1, 1]} : vector<16x512xf32> to vector<16x128xf32>
    %400 = arith.negf %399 : vector<16x128xf32>
    %401 = math.exp %400 : vector<16x128xf32>
    %cst_111 = arith.constant 1.000000e+00 : f32
    %402 = vector.broadcast %cst_111 : f32 to vector<16x128xf32>
    %403 = arith.addf %402, %401 : vector<16x128xf32>
    %404 = arith.divf %402, %403 : vector<16x128xf32>
    %405 = vector.extract_strided_slice %398 {offsets = [0, 128], sizes = [16, 128], strides = [1, 1]} : vector<16x512xf32> to vector<16x128xf32>
    %406 = arith.negf %405 : vector<16x128xf32>
    %407 = math.exp %406 : vector<16x128xf32>
    %cst_112 = arith.constant 1.000000e+00 : f32
    %408 = vector.broadcast %cst_112 : f32 to vector<16x128xf32>
    %409 = arith.addf %408, %407 : vector<16x128xf32>
    %410 = arith.divf %408, %409 : vector<16x128xf32>
    %411 = vector.extract_strided_slice %398 {offsets = [0, 256], sizes = [16, 128], strides = [1, 1]} : vector<16x512xf32> to vector<16x128xf32>
    %412 = math.tanh %411 : vector<16x128xf32>
    %413 = vector.extract_strided_slice %398 {offsets = [0, 384], sizes = [16, 128], strides = [1, 1]} : vector<16x512xf32> to vector<16x128xf32>
    %414 = arith.negf %413 : vector<16x128xf32>
    %415 = math.exp %414 : vector<16x128xf32>
    %cst_113 = arith.constant 1.000000e+00 : f32
    %416 = vector.broadcast %cst_113 : f32 to vector<16x128xf32>
    %417 = arith.addf %416, %415 : vector<16x128xf32>
    %418 = arith.divf %416, %417 : vector<16x128xf32>
    %419 = arith.mulf %410, %384 : vector<16x128xf32>
    %420 = arith.mulf %404, %412 : vector<16x128xf32>
    %421 = arith.addf %419, %420 : vector<16x128xf32>
    %422 = math.tanh %421 : vector<16x128xf32>
    %423 = arith.mulf %418, %422 : vector<16x128xf32>
    %424 = arith.truncf %423 : vector<16x128xf32> to vector<16x128xbf16>
    %c0_114 = arith.constant 0 : index
    %425 = arith.index_cast %393 : i32 to index
    %c0_115 = arith.constant 0 : index
    %426 = vector.load %arg8[%c0_114, %425, %c0_115] : memref<1x128x128xbf16, #tpu.memory_space<vmem>>, vector<1x16x128xbf16>
    %427 = vector.shape_cast %426 : vector<1x16x128xbf16> to vector<16x128xbf16>
    %428 = vector.shape_cast %424 : vector<16x128xbf16> to vector<1x16x128xbf16>
    tpu.vector_store %arg8[%c0_114, %425, %c0_115], %428 {strides = array<i32>} : memref<1x128x128xbf16, #tpu.memory_space<vmem>>, vector<1x16x128xbf16>,
    %c3_i32_116 = arith.constant 3 : i32
    %c16_i32_117 = arith.constant 16 : i32
    %429 = arith.muli %c3_i32_116, %c16_i32_117 : i32
    %430 = tpu.assume_multiple %429, 16 : i32
    %431 = arith.index_cast %430 : i32 to index
    %c0_118 = arith.constant 0 : index
    %432 = vector.load %arg9[%431, %c0_118] : memref<128x512xf32, #tpu.memory_space<vmem>>, vector<16x512xf32>
    %433 = arith.truncf %423 : vector<16x128xf32> to vector<16x128xbf16>
    %cst_119 = arith.constant dense<0.000000e+00> : vector<16x512xf32>
    %434 = tpu.matmul %433, %315, %cst_119 {dimension_numbers = #tpu.dot_dimension_numbers<[1], [0], [0], [1], [0, 0, 1, 1], [], []>} : vector<16x128xbf16>, vector<128x512xbf16>, vector<16x512xf32> -> vector<16x512xf32>
    %435 = arith.addf %432, %434 : vector<16x512xf32>
    %436 = vector.extract_strided_slice %435 {offsets = [0, 0], sizes = [16, 128], strides = [1, 1]} : vector<16x512xf32> to vector<16x128xf32>
    %437 = arith.negf %436 : vector<16x128xf32>
    %438 = math.exp %437 : vector<16x128xf32>
    %cst_120 = arith.constant 1.000000e+00 : f32
    %439 = vector.broadcast %cst_120 : f32 to vector<16x128xf32>
    %440 = arith.addf %439, %438 : vector<16x128xf32>
    %441 = arith.divf %439, %440 : vector<16x128xf32>
    %442 = vector.extract_strided_slice %435 {offsets = [0, 128], sizes = [16, 128], strides = [1, 1]} : vector<16x512xf32> to vector<16x128xf32>
    %443 = arith.negf %442 : vector<16x128xf32>
    %444 = math.exp %443 : vector<16x128xf32>
    %cst_121 = arith.constant 1.000000e+00 : f32
    %445 = vector.broadcast %cst_121 : f32 to vector<16x128xf32>
    %446 = arith.addf %445, %444 : vector<16x128xf32>
    %447 = arith.divf %445, %446 : vector<16x128xf32>
    %448 = vector.extract_strided_slice %435 {offsets = [0, 256], sizes = [16, 128], strides = [1, 1]} : vector<16x512xf32> to vector<16x128xf32>
    %449 = math.tanh %448 : vector<16x128xf32>
    %450 = vector.extract_strided_slice %435 {offsets = [0, 384], sizes = [16, 128], strides = [1, 1]} : vector<16x512xf32> to vector<16x128xf32>
    %451 = arith.negf %450 : vector<16x128xf32>
    %452 = math.exp %451 : vector<16x128xf32>
    %cst_122 = arith.constant 1.000000e+00 : f32
    %453 = vector.broadcast %cst_122 : f32 to vector<16x128xf32>
    %454 = arith.addf %453, %452 : vector<16x128xf32>
    %455 = arith.divf %453, %454 : vector<16x128xf32>
    %456 = arith.mulf %447, %421 : vector<16x128xf32>
    %457 = arith.mulf %441, %449 : vector<16x128xf32>
    %458 = arith.addf %456, %457 : vector<16x128xf32>
    %459 = math.tanh %458 : vector<16x128xf32>
    %460 = arith.mulf %455, %459 : vector<16x128xf32>
    %461 = arith.truncf %460 : vector<16x128xf32> to vector<16x128xbf16>
    %c0_123 = arith.constant 0 : index
    %462 = arith.index_cast %430 : i32 to index
    %c0_124 = arith.constant 0 : index
    %463 = vector.load %arg8[%c0_123, %462, %c0_124] : memref<1x128x128xbf16, #tpu.memory_space<vmem>>, vector<1x16x128xbf16>
    %464 = vector.shape_cast %463 : vector<1x16x128xbf16> to vector<16x128xbf16>
    %465 = vector.shape_cast %461 : vector<16x128xbf16> to vector<1x16x128xbf16>
    tpu.vector_store %arg8[%c0_123, %462, %c0_124], %465 {strides = array<i32>} : memref<1x128x128xbf16, #tpu.memory_space<vmem>>, vector<1x16x128xbf16>,
    %c4_i32_125 = arith.constant 4 : i32
    %c16_i32_126 = arith.constant 16 : i32
    %466 = arith.muli %c4_i32_125, %c16_i32_126 : i32
    %467 = tpu.assume_multiple %466, 16 : i32
    %468 = arith.index_cast %467 : i32 to index
    %c0_127 = arith.constant 0 : index
    %469 = vector.load %arg9[%468, %c0_127] : memref<128x512xf32, #tpu.memory_space<vmem>>, vector<16x512xf32>
    %470 = arith.truncf %460 : vector<16x128xf32> to vector<16x128xbf16>
    %cst_128 = arith.constant dense<0.000000e+00> : vector<16x512xf32>
    %471 = tpu.matmul %470, %315, %cst_128 {dimension_numbers = #tpu.dot_dimension_numbers<[1], [0], [0], [1], [0, 0, 1, 1], [], []>} : vector<16x128xbf16>, vector<128x512xbf16>, vector<16x512xf32> -> vector<16x512xf32>
    %472 = arith.addf %469, %471 : vector<16x512xf32>
    %473 = vector.extract_strided_slice %472 {offsets = [0, 0], sizes = [16, 128], strides = [1, 1]} : vector<16x512xf32> to vector<16x128xf32>
    %474 = arith.negf %473 : vector<16x128xf32>
    %475 = math.exp %474 : vector<16x128xf32>
    %cst_129 = arith.constant 1.000000e+00 : f32
    %476 = vector.broadcast %cst_129 : f32 to vector<16x128xf32>
    %477 = arith.addf %476, %475 : vector<16x128xf32>
    %478 = arith.divf %476, %477 : vector<16x128xf32>
    %479 = vector.extract_strided_slice %472 {offsets = [0, 128], sizes = [16, 128], strides = [1, 1]} : vector<16x512xf32> to vector<16x128xf32>
    %480 = arith.negf %479 : vector<16x128xf32>
    %481 = math.exp %480 : vector<16x128xf32>
    %cst_130 = arith.constant 1.000000e+00 : f32
    %482 = vector.broadcast %cst_130 : f32 to vector<16x128xf32>
    %483 = arith.addf %482, %481 : vector<16x128xf32>
    %484 = arith.divf %482, %483 : vector<16x128xf32>
    %485 = vector.extract_strided_slice %472 {offsets = [0, 256], sizes = [16, 128], strides = [1, 1]} : vector<16x512xf32> to vector<16x128xf32>
    %486 = math.tanh %485 : vector<16x128xf32>
    %487 = vector.extract_strided_slice %472 {offsets = [0, 384], sizes = [16, 128], strides = [1, 1]} : vector<16x512xf32> to vector<16x128xf32>
    %488 = arith.negf %487 : vector<16x128xf32>
    %489 = math.exp %488 : vector<16x128xf32>
    %cst_131 = arith.constant 1.000000e+00 : f32
    %490 = vector.broadcast %cst_131 : f32 to vector<16x128xf32>
    %491 = arith.addf %490, %489 : vector<16x128xf32>
    %492 = arith.divf %490, %491 : vector<16x128xf32>
    %493 = arith.mulf %484, %458 : vector<16x128xf32>
    %494 = arith.mulf %478, %486 : vector<16x128xf32>
    %495 = arith.addf %493, %494 : vector<16x128xf32>
    %496 = math.tanh %495 : vector<16x128xf32>
    %497 = arith.mulf %492, %496 : vector<16x128xf32>
    %498 = arith.truncf %497 : vector<16x128xf32> to vector<16x128xbf16>
    %c0_132 = arith.constant 0 : index
    %499 = arith.index_cast %467 : i32 to index
    %c0_133 = arith.constant 0 : index
    %500 = vector.load %arg8[%c0_132, %499, %c0_133] : memref<1x128x128xbf16, #tpu.memory_space<vmem>>, vector<1x16x128xbf16>
    %501 = vector.shape_cast %500 : vector<1x16x128xbf16> to vector<16x128xbf16>
    %502 = vector.shape_cast %498 : vector<16x128xbf16> to vector<1x16x128xbf16>
    tpu.vector_store %arg8[%c0_132, %499, %c0_133], %502 {strides = array<i32>} : memref<1x128x128xbf16, #tpu.memory_space<vmem>>, vector<1x16x128xbf16>,
    %c5_i32_134 = arith.constant 5 : i32
    %c16_i32_135 = arith.constant 16 : i32
    %503 = arith.muli %c5_i32_134, %c16_i32_135 : i32
    %504 = tpu.assume_multiple %503, 16 : i32
    %505 = arith.index_cast %504 : i32 to index
    %c0_136 = arith.constant 0 : index
    %506 = vector.load %arg9[%505, %c0_136] : memref<128x512xf32, #tpu.memory_space<vmem>>, vector<16x512xf32>
    %507 = arith.truncf %497 : vector<16x128xf32> to vector<16x128xbf16>
    %cst_137 = arith.constant dense<0.000000e+00> : vector<16x512xf32>
    %508 = tpu.matmul %507, %315, %cst_137 {dimension_numbers = #tpu.dot_dimension_numbers<[1], [0], [0], [1], [0, 0, 1, 1], [], []>} : vector<16x128xbf16>, vector<128x512xbf16>, vector<16x512xf32> -> vector<16x512xf32>
    %509 = arith.addf %506, %508 : vector<16x512xf32>
    %510 = vector.extract_strided_slice %509 {offsets = [0, 0], sizes = [16, 128], strides = [1, 1]} : vector<16x512xf32> to vector<16x128xf32>
    %511 = arith.negf %510 : vector<16x128xf32>
    %512 = math.exp %511 : vector<16x128xf32>
    %cst_138 = arith.constant 1.000000e+00 : f32
    %513 = vector.broadcast %cst_138 : f32 to vector<16x128xf32>
    %514 = arith.addf %513, %512 : vector<16x128xf32>
    %515 = arith.divf %513, %514 : vector<16x128xf32>
    %516 = vector.extract_strided_slice %509 {offsets = [0, 128], sizes = [16, 128], strides = [1, 1]} : vector<16x512xf32> to vector<16x128xf32>
    %517 = arith.negf %516 : vector<16x128xf32>
    %518 = math.exp %517 : vector<16x128xf32>
    %cst_139 = arith.constant 1.000000e+00 : f32
    %519 = vector.broadcast %cst_139 : f32 to vector<16x128xf32>
    %520 = arith.addf %519, %518 : vector<16x128xf32>
    %521 = arith.divf %519, %520 : vector<16x128xf32>
    %522 = vector.extract_strided_slice %509 {offsets = [0, 256], sizes = [16, 128], strides = [1, 1]} : vector<16x512xf32> to vector<16x128xf32>
    %523 = math.tanh %522 : vector<16x128xf32>
    %524 = vector.extract_strided_slice %509 {offsets = [0, 384], sizes = [16, 128], strides = [1, 1]} : vector<16x512xf32> to vector<16x128xf32>
    %525 = arith.negf %524 : vector<16x128xf32>
    %526 = math.exp %525 : vector<16x128xf32>
    %cst_140 = arith.constant 1.000000e+00 : f32
    %527 = vector.broadcast %cst_140 : f32 to vector<16x128xf32>
    %528 = arith.addf %527, %526 : vector<16x128xf32>
    %529 = arith.divf %527, %528 : vector<16x128xf32>
    %530 = arith.mulf %521, %495 : vector<16x128xf32>
    %531 = arith.mulf %515, %523 : vector<16x128xf32>
    %532 = arith.addf %530, %531 : vector<16x128xf32>
    %533 = math.tanh %532 : vector<16x128xf32>
    %534 = arith.mulf %529, %533 : vector<16x128xf32>
    %535 = arith.truncf %534 : vector<16x128xf32> to vector<16x128xbf16>
    %c0_141 = arith.constant 0 : index
    %536 = arith.index_cast %504 : i32 to index
    %c0_142 = arith.constant 0 : index
    %537 = vector.load %arg8[%c0_141, %536, %c0_142] : memref<1x128x128xbf16, #tpu.memory_space<vmem>>, vector<1x16x128xbf16>
    %538 = vector.shape_cast %537 : vector<1x16x128xbf16> to vector<16x128xbf16>
    %539 = vector.shape_cast %535 : vector<16x128xbf16> to vector<1x16x128xbf16>
    tpu.vector_store %arg8[%c0_141, %536, %c0_142], %539 {strides = array<i32>} : memref<1x128x128xbf16, #tpu.memory_space<vmem>>, vector<1x16x128xbf16>,
    %c6_i32_143 = arith.constant 6 : i32
    %c16_i32_144 = arith.constant 16 : i32
    %540 = arith.muli %c6_i32_143, %c16_i32_144 : i32
    %541 = tpu.assume_multiple %540, 16 : i32
    %542 = arith.index_cast %541 : i32 to index
    %c0_145 = arith.constant 0 : index
    %543 = vector.load %arg9[%542, %c0_145] : memref<128x512xf32, #tpu.memory_space<vmem>>, vector<16x512xf32>
    %544 = arith.truncf %534 : vector<16x128xf32> to vector<16x128xbf16>
    %cst_146 = arith.constant dense<0.000000e+00> : vector<16x512xf32>
    %545 = tpu.matmul %544, %315, %cst_146 {dimension_numbers = #tpu.dot_dimension_numbers<[1], [0], [0], [1], [0, 0, 1, 1], [], []>} : vector<16x128xbf16>, vector<128x512xbf16>, vector<16x512xf32> -> vector<16x512xf32>
    %546 = arith.addf %543, %545 : vector<16x512xf32>
    %547 = vector.extract_strided_slice %546 {offsets = [0, 0], sizes = [16, 128], strides = [1, 1]} : vector<16x512xf32> to vector<16x128xf32>
    %548 = arith.negf %547 : vector<16x128xf32>
    %549 = math.exp %548 : vector<16x128xf32>
    %cst_147 = arith.constant 1.000000e+00 : f32
    %550 = vector.broadcast %cst_147 : f32 to vector<16x128xf32>
    %551 = arith.addf %550, %549 : vector<16x128xf32>
    %552 = arith.divf %550, %551 : vector<16x128xf32>
    %553 = vector.extract_strided_slice %546 {offsets = [0, 128], sizes = [16, 128], strides = [1, 1]} : vector<16x512xf32> to vector<16x128xf32>
    %554 = arith.negf %553 : vector<16x128xf32>
    %555 = math.exp %554 : vector<16x128xf32>
    %cst_148 = arith.constant 1.000000e+00 : f32
    %556 = vector.broadcast %cst_148 : f32 to vector<16x128xf32>
    %557 = arith.addf %556, %555 : vector<16x128xf32>
    %558 = arith.divf %556, %557 : vector<16x128xf32>
    %559 = vector.extract_strided_slice %546 {offsets = [0, 256], sizes = [16, 128], strides = [1, 1]} : vector<16x512xf32> to vector<16x128xf32>
    %560 = math.tanh %559 : vector<16x128xf32>
    %561 = vector.extract_strided_slice %546 {offsets = [0, 384], sizes = [16, 128], strides = [1, 1]} : vector<16x512xf32> to vector<16x128xf32>
    %562 = arith.negf %561 : vector<16x128xf32>
    %563 = math.exp %562 : vector<16x128xf32>
    %cst_149 = arith.constant 1.000000e+00 : f32
    %564 = vector.broadcast %cst_149 : f32 to vector<16x128xf32>
    %565 = arith.addf %564, %563 : vector<16x128xf32>
    %566 = arith.divf %564, %565 : vector<16x128xf32>
    %567 = arith.mulf %558, %532 : vector<16x128xf32>
    %568 = arith.mulf %552, %560 : vector<16x128xf32>
    %569 = arith.addf %567, %568 : vector<16x128xf32>
    %570 = math.tanh %569 : vector<16x128xf32>
    %571 = arith.mulf %566, %570 : vector<16x128xf32>
    %572 = arith.truncf %571 : vector<16x128xf32> to vector<16x128xbf16>
    %c0_150 = arith.constant 0 : index
    %573 = arith.index_cast %541 : i32 to index
    %c0_151 = arith.constant 0 : index
    %574 = vector.load %arg8[%c0_150, %573, %c0_151] : memref<1x128x128xbf16, #tpu.memory_space<vmem>>, vector<1x16x128xbf16>
    %575 = vector.shape_cast %574 : vector<1x16x128xbf16> to vector<16x128xbf16>
    %576 = vector.shape_cast %572 : vector<16x128xbf16> to vector<1x16x128xbf16>
    tpu.vector_store %arg8[%c0_150, %573, %c0_151], %576 {strides = array<i32>} : memref<1x128x128xbf16, #tpu.memory_space<vmem>>, vector<1x16x128xbf16>,
    %c7_i32_152 = arith.constant 7 : i32
    %c16_i32_153 = arith.constant 16 : i32
    %577 = arith.muli %c7_i32_152, %c16_i32_153 : i32
    %578 = tpu.assume_multiple %577, 16 : i32
    %579 = arith.index_cast %578 : i32 to index
    %c0_154 = arith.constant 0 : index
    %580 = vector.load %arg9[%579, %c0_154] : memref<128x512xf32, #tpu.memory_space<vmem>>, vector<16x512xf32>
    %581 = arith.truncf %571 : vector<16x128xf32> to vector<16x128xbf16>
    %cst_155 = arith.constant dense<0.000000e+00> : vector<16x512xf32>
    %582 = tpu.matmul %581, %315, %cst_155 {dimension_numbers = #tpu.dot_dimension_numbers<[1], [0], [0], [1], [0, 0, 1, 1], [], []>} : vector<16x128xbf16>, vector<128x512xbf16>, vector<16x512xf32> -> vector<16x512xf32>
    %583 = arith.addf %580, %582 : vector<16x512xf32>
    %584 = vector.extract_strided_slice %583 {offsets = [0, 0], sizes = [16, 128], strides = [1, 1]} : vector<16x512xf32> to vector<16x128xf32>
    %585 = arith.negf %584 : vector<16x128xf32>
    %586 = math.exp %585 : vector<16x128xf32>
    %cst_156 = arith.constant 1.000000e+00 : f32
    %587 = vector.broadcast %cst_156 : f32 to vector<16x128xf32>
    %588 = arith.addf %587, %586 : vector<16x128xf32>
    %589 = arith.divf %587, %588 : vector<16x128xf32>
    %590 = vector.extract_strided_slice %583 {offsets = [0, 128], sizes = [16, 128], strides = [1, 1]} : vector<16x512xf32> to vector<16x128xf32>
    %591 = arith.negf %590 : vector<16x128xf32>
    %592 = math.exp %591 : vector<16x128xf32>
    %cst_157 = arith.constant 1.000000e+00 : f32
    %593 = vector.broadcast %cst_157 : f32 to vector<16x128xf32>
    %594 = arith.addf %593, %592 : vector<16x128xf32>
    %595 = arith.divf %593, %594 : vector<16x128xf32>
    %596 = vector.extract_strided_slice %583 {offsets = [0, 256], sizes = [16, 128], strides = [1, 1]} : vector<16x512xf32> to vector<16x128xf32>
    %597 = math.tanh %596 : vector<16x128xf32>
    %598 = vector.extract_strided_slice %583 {offsets = [0, 384], sizes = [16, 128], strides = [1, 1]} : vector<16x512xf32> to vector<16x128xf32>
    %599 = arith.negf %598 : vector<16x128xf32>
    %600 = math.exp %599 : vector<16x128xf32>
    %cst_158 = arith.constant 1.000000e+00 : f32
    %601 = vector.broadcast %cst_158 : f32 to vector<16x128xf32>
    %602 = arith.addf %601, %600 : vector<16x128xf32>
    %603 = arith.divf %601, %602 : vector<16x128xf32>
    %604 = arith.mulf %595, %569 : vector<16x128xf32>
    %605 = arith.mulf %589, %597 : vector<16x128xf32>
    %606 = arith.addf %604, %605 : vector<16x128xf32>
    %607 = math.tanh %606 : vector<16x128xf32>
    %608 = arith.mulf %603, %607 : vector<16x128xf32>
    %609 = arith.truncf %608 : vector<16x128xf32> to vector<16x128xbf16>
    %c0_159 = arith.constant 0 : index
    %610 = arith.index_cast %578 : i32 to index
    %c0_160 = arith.constant 0 : index
    %611 = vector.load %arg8[%c0_159, %610, %c0_160] : memref<1x128x128xbf16, #tpu.memory_space<vmem>>, vector<1x16x128xbf16>
    %612 = vector.shape_cast %611 : vector<1x16x128xbf16> to vector<16x128xbf16>
    %613 = vector.shape_cast %609 : vector<16x128xbf16> to vector<1x16x128xbf16>
    tpu.vector_store %arg8[%c0_159, %610, %c0_160], %613 {strides = array<i32>} : memref<1x128x128xbf16, #tpu.memory_space<vmem>>, vector<1x16x128xbf16>,
    %c8_i32_161 = arith.constant 8 : i32
    return
  }
  func.func @transform_0(%arg0: i32) -> (i32, i32, i32) {
    %c0_i32 = arith.constant 0 : i32
    %c0_i32_0 = arith.constant 0 : i32
    %c0_i32_1 = arith.constant 0 : i32
    return %arg0, %c0_i32, %c0_i32_0 : i32, i32, i32
  }
  func.func @transform_1(%arg0: i32) -> (i32, i32) {
    %c0_i32 = arith.constant 0 : i32
    %c0_i32_0 = arith.constant 0 : i32
    %c0_i32_1 = arith.constant 0 : i32
    return %c0_i32, %c0_i32_0 : i32, i32
  }
  func.func @transform_2(%arg0: i32) -> (i32, i32) {
    %c0_i32 = arith.constant 0 : i32
    %c0_i32_0 = arith.constant 0 : i32
    %c0_i32_1 = arith.constant 0 : i32
    return %c0_i32, %c0_i32_0 : i32, i32
  }
  func.func @transform_3(%arg0: i32) -> (i32, i32) {
    %c0_i32 = arith.constant 0 : i32
    %c0_i32_0 = arith.constant 0 : i32
    %c0_i32_1 = arith.constant 0 : i32
    return %c0_i32, %c0_i32_0 : i32, i32
  }
  func.func @transform_4(%arg0: i32) -> (i32, i32) {
    %c0_i32 = arith.constant 0 : i32
    %c0_i32_0 = arith.constant 0 : i32
    %c0_i32_1 = arith.constant 0 : i32
    return %c0_i32, %c0_i32_0 : i32, i32
  }
  func.func @transform_5(%arg0: i32) -> (i32, i32) {
    %c0_i32 = arith.constant 0 : i32
    %c0_i32_0 = arith.constant 0 : i32
    %c0_i32_1 = arith.constant 0 : i32
    return %c0_i32, %c0_i32_0 : i32, i32
  }
  func.func @transform_6(%arg0: i32) -> (i32, i32) {
    %c0_i32 = arith.constant 0 : i32
    %c0_i32_0 = arith.constant 0 : i32
    %c0_i32_1 = arith.constant 0 : i32
    return %c0_i32, %c0_i32_0 : i32, i32
  }
  func.func @transform_7(%arg0: i32) -> (i32, i32, i32) {
    %c0_i32 = arith.constant 0 : i32
    %c0_i32_0 = arith.constant 0 : i32
    %c0_i32_1 = arith.constant 0 : i32
    return %arg0, %c0_i32, %c0_i32_0 : i32, i32, i32
  }
}

</mosaic_0001>

<llo_original>
// kernel: tpu_custom_call.1
$region0: #{tpu_custom_call.1}
  #allocation0 [shape = 'u32[]', space=smem, size = 0x4, offset = 0x4, fixed_abs, tag = 'smem constant byte address 0x4 - core index']
  #allocation1 [shape = 'u32[144,128]{1,0:T(1,128)}', space=vmem, size = 0x12000, scoped, tag = 'internal scratch']
  #allocation2 [shape = 'f32[128,512]{1,0:T(8,128)}', space=vmem, size = 0x40000, scoped, tag = 'scratch operand']
  %s0 = inlined_call_operand.vmem [shape: bf16[1,128,16], index: 0, kind: input, shape index: {}]
  %s1 = inlined_call_operand.vmem [shape: bf16[16,512], index: 1, kind: input, shape index: {}]
  %s2 = inlined_call_operand.hbm [shape: bf16[128,512], index: 2, kind: input, shape index: {}]
  %s3 = inlined_call_operand.vmem [shape: f32[1,512], index: 3, kind: input, shape index: {}]
  %s4 = inlined_call_operand.hbm [shape: bf16[128,512], index: 4, kind: input, shape index: {}]
  %s5 = inlined_call_operand.hbm [shape: bf16[128,512], index: 5, kind: input, shape index: {}]
  %s6 = inlined_call_operand.vmem [shape: f32[1,512], index: 6, kind: input, shape index: {}]
  %s7 = inlined_call_operand.hbm [shape: bf16[1,128,128], index: 7, kind: output, shape index: {}]
  %s8 = sld [smem:[#allocation0]]
  $region50: #{tpu_custom_call.1} parent=0
    _
  %s10 = ssub.s32 1, %s8
  %s11 = scalar_select 0, %s10, %s8
  $region1: #{tpu_custom_call.1} parent=0
    #allocation3 [shape = 'u8[131072]{0}', space=vmem, size = 0x20000, scoped, tag = 'input window, operand 2, single buffered']
    #allocation4 [shape = 's32[1]{0}', space=sflag, size = 0x4, scoped, tag = 'scoped memory for tpu_custom_call.1']
    #allocation5 [shape = 's32[1]{0}', space=sflag, size = 0x4, scoped, tag = 'scoped memory for tpu_custom_call.1']
    #allocation6 [shape = 'u8[131072]{0}', space=vmem, size = 0x20000, scoped, tag = 'input window, operand 4, single buffered']
    #allocation7 [shape = 's32[1]{0}', space=sflag, size = 0x4, scoped, tag = 'scoped memory for tpu_custom_call.1']
    #allocation8 [shape = 'u8[131072]{0}', space=vmem, size = 0x20000, scoped, tag = 'input window, operand 5, single buffered']
    #allocation9 [shape = 'u8[32768]{0}', space=vmem, size = 0x8000, scoped, tag = 'output window, operand 0, single buffered']
    %12 = vsyncpa [#allocation4], 0
    %13 = vsyncpa [#allocation7], 0
    %14 = vsyncpa [#allocation5], 0
    // Predicated region
    $region2: #{tpu_custom_call.1} parent=1 // pred_check
      _
    $region3: #{tpu_custom_call.1} parent=1 // pred_check_branch
      %16 = sbr.rel (0) target = $region5
    $region4: #{tpu_custom_call.1} parent=1 // pred_region
      _
    $region5: #{tpu_custom_call.1} parent=1 // pred_fallthru
      _
    // Predicated region
    $region6: #{tpu_custom_call.1} parent=1 // pred_check
      _
    $region7: #{tpu_custom_call.1} parent=1 // pred_check_branch
      %18 = sbr.rel (0) target = $region9
    $region8: #{tpu_custom_call.1} parent=1 // pred_region
      _
    $region9: #{tpu_custom_call.1} parent=1 // pred_fallthru
      _
    // Predicated region
    $region10: #{tpu_custom_call.1} parent=1 // pred_check
      _
    $region11: #{tpu_custom_call.1} parent=1 // pred_check_branch
      %20 = sbr.rel (0) target = $region13
    $region12: #{tpu_custom_call.1} parent=1 // pred_region
      %s22 = ssub.s32 4096, 4096
      %23 = vsyncadd [#allocation4], %s22
      %s24 = sshll.u32 [#allocation3], 4
      %s25 = int_to_ptr.vmem [resolvable:$true] %s24
      %30 = dma.hbm_to_vmem [thread:$0]  %s2, 4096, %s25, [#allocation4], 256, 256, 16
    $region13: #{tpu_custom_call.1} parent=1 // pred_fallthru
      _
    // Predicated region
    $region14: #{tpu_custom_call.1} parent=1 // pred_check
      _
    $region15: #{tpu_custom_call.1} parent=1 // pred_check_branch
      %32 = sbr.rel (0) target = $region17
    $region16: #{tpu_custom_call.1} parent=1 // pred_region
      _
    $region17: #{tpu_custom_call.1} parent=1 // pred_fallthru
      _
    // Predicated region
    $region18: #{tpu_custom_call.1} parent=1 // pred_check
      _
    $region19: #{tpu_custom_call.1} parent=1 // pred_check_branch
      %34 = sbr.rel (0) target = $region21
    $region20: #{tpu_custom_call.1} parent=1 // pred_region
      %s36 = ssub.s32 4096, 4096
      %37 = vsyncadd [#allocation7], %s36
      %s38 = sshll.u32 [#allocation6], 4
      %s39 = int_to_ptr.vmem [resolvable:$true] %s38
      %44 = dma.hbm_to_vmem [thread:$0]  %s4, 4096, %s39, [#allocation7], 256, 256, 16
    $region21: #{tpu_custom_call.1} parent=1 // pred_fallthru
      _
    // Predicated region
    $region22: #{tpu_custom_call.1} parent=1 // pred_check
      _
    $region23: #{tpu_custom_call.1} parent=1 // pred_check_branch
      %46 = sbr.rel (0) target = $region25
    $region24: #{tpu_custom_call.1} parent=1 // pred_region
      %s48 = ssub.s32 4096, 4096
      %49 = vsyncadd [#allocation7], %s48
      %s50 = sshll.u32 [#allocation8], 4
      %s51 = int_to_ptr.vmem [resolvable:$true] %s50
      %56 = dma.hbm_to_vmem [thread:$0]  %s5, 4096, %s51, [#allocation7], 256, 256, 16
    $region25: #{tpu_custom_call.1} parent=1 // pred_fallthru
      _
    // Predicated region
    $region26: #{tpu_custom_call.1} parent=1 // pred_check
      _
    $region27: #{tpu_custom_call.1} parent=1 // pred_check_branch
      %58 = sbr.rel (0) target = $region29
    $region28: #{tpu_custom_call.1} parent=1 // pred_region
      _
    $region29: #{tpu_custom_call.1} parent=1 // pred_fallthru
      _
    // Predicated region
    $region30: #{tpu_custom_call.1} parent=1 // pred_check
      _
    $region31: #{tpu_custom_call.1} parent=1 // pred_check_branch
      %60 = sbr.rel (0) target = $region33
    $region32: #{tpu_custom_call.1} parent=1 // pred_region
      %61 = dma.done [#allocation4], 4096
    $region33: #{tpu_custom_call.1} parent=1 // pred_fallthru
      _
    // Predicated region
    $region34: #{tpu_custom_call.1} parent=1 // pred_check
      _
    $region35: #{tpu_custom_call.1} parent=1 // pred_check_branch
      %63 = sbr.rel (0) target = $region37
    $region36: #{tpu_custom_call.1} parent=1 // pred_region
      %64 = dma.done [#allocation7], 4096
    $region37: #{tpu_custom_call.1} parent=1 // pred_fallthru
      _
    // Predicated region
    $region38: #{tpu_custom_call.1} parent=1 // pred_check
      _
    $region39: #{tpu_custom_call.1} parent=1 // pred_check_branch
      %66 = sbr.rel (0) target = $region41
    $region40: #{tpu_custom_call.1} parent=1 // pred_region
      %67 = dma.done [#allocation7], 4096
    $region41: #{tpu_custom_call.1} parent=1 // pred_fallthru
      _
    %v69 = vld [vmem:[%s0] sm:$0xf]
    %v70 = vld [vmem:[%s0 + $0x4] sm:$0xf]
    %v71 = vld [vmem:[%s0 + $0x8] sm:$0xf]
    %v72 = vld [vmem:[%s0 + $0xc] sm:$0xf]
    %v73 = vld [vmem:[%s0 + $0x10] sm:$0xf]
    %v74 = vld [vmem:[%s0 + $0x14] sm:$0xf]
    %v75 = vld [vmem:[%s0 + $0x18] sm:$0xf]
    %v76 = vld [vmem:[%s0 + $0x1c] sm:$0xf]
    %v77 = vld [vmem:[%s0 + $0x20] sm:$0xf]
    %v78 = vld [vmem:[%s0 + $0x24] sm:$0xf]
    %v79 = vld [vmem:[%s0 + $0x28] sm:$0xf]
    %v80 = vld [vmem:[%s0 + $0x2c] sm:$0xf]
    %v81 = vld [vmem:[%s0 + $0x30] sm:$0xf]
    %v82 = vld [vmem:[%s0 + $0x34] sm:$0xf]
    %v83 = vld [vmem:[%s0 + $0x38] sm:$0xf]
    %v84 = vld [vmem:[%s0 + $0x3c] sm:$0xf]
    %v85 = vld [vmem:[%s1] sm:$0xff]
    %v86 = vld [vmem:[%s1 + $0x8] sm:$0xff]
    %v87 = vld [vmem:[%s1 + $0x10] sm:$0xff]
    %v88 = vld [vmem:[%s1 + $0x18] sm:$0xff]
    %v89 = vld [vmem:[%s3] sm:$0xf]
    %v91 = vlaneseq
    %v92 = vshrl.u32 %v91, 7
    %v93 = vsub.s32 0, %v92
    %v94 = vrot.slane %v89, %v93
    %v95 = vlaneseq
    %v96 = vshrl.u32 %v95, 7
    %v97 = vsub.s32 1, %v96
    %v98 = vrot.slane %v89, %v97
    %v99 = vlaneseq
    %v100 = vshrl.u32 %v99, 7
    %v101 = vsub.s32 2, %v100
    %v102 = vrot.slane %v89, %v101
    %v103 = vlaneseq
    %v104 = vshrl.u32 %v103, 7
    %v105 = vsub.s32 3, %v104
    %v106 = vrot.slane %v89, %v105
    %v127 = vunpack.c.l.b16 %v69
    %v128 = vunpack.c.l.b16 %v70
    %v129 = vunpack.c.l.b16 %v71
    %v130 = vunpack.c.l.b16 %v72
    %v131 = vunpack.c.l.b16 %v73
    %v132 = vunpack.c.l.b16 %v74
    %v133 = vunpack.c.l.b16 %v75
    %v134 = vunpack.c.l.b16 %v76
    %v135 = vunpack.c.l.b16 %v77
    %v136 = vunpack.c.l.b16 %v78
    %v137 = vunpack.c.l.b16 %v79
    %v138 = vunpack.c.l.b16 %v80
    %v139 = vunpack.c.l.b16 %v81
    %v140 = vunpack.c.l.b16 %v82
    %v141 = vunpack.c.l.b16 %v83
    %v142 = vunpack.c.l.b16 %v84
    %v143 = vpack.c.b16 %v128, %v127
    %v144 = vpack.c.b16 %v130, %v129
    %v145 = vpack.c.b16 %v132, %v131
    %v146 = vpack.c.b16 %v134, %v133
    %v147 = vpack.c.b16 %v136, %v135
    %v148 = vpack.c.b16 %v138, %v137
    %v149 = vpack.c.b16 %v140, %v139
    %v150 = vpack.c.b16 %v142, %v141
    %v155 = vunpack.c.l.b16 %v85
    %v156 = vunpack.c.h.b16 %v85
    %v157 = vunpack.c.l.b16 %v86
    %v158 = vunpack.c.h.b16 %v86
    %v159 = vunpack.c.l.b16 %v87
    %v160 = vunpack.c.h.b16 %v87
    %v161 = vunpack.c.l.b16 %v88
    %v162 = vunpack.c.h.b16 %v88
    %v163 = vpack.c.b16 %v159, %v155
    %v164 = vpack.c.b16 %v160, %v156
    %v165 = vpack.c.b16 %v161, %v157
    %v166 = vpack.c.b16 %v162, %v158
    %vm171 = vcmask 130048
    %v173 = vsel %vm171, %v143, 0
    %v176 = vsel %vm171, %v144, 0
    %v179 = vsel %vm171, %v145, 0
    %v182 = vsel %vm171, %v146, 0
    %v185 = vsel %vm171, %v147, 0
    %v188 = vsel %vm171, %v148, 0
    %v191 = vsel %vm171, %v149, 0
    %v194 = vsel %vm171, %v150, 0
    %196 = vmatprep.subr.bf16.mxu0 0
    %197 = vmatpush1.bf16.msra.mxu0 0
    %198 = vmatprep.subr.bf16.mxu0 0
    %199 = vmatpush1.bf16.msra.mxu0 0
    %200 = vmatprep.subr.bf16.mxu0 0
    %201 = vmatpush1.bf16.msra.mxu0 0
    %202 = vmatprep.subr.bf16.mxu0 0
    %203 = vmatpush1.bf16.msra.mxu0 0
    %204 = vmatprep.subr.bf16.mxu0 0
    %205 = vmatpush1.bf16.msra.mxu0 0
    %206 = vmatprep.subr.bf16.mxu0 0
    %207 = vmatpush1.bf16.msra.mxu0 0
    %208 = vmatprep.subr.bf16.mxu0 0
    %209 = vmatpush1.bf16.msra.mxu0 0
    %210 = vmatprep.subr.bf16.mxu0 %v164
    %211 = vmatpush1.bf16.msra.mxu0 %v163
    %212 = vmatprep.subr.bf16.mxu0 0
    %213 = vmatpush2.bf16.msra.mxu0 0
    %214 = vmatprep.subr.bf16.mxu0 0
    %215 = vmatpush2.bf16.msra.mxu0 0
    %216 = vmatprep.subr.bf16.mxu0 0
    %217 = vmatpush2.bf16.msra.mxu0 0
    %218 = vmatprep.subr.bf16.mxu0 0
    %219 = vmatpush2.bf16.msra.mxu0 0
    %220 = vmatprep.subr.bf16.mxu0 0
    %221 = vmatpush2.bf16.msra.mxu0 0
    %222 = vmatprep.subr.bf16.mxu0 0
    %223 = vmatpush2.bf16.msra.mxu0 0
    %224 = vmatprep.subr.bf16.mxu0 0
    %225 = vmatpush2.bf16.msra.mxu0 0
    %226 = vmatprep.subr.bf16.mxu0 0
    %227 = vmatpush2.bf16.msra.mxu0 0
    %228 = vmatprep.mubr.bf16.mxu0 0
    %229 = vmatmul.mubr.bf16.gmra.mxu0 %v173
    %v230 = vpop.f32.mrf.mxu0
    %v231 = vadd.f32 %v94, %v230
    %v232 = vpop.f32.mrf.mxu0
    %v233 = vadd.f32 %v98, %v232
    %v234 = vpop.f32.mrf.mxu0
    %v235 = vadd.f32 %v94, %v234
    %v236 = vpop.f32.mrf.mxu0
    %v237 = vadd.f32 %v98, %v236
    %238 = vmatprep.mubr.bf16.mxu0 0
    %239 = vmatmul.mubr.bf16.gmra.mxu0 %v176
    %v240 = vpop.f32.mrf.mxu0
    %v241 = vadd.f32 %v94, %v240
    %v242 = vpop.f32.mrf.mxu0
    %v243 = vadd.f32 %v98, %v242
    %v244 = vpop.f32.mrf.mxu0
    %v245 = vadd.f32 %v94, %v244
    %v246 = vpop.f32.mrf.mxu0
    %v247 = vadd.f32 %v98, %v246
    %248 = vmatprep.mubr.bf16.mxu0 0
    %249 = vmatmul.mubr.bf16.gmra.mxu0 %v179
    %v250 = vpop.f32.mrf.mxu0
    %v251 = vadd.f32 %v94, %v250
    %v252 = vpop.f32.mrf.mxu0
    %v253 = vadd.f32 %v98, %v252
    %v254 = vpop.f32.mrf.mxu0
    %v255 = vadd.f32 %v94, %v254
    %v256 = vpop.f32.mrf.mxu0
    %v257 = vadd.f32 %v98, %v256
    %258 = vmatprep.mubr.bf16.mxu0 0
    %259 = vmatmul.mubr.bf16.gmra.mxu0 %v182
    %v260 = vpop.f32.mrf.mxu0
    %v261 = vadd.f32 %v94, %v260
    %v262 = vpop.f32.mrf.mxu0
    %v263 = vadd.f32 %v98, %v262
    %v264 = vpop.f32.mrf.mxu0
    %v265 = vadd.f32 %v94, %v264
    %v266 = vpop.f32.mrf.mxu0
    %v267 = vadd.f32 %v98, %v266
    %268 = vmatprep.mubr.bf16.mxu0 0
    %269 = vmatmul.mubr.bf16.gmra.mxu0 %v185
    %v270 = vpop.f32.mrf.mxu0
    %v271 = vadd.f32 %v94, %v270
    %v272 = vpop.f32.mrf.mxu0
    %v273 = vadd.f32 %v98, %v272
    %v274 = vpop.f32.mrf.mxu0
    %v275 = vadd.f32 %v94, %v274
    %v276 = vpop.f32.mrf.mxu0
    %v277 = vadd.f32 %v98, %v276
    %278 = vmatprep.mubr.bf16.mxu0 0
    %279 = vmatmul.mubr.bf16.gmra.mxu0 %v188
    %v280 = vpop.f32.mrf.mxu0
    %v281 = vadd.f32 %v94, %v280
    %v282 = vpop.f32.mrf.mxu0
    %v283 = vadd.f32 %v98, %v282
    %v284 = vpop.f32.mrf.mxu0
    %v285 = vadd.f32 %v94, %v284
    %v286 = vpop.f32.mrf.mxu0
    %v287 = vadd.f32 %v98, %v286
    %288 = vmatprep.mubr.bf16.mxu0 0
    %289 = vmatmul.mubr.bf16.gmra.mxu0 %v191
    %v290 = vpop.f32.mrf.mxu0
    %v291 = vadd.f32 %v94, %v290
    %v292 = vpop.f32.mrf.mxu0
    %v293 = vadd.f32 %v98, %v292
    %v294 = vpop.f32.mrf.mxu0
    %v295 = vadd.f32 %v94, %v294
    %v296 = vpop.f32.mrf.mxu0
    %v297 = vadd.f32 %v98, %v296
    %298 = vmatprep.mubr.bf16.mxu0 0
    %299 = vmatmul.mubr.bf16.gmra.mxu0 %v194
    %v300 = vpop.f32.mrf.mxu0
    %v301 = vadd.f32 %v94, %v300
    %v302 = vpop.f32.mrf.mxu0
    %v303 = vadd.f32 %v98, %v302
    %v304 = vpop.f32.mrf.mxu0
    %v305 = vadd.f32 %v94, %v304
    %v306 = vpop.f32.mrf.mxu0
    %v307 = vadd.f32 %v98, %v306
    %308 = vdwg.mxu0
    %309 = vmatprep.subr.bf16.mxu0 0
    %310 = vmatpush1.bf16.msra.mxu0 0
    %311 = vmatprep.subr.bf16.mxu0 0
    %312 = vmatpush1.bf16.msra.mxu0 0
    %313 = vmatprep.subr.bf16.mxu0 0
    %314 = vmatpush1.bf16.msra.mxu0 0
    %315 = vmatprep.subr.bf16.mxu0 0
    %316 = vmatpush1.bf16.msra.mxu0 0
    %317 = vmatprep.subr.bf16.mxu0 0
    %318 = vmatpush1.bf16.msra.mxu0 0
    %319 = vmatprep.subr.bf16.mxu0 0
    %320 = vmatpush1.bf16.msra.mxu0 0
    %321 = vmatprep.subr.bf16.mxu0 0
    %322 = vmatpush1.bf16.msra.mxu0 0
    %323 = vmatprep.subr.bf16.mxu0 %v166
    %324 = vmatpush1.bf16.msra.mxu0 %v165
    %325 = vmatprep.subr.bf16.mxu0 0
    %326 = vmatpush2.bf16.msra.mxu0 0
    %327 = vmatprep.subr.bf16.mxu0 0
    %328 = vmatpush2.bf16.msra.mxu0 0
    %329 = vmatprep.subr.bf16.mxu0 0
    %330 = vmatpush2.bf16.msra.mxu0 0
    %331 = vmatprep.subr.bf16.mxu0 0
    %332 = vmatpush2.bf16.msra.mxu0 0
    %333 = vmatprep.subr.bf16.mxu0 0
    %334 = vmatpush2.bf16.msra.mxu0 0
    %335 = vmatprep.subr.bf16.mxu0 0
    %336 = vmatpush2.bf16.msra.mxu0 0
    %337 = vmatprep.subr.bf16.mxu0 0
    %338 = vmatpush2.bf16.msra.mxu0 0
    %339 = vmatprep.subr.bf16.mxu0 0
    %340 = vmatpush2.bf16.msra.mxu0 0
    %341 = vmatprep.mubr.bf16.mxu0 0
    %342 = vmatmul.mubr.bf16.gmra.mxu0 %v173
    %v343 = vpop.f32.mrf.mxu0
    %v344 = vadd.f32 %v102, %v343
    %v345 = vpop.f32.mrf.mxu0
    %v346 = vadd.f32 %v106, %v345
    %v347 = vpop.f32.mrf.mxu0
    %v348 = vadd.f32 %v102, %v347
    %v349 = vpop.f32.mrf.mxu0
    %v350 = vadd.f32 %v106, %v349
    %351 = vmatprep.mubr.bf16.mxu0 0
    %352 = vmatmul.mubr.bf16.gmra.mxu0 %v176
    %v353 = vpop.f32.mrf.mxu0
    %v354 = vadd.f32 %v102, %v353
    %v355 = vpop.f32.mrf.mxu0
    %v356 = vadd.f32 %v106, %v355
    %v357 = vpop.f32.mrf.mxu0
    %v358 = vadd.f32 %v102, %v357
    %v359 = vpop.f32.mrf.mxu0
    %v360 = vadd.f32 %v106, %v359
    %361 = vmatprep.mubr.bf16.mxu0 0
    %362 = vmatmul.mubr.bf16.gmra.mxu0 %v179
    %v363 = vpop.f32.mrf.mxu0
    %v364 = vadd.f32 %v102, %v363
    %v365 = vpop.f32.mrf.mxu0
    %v366 = vadd.f32 %v106, %v365
    %v367 = vpop.f32.mrf.mxu0
    %v368 = vadd.f32 %v102, %v367
    %v369 = vpop.f32.mrf.mxu0
    %v370 = vadd.f32 %v106, %v369
    %371 = vmatprep.mubr.bf16.mxu0 0
    %372 = vmatmul.mubr.bf16.gmra.mxu0 %v182
    %v373 = vpop.f32.mrf.mxu0
    %v374 = vadd.f32 %v102, %v373
    %v375 = vpop.f32.mrf.mxu0
    %v376 = vadd.f32 %v106, %v375
    %v377 = vpop.f32.mrf.mxu0
    %v378 = vadd.f32 %v102, %v377
    %v379 = vpop.f32.mrf.mxu0
    %v380 = vadd.f32 %v106, %v379
    %381 = vmatprep.mubr.bf16.mxu0 0
    %382 = vmatmul.mubr.bf16.gmra.mxu0 %v185
    %v383 = vpop.f32.mrf.mxu0
    %v384 = vadd.f32 %v102, %v383
    %v385 = vpop.f32.mrf.mxu0
    %v386 = vadd.f32 %v106, %v385
    %v387 = vpop.f32.mrf.mxu0
    %v388 = vadd.f32 %v102, %v387
    %v389 = vpop.f32.mrf.mxu0
    %v390 = vadd.f32 %v106, %v389
    %391 = vmatprep.mubr.bf16.mxu0 0
    %392 = vmatmul.mubr.bf16.gmra.mxu0 %v188
    %v393 = vpop.f32.mrf.mxu0
    %v394 = vadd.f32 %v102, %v393
    %v395 = vpop.f32.mrf.mxu0
    %v396 = vadd.f32 %v106, %v395
    %v397 = vpop.f32.mrf.mxu0
    %v398 = vadd.f32 %v102, %v397
    %v399 = vpop.f32.mrf.mxu0
    %v400 = vadd.f32 %v106, %v399
    %401 = vmatprep.mubr.bf16.mxu0 0
    %402 = vmatmul.mubr.bf16.gmra.mxu0 %v191
    %v403 = vpop.f32.mrf.mxu0
    %v404 = vadd.f32 %v102, %v403
    %v405 = vpop.f32.mrf.mxu0
    %v406 = vadd.f32 %v106, %v405
    %v407 = vpop.f32.mrf.mxu0
    %v408 = vadd.f32 %v102, %v407
    %v409 = vpop.f32.mrf.mxu0
    %v410 = vadd.f32 %v106, %v409
    %411 = vmatprep.mubr.bf16.mxu0 0
    %412 = vmatmul.mubr.bf16.gmra.mxu0 %v194
    %v413 = vpop.f32.mrf.mxu0
    %v414 = vadd.f32 %v102, %v413
    %v415 = vpop.f32.mrf.mxu0
    %v416 = vadd.f32 %v106, %v415
    %v417 = vpop.f32.mrf.mxu0
    %v418 = vadd.f32 %v102, %v417
    %v419 = vpop.f32.mrf.mxu0
    %v420 = vadd.f32 %v106, %v419
    %421 = vdwg.mxu0
    %422 = vst [vmem:[#allocation2] sm:$0xff] %v231
    %423 = vst [vmem:[#allocation2 + $0x8] sm:$0xff] %v233
    %424 = vst [vmem:[#allocation2 + $0x10] sm:$0xff] %v344
    %425 = vst [vmem:[#allocation2 + $0x18] sm:$0xff] %v346
    %426 = vst [vmem:[#allocation2 + $0x20] sm:$0xff] %v235
    %427 = vst [vmem:[#allocation2 + $0x28] sm:$0xff] %v237
    %428 = vst [vmem:[#allocation2 + $0x30] sm:$0xff] %v348
    %429 = vst [vmem:[#allocation2 + $0x38] sm:$0xff] %v350
    %430 = vst [vmem:[#allocation2 + $0x40] sm:$0xff] %v241
    %431 = vst [vmem:[#allocation2 + $0x48] sm:$0xff] %v243
    %432 = vst [vmem:[#allocation2 + $0x50] sm:$0xff] %v354
    %433 = vst [vmem:[#allocation2 + $0x58] sm:$0xff] %v356
    %434 = vst [vmem:[#allocation2 + $0x60] sm:$0xff] %v245
    %435 = vst [vmem:[#allocation2 + $0x68] sm:$0xff] %v247
    %436 = vst [vmem:[#allocation2 + $0x70] sm:$0xff] %v358
    %437 = vst [vmem:[#allocation2 + $0x78] sm:$0xff] %v360
    %438 = vst [vmem:[#allocation2 + $0x80] sm:$0xff] %v251
    %439 = vst [vmem:[#allocation2 + $0x88] sm:$0xff] %v253
    %440 = vst [vmem:[#allocation2 + $0x90] sm:$0xff] %v364
    %441 = vst [vmem:[#allocation2 + $0x98] sm:$0xff] %v366
    %442 = vst [vmem:[#allocation2 + $0xa0] sm:$0xff] %v255
    %443 = vst [vmem:[#allocation2 + $0xa8] sm:$0xff] %v257
    %444 = vst [vmem:[#allocation2 + $0xb0] sm:$0xff] %v368
    %445 = vst [vmem:[#allocation2 + $0xb8] sm:$0xff] %v370
    %446 = vst [vmem:[#allocation2 + $0xc0] sm:$0xff] %v261
    %447 = vst [vmem:[#allocation2 + $0xc8] sm:$0xff] %v263
    %448 = vst [vmem:[#allocation2 + $0xd0] sm:$0xff] %v374
    %449 = vst [vmem:[#allocation2 + $0xd8] sm:$0xff] %v376
    %450 = vst [vmem:[#allocation2 + $0xe0] sm:$0xff] %v265
    %451 = vst [vmem:[#allocation2 + $0xe8] sm:$0xff] %v267
    %452 = vst [vmem:[#allocation2 + $0xf0] sm:$0xff] %v378
    %453 = vst [vmem:[#allocation2 + $0xf8] sm:$0xff] %v380
    %454 = vst [vmem:[#allocation2 + $0x100] sm:$0xff] %v271
    %455 = vst [vmem:[#allocation2 + $0x108] sm:$0xff] %v273
    %456 = vst [vmem:[#allocation2 + $0x110] sm:$0xff] %v384
    %457 = vst [vmem:[#allocation2 + $0x118] sm:$0xff] %v386
    %458 = vst [vmem:[#allocation2 + $0x120] sm:$0xff] %v275
    %459 = vst [vmem:[#allocation2 + $0x128] sm:$0xff] %v277
    %460 = vst [vmem:[#allocation2 + $0x130] sm:$0xff] %v388
    %461 = vst [vmem:[#allocation2 + $0x138] sm:$0xff] %v390
    %462 = vst [vmem:[#allocation2 + $0x140] sm:$0xff] %v281
    %463 = vst [vmem:[#allocation2 + $0x148] sm:$0xff] %v283
    %464 = vst [vmem:[#allocation2 + $0x150] sm:$0xff] %v394
    %465 = vst [vmem:[#allocation2 + $0x158] sm:$0xff] %v396
    %466 = vst [vmem:[#allocation2 + $0x160] sm:$0xff] %v285
    %467 = vst [vmem:[#allocation2 + $0x168] sm:$0xff] %v287
    %468 = vst [vmem:[#allocation2 + $0x170] sm:$0xff] %v398
    %469 = vst [vmem:[#allocation2 + $0x178] sm:$0xff] %v400
    %470 = vst [vmem:[#allocation2 + $0x180] sm:$0xff] %v291
    %471 = vst [vmem:[#allocation2 + $0x188] sm:$0xff] %v293
    %472 = vst [vmem:[#allocation2 + $0x190] sm:$0xff] %v404
    %473 = vst [vmem:[#allocation2 + $0x198] sm:$0xff] %v406
    %474 = vst [vmem:[#allocation2 + $0x1a0] sm:$0xff] %v295
    %475 = vst [vmem:[#allocation2 + $0x1a8] sm:$0xff] %v297
    %476 = vst [vmem:[#allocation2 + $0x1b0] sm:$0xff] %v408
    %477 = vst [vmem:[#allocation2 + $0x1b8] sm:$0xff] %v410
    %478 = vst [vmem:[#allocation2 + $0x1c0] sm:$0xff] %v301
    %479 = vst [vmem:[#allocation2 + $0x1c8] sm:$0xff] %v303
    %480 = vst [vmem:[#allocation2 + $0x1d0] sm:$0xff] %v414
    %481 = vst [vmem:[#allocation2 + $0x1d8] sm:$0xff] %v416
    %482 = vst [vmem:[#allocation2 + $0x1e0] sm:$0xff] %v305
    %483 = vst [vmem:[#allocation2 + $0x1e8] sm:$0xff] %v307
    %484 = vst [vmem:[#allocation2 + $0x1f0] sm:$0xff] %v418
    %485 = vst [vmem:[#allocation2 + $0x1f8] sm:$0xff] %v420
    %v486 = vld [vmem:[#allocation3] sm:$0xff]
    %v487 = vld [vmem:[#allocation3 + $0x8] sm:$0xff]
    %v488 = vld [vmem:[#allocation3 + $0x10] sm:$0xff]
    %v489 = vld [vmem:[#allocation3 + $0x18] sm:$0xff]
    %v490 = vld [vmem:[#allocation3 + $0x20] sm:$0xff]
    %v491 = vld [vmem:[#allocation3 + $0x28] sm:$0xff]
    %v492 = vld [vmem:[#allocation3 + $0x30] sm:$0xff]
    %v493 = vld [vmem:[#allocation3 + $0x38] sm:$0xff]
    %v494 = vld [vmem:[#allocation3 + $0x40] sm:$0xff]
    %v495 = vld [vmem:[#allocation3 + $0x48] sm:$0xff]
    %v496 = vld [vmem:[#allocation3 + $0x50] sm:$0xff]
    %v497 = vld [vmem:[#allocation3 + $0x58] sm:$0xff]
    %v498 = vld [vmem:[#allocation3 + $0x60] sm:$0xff]
    %v499 = vld [vmem:[#allocation3 + $0x68] sm:$0xff]
    %v500 = vld [vmem:[#allocation3 + $0x70] sm:$0xff]
    %v501 = vld [vmem:[#allocation3 + $0x78] sm:$0xff]
    %v502 = vld [vmem:[#allocation3 + $0x80] sm:$0xff]
    %v503 = vld [vmem:[#allocation3 + $0x88] sm:$0xff]
    %v504 = vld [vmem:[#allocation3 + $0x90] sm:$0xff]
    %v505 = vld [vmem:[#allocation3 + $0x98] sm:$0xff]
    %v506 = vld [vmem:[#allocation3 + $0xa0] sm:$0xff]
    %v507 = vld [vmem:[#allocation3 + $0xa8] sm:$0xff]
    %v508 = vld [vmem:[#allocation3 + $0xb0] sm:$0xff]
    %v509 = vld [vmem:[#allocation3 + $0xb8] sm:$0xff]
    %v510 = vld [vmem:[#allocation3 + $0xc0] sm:$0xff]
    %v511 = vld [vmem:[#allocation3 + $0xc8] sm:$0xff]
    %v512 = vld [vmem:[#allocation3 + $0xd0] sm:$0xff]
    %v513 = vld [vmem:[#allocation3 + $0xd8] sm:$0xff]
    %v514 = vld [vmem:[#allocation3 + $0xe0] sm:$0xff]
    %v515 = vld [vmem:[#allocation3 + $0xe8] sm:$0xff]
    %v516 = vld [vmem:[#allocation3 + $0xf0] sm:$0xff]
    %v517 = vld [vmem:[#allocation3 + $0xf8] sm:$0xff]
    %s518 = smul.u32 0, 4
    %s519 = smul.addr %s518, 8
    %s520 = scalar_lea.vmem [#allocation2], %s519
    %v521 = vld [vmem:[%s520] sm:$0xff]
    %v522 = vld [vmem:[%s520 + $0x8] sm:$0xff]
    %v523 = vld [vmem:[%s520 + $0x10] sm:$0xff]
    %v524 = vld [vmem:[%s520 + $0x18] sm:$0xff]
    %v525 = vld [vmem:[%s520 + $0x20] sm:$0xff]
    %v526 = vld [vmem:[%s520 + $0x28] sm:$0xff]
    %v527 = vld [vmem:[%s520 + $0x30] sm:$0xff]
    %v528 = vld [vmem:[%s520 + $0x38] sm:$0xff]
    %v561 = vunpack.c.l.b16 %v486
    %v562 = vunpack.c.h.b16 %v486
    %v563 = vunpack.c.l.b16 %v487
    %v564 = vunpack.c.h.b16 %v487
    %v565 = vunpack.c.l.b16 %v488
    %v566 = vunpack.c.h.b16 %v488
    %v567 = vunpack.c.l.b16 %v489
    %v568 = vunpack.c.h.b16 %v489
    %v569 = vunpack.c.l.b16 %v490
    %v570 = vunpack.c.h.b16 %v490
    %v571 = vunpack.c.l.b16 %v491
    %v572 = vunpack.c.h.b16 %v491
    %v573 = vunpack.c.l.b16 %v492
    %v574 = vunpack.c.h.b16 %v492
    %v575 = vunpack.c.l.b16 %v493
    %v576 = vunpack.c.h.b16 %v493
    %v577 = vunpack.c.l.b16 %v494
    %v578 = vunpack.c.h.b16 %v494
    %v579 = vunpack.c.l.b16 %v495
    %v580 = vunpack.c.h.b16 %v495
    %v581 = vunpack.c.l.b16 %v496
    %v582 = vunpack.c.h.b16 %v496
    %v583 = vunpack.c.l.b16 %v497
    %v584 = vunpack.c.h.b16 %v497
    %v585 = vunpack.c.l.b16 %v498
    %v586 = vunpack.c.h.b16 %v498
    %v587 = vunpack.c.l.b16 %v499
    %v588 = vunpack.c.h.b16 %v499
    %v589 = vunpack.c.l.b16 %v500
    %v590 = vunpack.c.h.b16 %v500
    %v591 = vunpack.c.l.b16 %v501
    %v592 = vunpack.c.h.b16 %v501
    %v593 = vunpack.c.l.b16 %v502
    %v594 = vunpack.c.h.b16 %v502
    %v595 = vunpack.c.l.b16 %v503
    %v596 = vunpack.c.h.b16 %v503
    %v597 = vunpack.c.l.b16 %v504
    %v598 = vunpack.c.h.b16 %v504
    %v599 = vunpack.c.l.b16 %v505
    %v600 = vunpack.c.h.b16 %v505
    %v601 = vunpack.c.l.b16 %v506
    %v602 = vunpack.c.h.b16 %v506
    %v603 = vunpack.c.l.b16 %v507
    %v604 = vunpack.c.h.b16 %v507
    %v605 = vunpack.c.l.b16 %v508
    %v606 = vunpack.c.h.b16 %v508
    %v607 = vunpack.c.l.b16 %v509
    %v608 = vunpack.c.h.b16 %v509
    %v609 = vunpack.c.l.b16 %v510
    %v610 = vunpack.c.h.b16 %v510
    %v611 = vunpack.c.l.b16 %v511
    %v612 = vunpack.c.h.b16 %v511
    %v613 = vunpack.c.l.b16 %v512
    %v614 = vunpack.c.h.b16 %v512
    %v615 = vunpack.c.l.b16 %v513
    %v616 = vunpack.c.h.b16 %v513
    %v617 = vunpack.c.l.b16 %v514
    %v618 = vunpack.c.h.b16 %v514
    %v619 = vunpack.c.l.b16 %v515
    %v620 = vunpack.c.h.b16 %v515
    %v621 = vunpack.c.l.b16 %v516
    %v622 = vunpack.c.h.b16 %v516
    %v623 = vunpack.c.l.b16 %v517
    %v624 = vunpack.c.h.b16 %v517
    %v625 = vpack.c.b16 %v565, %v561
    %v626 = vpack.c.b16 %v566, %v562
    %v627 = vpack.c.b16 %v567, %v563
    %v628 = vpack.c.b16 %v568, %v564
    %v629 = vpack.c.b16 %v573, %v569
    %v630 = vpack.c.b16 %v574, %v570
    %v631 = vpack.c.b16 %v575, %v571
    %v632 = vpack.c.b16 %v576, %v572
    %v633 = vpack.c.b16 %v581, %v577
    %v634 = vpack.c.b16 %v582, %v578
    %v635 = vpack.c.b16 %v583, %v579
    %v636 = vpack.c.b16 %v584, %v580
    %v637 = vpack.c.b16 %v589, %v585
    %v638 = vpack.c.b16 %v590, %v586
    %v639 = vpack.c.b16 %v591, %v587
    %v640 = vpack.c.b16 %v592, %v588
    %v641 = vpack.c.b16 %v597, %v593
    %v642 = vpack.c.b16 %v598, %v594
    %v643 = vpack.c.b16 %v599, %v595
    %v644 = vpack.c.b16 %v600, %v596
    %v645 = vpack.c.b16 %v605, %v601
    %v646 = vpack.c.b16 %v606, %v602
    %v647 = vpack.c.b16 %v607, %v603
    %v648 = vpack.c.b16 %v608, %v604
    %v649 = vpack.c.b16 %v613, %v609
    %v650 = vpack.c.b16 %v614, %v610
    %v651 = vpack.c.b16 %v615, %v611
    %v652 = vpack.c.b16 %v616, %v612
    %v653 = vpack.c.b16 %v621, %v617
    %v654 = vpack.c.b16 %v622, %v618
    %v655 = vpack.c.b16 %v623, %v619
    %v656 = vpack.c.b16 %v624, %v620
    %689 = vmatprep.subr.bf16.mxu0 %v654
    %690 = vmatpush1.bf16.msra.mxu0 %v653
    %691 = vmatprep.subr.bf16.mxu0 %v650
    %692 = vmatpush1.bf16.msra.mxu0 %v649
    %693 = vmatprep.subr.bf16.mxu0 %v646
    %694 = vmatpush1.bf16.msra.mxu0 %v645
    %695 = vmatprep.subr.bf16.mxu0 %v642
    %696 = vmatpush1.bf16.msra.mxu0 %v641
    %697 = vmatprep.subr.bf16.mxu0 %v638
    %698 = vmatpush1.bf16.msra.mxu0 %v637
    %699 = vmatprep.subr.bf16.mxu0 %v634
    %700 = vmatpush1.bf16.msra.mxu0 %v633
    %701 = vmatprep.subr.bf16.mxu0 %v630
    %702 = vmatpush1.bf16.msra.mxu0 %v629
    %703 = vmatprep.subr.bf16.mxu0 %v626
    %704 = vmatpush1.bf16.msra.mxu0 %v625
    %705 = vmatprep.subr.bf16.mxu0 0
    %706 = vmatpush2.bf16.msra.mxu0 0
    %707 = vmatprep.subr.bf16.mxu0 0
    %708 = vmatpush2.bf16.msra.mxu0 0
    %709 = vmatprep.subr.bf16.mxu0 0
    %710 = vmatpush2.bf16.msra.mxu0 0
    %711 = vmatprep.subr.bf16.mxu0 0
    %712 = vmatpush2.bf16.msra.mxu0 0
    %713 = vmatprep.subr.bf16.mxu0 0
    %714 = vmatpush2.bf16.msra.mxu0 0
    %715 = vmatprep.subr.bf16.mxu0 0
    %716 = vmatpush2.bf16.msra.mxu0 0
    %717 = vmatprep.subr.bf16.mxu0 0
    %718 = vmatpush2.bf16.msra.mxu0 0
    %719 = vmatprep.subr.bf16.mxu0 0
    %720 = vmatpush2.bf16.msra.mxu0 0
    %721 = vmatprep.mubr.bf16.mxu0 0
    %722 = vmatmul.mubr.bf16.gmra.mxu0 0
    %v723 = vpop.f32.mrf.mxu0
    %v724 = vadd.f32 0.0, %v723
    %v725 = vpop.f32.mrf.mxu0
    %v726 = vadd.f32 0.0, %v725
    %v727 = vpop.f32.mrf.mxu0
    %v728 = vadd.f32 0.0, %v727
    %v729 = vpop.f32.mrf.mxu0
    %v730 = vadd.f32 0.0, %v729
    %731 = vdwg.mxu0
    %732 = vmatprep.subr.bf16.mxu0 %v656
    %733 = vmatpush1.bf16.msra.mxu0 %v655
    %734 = vmatprep.subr.bf16.mxu0 %v652
    %735 = vmatpush1.bf16.msra.mxu0 %v651
    %736 = vmatprep.subr.bf16.mxu0 %v648
    %737 = vmatpush1.bf16.msra.mxu0 %v647
    %738 = vmatprep.subr.bf16.mxu0 %v644
    %739 = vmatpush1.bf16.msra.mxu0 %v643
    %740 = vmatprep.subr.bf16.mxu0 %v640
    %741 = vmatpush1.bf16.msra.mxu0 %v639
    %742 = vmatprep.subr.bf16.mxu0 %v636
    %743 = vmatpush1.bf16.msra.mxu0 %v635
    %744 = vmatprep.subr.bf16.mxu0 %v632
    %745 = vmatpush1.bf16.msra.mxu0 %v631
    %746 = vmatprep.subr.bf16.mxu0 %v628
    %747 = vmatpush1.bf16.msra.mxu0 %v627
    %748 = vmatprep.subr.bf16.mxu0 0
    %749 = vmatpush2.bf16.msra.mxu0 0
    %750 = vmatprep.subr.bf16.mxu0 0
    %751 = vmatpush2.bf16.msra.mxu0 0
    %752 = vmatprep.subr.bf16.mxu0 0
    %753 = vmatpush2.bf16.msra.mxu0 0
    %754 = vmatprep.subr.bf16.mxu0 0
    %755 = vmatpush2.bf16.msra.mxu0 0
    %756 = vmatprep.subr.bf16.mxu0 0
    %757 = vmatpush2.bf16.msra.mxu0 0
    %758 = vmatprep.subr.bf16.mxu0 0
    %759 = vmatpush2.bf16.msra.mxu0 0
    %760 = vmatprep.subr.bf16.mxu0 0
    %761 = vmatpush2.bf16.msra.mxu0 0
    %762 = vmatprep.subr.bf16.mxu0 0
    %763 = vmatpush2.bf16.msra.mxu0 0
    %764 = vmatprep.mubr.bf16.mxu0 0
    %765 = vmatmul.mubr.bf16.gmra.mxu0 0
    %v766 = vpop.f32.mrf.mxu0
    %v767 = vadd.f32 0.0, %v766
    %v768 = vpop.f32.mrf.mxu0
    %v769 = vadd.f32 0.0, %v768
    %v770 = vpop.f32.mrf.mxu0
    %v771 = vadd.f32 0.0, %v770
    %v772 = vpop.f32.mrf.mxu0
    %v773 = vadd.f32 0.0, %v772
    %774 = vdwg.mxu0
    %v775 = vadd.f32 %v521, %v724
    %v776 = vadd.f32 %v522, %v726
    %v777 = vadd.f32 %v523, %v767
    %v778 = vadd.f32 %v524, %v769
    %v779 = vadd.f32 %v525, %v728
    %v780 = vadd.f32 %v526, %v730
    %v781 = vadd.f32 %v527, %v771
    %v782 = vadd.f32 %v528, %v773
    %v783 = vxor.u32 %v775, 2147483648
    %v784 = vxor.u32 %v779, 2147483648
    %v785 = vmul.f32 %v783, 1.442695
    %v786 = vpow.pop %v785
    %v787 = vmul.f32 %v784, 1.442695
    %v788 = vpow.pop %v787
    %v789 = vadd.f32 %v786, 1.0
    %v790 = vadd.f32 %v788, 1.0
    %v791 = vrcp.pop %v789
    %v792 = vmul.f32 1.0, %v791
    %v793 = vrcp.pop %v790
    %v794 = vmul.f32 1.0, %v793
    %v795 = vxor.u32 %v776, 2147483648
    %v796 = vxor.u32 %v780, 2147483648
    %v797 = vmul.f32 %v795, 1.442695
    %v798 = vpow.pop %v797
    %v799 = vmul.f32 %v796, 1.442695
    %v800 = vpow.pop %v799
    %v801 = vadd.f32 %v798, 1.0
    %v802 = vadd.f32 %v800, 1.0
    %v803 = vrcp.pop %v801
    %v804 = vmul.f32 1.0, %v803
    %v805 = vrcp.pop %v802
    %v806 = vmul.f32 1.0, %v805
    %v807 = vtanh.pop %v777
    %v808 = vtanh.pop %v781
    %v809 = vxor.u32 %v778, 2147483648
    %v810 = vxor.u32 %v782, 2147483648
    %v811 = vmul.f32 %v809, 1.442695
    %v812 = vpow.pop %v811
    %v813 = vmul.f32 %v810, 1.442695
    %v814 = vpow.pop %v813
    %v815 = vadd.f32 %v812, 1.0
    %v816 = vadd.f32 %v814, 1.0
    %v817 = vrcp.pop %v815
    %v818 = vmul.f32 1.0, %v817
    %v819 = vrcp.pop %v816
    %v820 = vmul.f32 1.0, %v819
    %v821 = vmul.f32 %v804, 0.0
    %v822 = vmul.f32 %v806, 0.0
    %v823 = vmul.f32 %v792, %v807
    %v824 = vmul.f32 %v794, %v808
    %v825 = vadd.f32 %v821, %v823
    %v826 = vadd.f32 %v822, %v824
    %v827 = vtanh.pop %v825
    %v828 = vtanh.pop %v826
    %v829 = vmul.f32 %v818, %v827
    %v830 = vmul.f32 %v820, %v828
    %v831 = vpack.c.bf16 %v830, %v829
    %v833 = vunpack.c.l.b16 %v831
    %v834 = vunpack.c.h.b16 %v831
    %v835 = vpack.c.b16 %v833, %v833
    %v836 = vpack.c.b16 %v834, %v834
    %839 = vst [vmem:[#allocation9] sm:$0xf] %v835
    %840 = vst [vmem:[#allocation9 + $0x4] sm:$0xf] %v836
    %s841 = smul.u32 2, 4
    %s842 = smul.addr %s841, 8
    %s843 = scalar_lea.vmem [#allocation2], %s842
    %v844 = vld [vmem:[%s843] sm:$0xff]
    %v845 = vld [vmem:[%s843 + $0x8] sm:$0xff]
    %v846 = vld [vmem:[%s843 + $0x10] sm:$0xff]
    %v847 = vld [vmem:[%s843 + $0x18] sm:$0xff]
    %v848 = vld [vmem:[%s843 + $0x20] sm:$0xff]
    %v849 = vld [vmem:[%s843 + $0x28] sm:$0xff]
    %v850 = vld [vmem:[%s843 + $0x30] sm:$0xff]
    %v851 = vld [vmem:[%s843 + $0x38] sm:$0xff]
    %852 = vmatprep.subr.bf16.mxu0 %v654
    %853 = vmatpush1.bf16.msra.mxu0 %v653
    %854 = vmatprep.subr.bf16.mxu0 %v650
    %855 = vmatpush1.bf16.msra.mxu0 %v649
    %856 = vmatprep.subr.bf16.mxu0 %v646
    %857 = vmatpush1.bf16.msra.mxu0 %v645
    %858 = vmatprep.subr.bf16.mxu0 %v642
    %859 = vmatpush1.bf16.msra.mxu0 %v641
    %860 = vmatprep.subr.bf16.mxu0 %v638
    %861 = vmatpush1.bf16.msra.mxu0 %v637
    %862 = vmatprep.subr.bf16.mxu0 %v634
    %863 = vmatpush1.bf16.msra.mxu0 %v633
    %864 = vmatprep.subr.bf16.mxu0 %v630
    %865 = vmatpush1.bf16.msra.mxu0 %v629
    %866 = vmatprep.subr.bf16.mxu0 %v626
    %867 = vmatpush1.bf16.msra.mxu0 %v625
    %868 = vmatprep.subr.bf16.mxu0 0
    %869 = vmatpush2.bf16.msra.mxu0 0
    %870 = vmatprep.subr.bf16.mxu0 0
    %871 = vmatpush2.bf16.msra.mxu0 0
    %872 = vmatprep.subr.bf16.mxu0 0
    %873 = vmatpush2.bf16.msra.mxu0 0
    %874 = vmatprep.subr.bf16.mxu0 0
    %875 = vmatpush2.bf16.msra.mxu0 0
    %876 = vmatprep.subr.bf16.mxu0 0
    %877 = vmatpush2.bf16.msra.mxu0 0
    %878 = vmatprep.subr.bf16.mxu0 0
    %879 = vmatpush2.bf16.msra.mxu0 0
    %880 = vmatprep.subr.bf16.mxu0 0
    %881 = vmatpush2.bf16.msra.mxu0 0
    %882 = vmatprep.subr.bf16.mxu0 0
    %883 = vmatpush2.bf16.msra.mxu0 0
    %884 = vmatprep.mubr.bf16.mxu0 0
    %885 = vmatmul.mubr.bf16.gmra.mxu0 %v831
    %v886 = vpop.f32.mrf.mxu0
    %v887 = vadd.f32 0.0, %v886
    %v888 = vpop.f32.mrf.mxu0
    %v889 = vadd.f32 0.0, %v888
    %v890 = vpop.f32.mrf.mxu0
    %v891 = vadd.f32 0.0, %v890
    %v892 = vpop.f32.mrf.mxu0
    %v893 = vadd.f32 0.0, %v892
    %894 = vdwg.mxu0
    %895 = vmatprep.subr.bf16.mxu0 %v656
    %896 = vmatpush1.bf16.msra.mxu0 %v655
    %897 = vmatprep.subr.bf16.mxu0 %v652
    %898 = vmatpush1.bf16.msra.mxu0 %v651
    %899 = vmatprep.subr.bf16.mxu0 %v648
    %900 = vmatpush1.bf16.msra.mxu0 %v647
    %901 = vmatprep.subr.bf16.mxu0 %v644
    %902 = vmatpush1.bf16.msra.mxu0 %v643
    %903 = vmatprep.subr.bf16.mxu0 %v640
    %904 = vmatpush1.bf16.msra.mxu0 %v639
    %905 = vmatprep.subr.bf16.mxu0 %v636
    %906 = vmatpush1.bf16.msra.mxu0 %v635
    %907 = vmatprep.subr.bf16.mxu0 %v632
    %908 = vmatpush1.bf16.msra.mxu0 %v631
    %909 = vmatprep.subr.bf16.mxu0 %v628
    %910 = vmatpush1.bf16.msra.mxu0 %v627
    %911 = vmatprep.subr.bf16.mxu0 0
    %912 = vmatpush2.bf16.msra.mxu0 0
    %913 = vmatprep.subr.bf16.mxu0 0
    %914 = vmatpush2.bf16.msra.mxu0 0
    %915 = vmatprep.subr.bf16.mxu0 0
    %916 = vmatpush2.bf16.msra.mxu0 0
    %917 = vmatprep.subr.bf16.mxu0 0
    %918 = vmatpush2.bf16.msra.mxu0 0
    %919 = vmatprep.subr.bf16.mxu0 0
    %920 = vmatpush2.bf16.msra.mxu0 0
    %921 = vmatprep.subr.bf16.mxu0 0
    %922 = vmatpush2.bf16.msra.mxu0 0
    %923 = vmatprep.subr.bf16.mxu0 0
    %924 = vmatpush2.bf16.msra.mxu0 0
    %925 = vmatprep.subr.bf16.mxu0 0
    %926 = vmatpush2.bf16.msra.mxu0 0
    %927 = vmatprep.mubr.bf16.mxu0 0
    %928 = vmatmul.mubr.bf16.gmra.mxu0 %v831
    %v929 = vpop.f32.mrf.mxu0
    %v930 = vadd.f32 0.0, %v929
    %v931 = vpop.f32.mrf.mxu0
    %v932 = vadd.f32 0.0, %v931
    %v933 = vpop.f32.mrf.mxu0
    %v934 = vadd.f32 0.0, %v933
    %v935 = vpop.f32.mrf.mxu0
    %v936 = vadd.f32 0.0, %v935
    %937 = vdwg.mxu0
    %v938 = vadd.f32 %v844, %v887
    %v939 = vadd.f32 %v845, %v889
    %v940 = vadd.f32 %v846, %v930
    %v941 = vadd.f32 %v847, %v932
    %v942 = vadd.f32 %v848, %v891
    %v943 = vadd.f32 %v849, %v893
    %v944 = vadd.f32 %v850, %v934
    %v945 = vadd.f32 %v851, %v936
    %v946 = vxor.u32 %v938, 2147483648
    %v947 = vxor.u32 %v942, 2147483648
    %v948 = vmul.f32 %v946, 1.442695
    %v949 = vpow.pop %v948
    %v950 = vmul.f32 %v947, 1.442695
    %v951 = vpow.pop %v950
    %v952 = vadd.f32 %v949, 1.0
    %v953 = vadd.f32 %v951, 1.0
    %v954 = vrcp.pop %v952
    %v955 = vmul.f32 1.0, %v954
    %v956 = vrcp.pop %v953
    %v957 = vmul.f32 1.0, %v956
    %v958 = vxor.u32 %v939, 2147483648
    %v959 = vxor.u32 %v943, 2147483648
    %v960 = vmul.f32 %v958, 1.442695
    %v961 = vpow.pop %v960
    %v962 = vmul.f32 %v959, 1.442695
    %v963 = vpow.pop %v962
    %v964 = vadd.f32 %v961, 1.0
    %v965 = vadd.f32 %v963, 1.0
    %v966 = vrcp.pop %v964
    %v967 = vmul.f32 1.0, %v966
    %v968 = vrcp.pop %v965
    %v969 = vmul.f32 1.0, %v968
    %v970 = vtanh.pop %v940
    %v971 = vtanh.pop %v944
    %v972 = vxor.u32 %v941, 2147483648
    %v973 = vxor.u32 %v945, 2147483648
    %v974 = vmul.f32 %v972, 1.442695
    %v975 = vpow.pop %v974
    %v976 = vmul.f32 %v973, 1.442695
    %v977 = vpow.pop %v976
    %v978 = vadd.f32 %v975, 1.0
    %v979 = vadd.f32 %v977, 1.0
    %v980 = vrcp.pop %v978
    %v981 = vmul.f32 1.0, %v980
    %v982 = vrcp.pop %v979
    %v983 = vmul.f32 1.0, %v982
    %v984 = vmul.f32 %v967, %v825
    %v985 = vmul.f32 %v969, %v826
    %v986 = vmul.f32 %v955, %v970
    %v987 = vmul.f32 %v957, %v971
    %v988 = vadd.f32 %v984, %v986
    %v989 = vadd.f32 %v985, %v987
    %v990 = vtanh.pop %v988
    %v991 = vtanh.pop %v989
    %v992 = vmul.f32 %v981, %v990
    %v993 = vmul.f32 %v983, %v991
    %v994 = vpack.c.bf16 %v993, %v992
    %v996 = vunpack.c.l.b16 %v994
    %v997 = vunpack.c.h.b16 %v994
    %v998 = vpack.c.b16 %v996, %v996
    %v999 = vpack.c.b16 %v997, %v997
    %s1002 = scalar_lea.vmem [#allocation9], 8
    %1003 = vst [vmem:[%s1002] sm:$0xf] %v998
    %1004 = vst [vmem:[%s1002 + $0x4] sm:$0xf] %v999
    %s1005 = smul.u32 4, 4
    %s1006 = smul.addr %s1005, 8
    %s1007 = scalar_lea.vmem [#allocation2], %s1006
    %v1008 = vld [vmem:[%s1007] sm:$0xff]
    %v1009 = vld [vmem:[%s1007 + $0x8] sm:$0xff]
    %v1010 = vld [vmem:[%s1007 + $0x10] sm:$0xff]
    %v1011 = vld [vmem:[%s1007 + $0x18] sm:$0xff]
    %v1012 = vld [vmem:[%s1007 + $0x20] sm:$0xff]
    %v1013 = vld [vmem:[%s1007 + $0x28] sm:$0xff]
    %v1014 = vld [vmem:[%s1007 + $0x30] sm:$0xff]
    %v1015 = vld [vmem:[%s1007 + $0x38] sm:$0xff]
    %1016 = vmatprep.subr.bf16.mxu0 %v654
    %1017 = vmatpush1.bf16.msra.mxu0 %v653
    %1018 = vmatprep.subr.bf16.mxu0 %v650
    %1019 = vmatpush1.bf16.msra.mxu0 %v649
    %1020 = vmatprep.subr.bf16.mxu0 %v646
    %1021 = vmatpush1.bf16.msra.mxu0 %v645
    %1022 = vmatprep.subr.bf16.mxu0 %v642
    %1023 = vmatpush1.bf16.msra.mxu0 %v641
    %1024 = vmatprep.subr.bf16.mxu0 %v638
    %1025 = vmatpush1.bf16.msra.mxu0 %v637
    %1026 = vmatprep.subr.bf16.mxu0 %v634
    %1027 = vmatpush1.bf16.msra.mxu0 %v633
    %1028 = vmatprep.subr.bf16.mxu0 %v630
    %1029 = vmatpush1.bf16.msra.mxu0 %v629
    %1030 = vmatprep.subr.bf16.mxu0 %v626
    %1031 = vmatpush1.bf16.msra.mxu0 %v625
    %1032 = vmatprep.subr.bf16.mxu0 0
    %1033 = vmatpush2.bf16.msra.mxu0 0
    %1034 = vmatprep.subr.bf16.mxu0 0
    %1035 = vmatpush2.bf16.msra.mxu0 0
    %1036 = vmatprep.subr.bf16.mxu0 0
    %1037 = vmatpush2.bf16.msra.mxu0 0
    %1038 = vmatprep.subr.bf16.mxu0 0
    %1039 = vmatpush2.bf16.msra.mxu0 0
    %1040 = vmatprep.subr.bf16.mxu0 0
    %1041 = vmatpush2.bf16.msra.mxu0 0
    %1042 = vmatprep.subr.bf16.mxu0 0
    %1043 = vmatpush2.bf16.msra.mxu0 0
    %1044 = vmatprep.subr.bf16.mxu0 0
    %1045 = vmatpush2.bf16.msra.mxu0 0
    %1046 = vmatprep.subr.bf16.mxu0 0
    %1047 = vmatpush2.bf16.msra.mxu0 0
    %1048 = vmatprep.mubr.bf16.mxu0 0
    %1049 = vmatmul.mubr.bf16.gmra.mxu0 %v994
    %v1050 = vpop.f32.mrf.mxu0
    %v1051 = vadd.f32 0.0, %v1050
    %v1052 = vpop.f32.mrf.mxu0
    %v1053 = vadd.f32 0.0, %v1052
    %v1054 = vpop.f32.mrf.mxu0
    %v1055 = vadd.f32 0.0, %v1054
    %v1056 = vpop.f32.mrf.mxu0
    %v1057 = vadd.f32 0.0, %v1056
    %1058 = vdwg.mxu0
    %1059 = vmatprep.subr.bf16.mxu0 %v656
    %1060 = vmatpush1.bf16.msra.mxu0 %v655
    %1061 = vmatprep.subr.bf16.mxu0 %v652
    %1062 = vmatpush1.bf16.msra.mxu0 %v651
    %1063 = vmatprep.subr.bf16.mxu0 %v648
    %1064 = vmatpush1.bf16.msra.mxu0 %v647
    %1065 = vmatprep.subr.bf16.mxu0 %v644
    %1066 = vmatpush1.bf16.msra.mxu0 %v643
    %1067 = vmatprep.subr.bf16.mxu0 %v640
    %1068 = vmatpush1.bf16.msra.mxu0 %v639
    %1069 = vmatprep.subr.bf16.mxu0 %v636
    %1070 = vmatpush1.bf16.msra.mxu0 %v635
    %1071 = vmatprep.subr.bf16.mxu0 %v632
    %1072 = vmatpush1.bf16.msra.mxu0 %v631
    %1073 = vmatprep.subr.bf16.mxu0 %v628
    %1074 = vmatpush1.bf16.msra.mxu0 %v627
    %1075 = vmatprep.subr.bf16.mxu0 0
    %1076 = vmatpush2.bf16.msra.mxu0 0
    %1077 = vmatprep.subr.bf16.mxu0 0
    %1078 = vmatpush2.bf16.msra.mxu0 0
    %1079 = vmatprep.subr.bf16.mxu0 0
    %1080 = vmatpush2.bf16.msra.mxu0 0
    %1081 = vmatprep.subr.bf16.mxu0 0
    %1082 = vmatpush2.bf16.msra.mxu0 0
    %1083 = vmatprep.subr.bf16.mxu0 0
    %1084 = vmatpush2.bf16.msra.mxu0 0
    %1085 = vmatprep.subr.bf16.mxu0 0
    %1086 = vmatpush2.bf16.msra.mxu0 0
    %1087 = vmatprep.subr.bf16.mxu0 0
    %1088 = vmatpush2.bf16.msra.mxu0 0
    %1089 = vmatprep.subr.bf16.mxu0 0
    %1090 = vmatpush2.bf16.msra.mxu0 0
    %1091 = vmatprep.mubr.bf16.mxu0 0
    %1092 = vmatmul.mubr.bf16.gmra.mxu0 %v994
    %v1093 = vpop.f32.mrf.mxu0
    %v1094 = vadd.f32 0.0, %v1093
    %v1095 = vpop.f32.mrf.mxu0
    %v1096 = vadd.f32 0.0, %v1095
    %v1097 = vpop.f32.mrf.mxu0
    %v1098 = vadd.f32 0.0, %v1097
    %v1099 = vpop.f32.mrf.mxu0
    %v1100 = vadd.f32 0.0, %v1099
    %1101 = vdwg.mxu0
    %v1102 = vadd.f32 %v1008, %v1051
    %v1103 = vadd.f32 %v1009, %v1053
    %v1104 = vadd.f32 %v1010, %v1094
    %v1105 = vadd.f32 %v1011, %v1096
    %v1106 = vadd.f32 %v1012, %v1055
    %v1107 = vadd.f32 %v1013, %v1057
    %v1108 = vadd.f32 %v1014, %v1098
    %v1109 = vadd.f32 %v1015, %v1100
    %v1110 = vxor.u32 %v1102, 2147483648
    %v1111 = vxor.u32 %v1106, 2147483648
    %v1112 = vmul.f32 %v1110, 1.442695
    %v1113 = vpow.pop %v1112
    %v1114 = vmul.f32 %v1111, 1.442695
    %v1115 = vpow.pop %v1114
    %v1116 = vadd.f32 %v1113, 1.0
    %v1117 = vadd.f32 %v1115, 1.0
    %v1118 = vrcp.pop %v1116
    %v1119 = vmul.f32 1.0, %v1118
    %v1120 = vrcp.pop %v1117
    %v1121 = vmul.f32 1.0, %v1120
    %v1122 = vxor.u32 %v1103, 2147483648
    %v1123 = vxor.u32 %v1107, 2147483648
    %v1124 = vmul.f32 %v1122, 1.442695
    %v1125 = vpow.pop %v1124
    %v1126 = vmul.f32 %v1123, 1.442695
    %v1127 = vpow.pop %v1126
    %v1128 = vadd.f32 %v1125, 1.0
    %v1129 = vadd.f32 %v1127, 1.0
    %v1130 = vrcp.pop %v1128
    %v1131 = vmul.f32 1.0, %v1130
    %v1132 = vrcp.pop %v1129
    %v1133 = vmul.f32 1.0, %v1132
    %v1134 = vtanh.pop %v1104
    %v1135 = vtanh.pop %v1108
    %v1136 = vxor.u32 %v1105, 2147483648
    %v1137 = vxor.u32 %v1109, 2147483648
    %v1138 = vmul.f32 %v1136, 1.442695
    %v1139 = vpow.pop %v1138
    %v1140 = vmul.f32 %v1137, 1.442695
    %v1141 = vpow.pop %v1140
    %v1142 = vadd.f32 %v1139, 1.0
    %v1143 = vadd.f32 %v1141, 1.0
    %v1144 = vrcp.pop %v1142
    %v1145 = vmul.f32 1.0, %v1144
    %v1146 = vrcp.pop %v1143
    %v1147 = vmul.f32 1.0, %v1146
    %v1148 = vmul.f32 %v1131, %v988
    %v1149 = vmul.f32 %v1133, %v989
    %v1150 = vmul.f32 %v1119, %v1134
    %v1151 = vmul.f32 %v1121, %v1135
    %v1152 = vadd.f32 %v1148, %v1150
    %v1153 = vadd.f32 %v1149, %v1151
    %v1154 = vtanh.pop %v1152
    %v1155 = vtanh.pop %v1153
    %v1156 = vmul.f32 %v1145, %v1154
    %v1157 = vmul.f32 %v1147, %v1155
    %v1158 = vpack.c.bf16 %v1157, %v1156
    %v1160 = vunpack.c.l.b16 %v1158
    %v1161 = vunpack.c.h.b16 %v1158
    %v1162 = vpack.c.b16 %v1160, %v1160
    %v1163 = vpack.c.b16 %v1161, %v1161
    %s1166 = scalar_lea.vmem [#allocation9], 16
    %1167 = vst [vmem:[%s1166] sm:$0xf] %v1162
    %1168 = vst [vmem:[%s1166 + $0x4] sm:$0xf] %v1163
    %s1169 = smul.u32 6, 4
    %s1170 = smul.addr %s1169, 8
    %s1171 = scalar_lea.vmem [#allocation2], %s1170
    %v1172 = vld [vmem:[%s1171] sm:$0xff]
    %v1173 = vld [vmem:[%s1171 + $0x8] sm:$0xff]
    %v1174 = vld [vmem:[%s1171 + $0x10] sm:$0xff]
    %v1175 = vld [vmem:[%s1171 + $0x18] sm:$0xff]
    %v1176 = vld [vmem:[%s1171 + $0x20] sm:$0xff]
    %v1177 = vld [vmem:[%s1171 + $0x28] sm:$0xff]
    %v1178 = vld [vmem:[%s1171 + $0x30] sm:$0xff]
    %v1179 = vld [vmem:[%s1171 + $0x38] sm:$0xff]
    %1180 = vmatprep.subr.bf16.mxu0 %v654
    %1181 = vmatpush1.bf16.msra.mxu0 %v653
    %1182 = vmatprep.subr.bf16.mxu0 %v650
    %1183 = vmatpush1.bf16.msra.mxu0 %v649
    %1184 = vmatprep.subr.bf16.mxu0 %v646
    %1185 = vmatpush1.bf16.msra.mxu0 %v645
    %1186 = vmatprep.subr.bf16.mxu0 %v642
    %1187 = vmatpush1.bf16.msra.mxu0 %v641
    %1188 = vmatprep.subr.bf16.mxu0 %v638
    %1189 = vmatpush1.bf16.msra.mxu0 %v637
    %1190 = vmatprep.subr.bf16.mxu0 %v634
    %1191 = vmatpush1.bf16.msra.mxu0 %v633
    %1192 = vmatprep.subr.bf16.mxu0 %v630
    %1193 = vmatpush1.bf16.msra.mxu0 %v629
    %1194 = vmatprep.subr.bf16.mxu0 %v626
    %1195 = vmatpush1.bf16.msra.mxu0 %v625
    %1196 = vmatprep.subr.bf16.mxu0 0
    %1197 = vmatpush2.bf16.msra.mxu0 0
    %1198 = vmatprep.subr.bf16.mxu0 0
    %1199 = vmatpush2.bf16.msra.mxu0 0
    %1200 = vmatprep.subr.bf16.mxu0 0
    %1201 = vmatpush2.bf16.msra.mxu0 0
    %1202 = vmatprep.subr.bf16.mxu0 0
    %1203 = vmatpush2.bf16.msra.mxu0 0
    %1204 = vmatprep.subr.bf16.mxu0 0
    %1205 = vmatpush2.bf16.msra.mxu0 0
    %1206 = vmatprep.subr.bf16.mxu0 0
    %1207 = vmatpush2.bf16.msra.mxu0 0
    %1208 = vmatprep.subr.bf16.mxu0 0
    %1209 = vmatpush2.bf16.msra.mxu0 0
    %1210 = vmatprep.subr.bf16.mxu0 0
    %1211 = vmatpush2.bf16.msra.mxu0 0
    %1212 = vmatprep.mubr.bf16.mxu0 0
    %1213 = vmatmul.mubr.bf16.gmra.mxu0 %v1158
    %v1214 = vpop.f32.mrf.mxu0
    %v1215 = vadd.f32 0.0, %v1214
    %v1216 = vpop.f32.mrf.mxu0
    %v1217 = vadd.f32 0.0, %v1216
    %v1218 = vpop.f32.mrf.mxu0
    %v1219 = vadd.f32 0.0, %v1218
    %v1220 = vpop.f32.mrf.mxu0
    %v1221 = vadd.f32 0.0, %v1220
    %1222 = vdwg.mxu0
    %1223 = vmatprep.subr.bf16.mxu0 %v656
    %1224 = vmatpush1.bf16.msra.mxu0 %v655
    %1225 = vmatprep.subr.bf16.mxu0 %v652
    %1226 = vmatpush1.bf16.msra.mxu0 %v651
    %1227 = vmatprep.subr.bf16.mxu0 %v648
    %1228 = vmatpush1.bf16.msra.mxu0 %v647
    %1229 = vmatprep.subr.bf16.mxu0 %v644
    %1230 = vmatpush1.bf16.msra.mxu0 %v643
    %1231 = vmatprep.subr.bf16.mxu0 %v640
    %1232 = vmatpush1.bf16.msra.mxu0 %v639
    %1233 = vmatprep.subr.bf16.mxu0 %v636
    %1234 = vmatpush1.bf16.msra.mxu0 %v635
    %1235 = vmatprep.subr.bf16.mxu0 %v632
    %1236 = vmatpush1.bf16.msra.mxu0 %v631
    %1237 = vmatprep.subr.bf16.mxu0 %v628
    %1238 = vmatpush1.bf16.msra.mxu0 %v627
    %1239 = vmatprep.subr.bf16.mxu0 0
    %1240 = vmatpush2.bf16.msra.mxu0 0
    %1241 = vmatprep.subr.bf16.mxu0 0
    %1242 = vmatpush2.bf16.msra.mxu0 0
    %1243 = vmatprep.subr.bf16.mxu0 0
    %1244 = vmatpush2.bf16.msra.mxu0 0
    %1245 = vmatprep.subr.bf16.mxu0 0
    %1246 = vmatpush2.bf16.msra.mxu0 0
    %1247 = vmatprep.subr.bf16.mxu0 0
    %1248 = vmatpush2.bf16.msra.mxu0 0
    %1249 = vmatprep.subr.bf16.mxu0 0
    %1250 = vmatpush2.bf16.msra.mxu0 0
    %1251 = vmatprep.subr.bf16.mxu0 0
    %1252 = vmatpush2.bf16.msra.mxu0 0
    %1253 = vmatprep.subr.bf16.mxu0 0
    %1254 = vmatpush2.bf16.msra.mxu0 0
    %1255 = vmatprep.mubr.bf16.mxu0 0
    %1256 = vmatmul.mubr.bf16.gmra.mxu0 %v1158
    %v1257 = vpop.f32.mrf.mxu0
    %v1258 = vadd.f32 0.0, %v1257
    %v1259 = vpop.f32.mrf.mxu0
    %v1260 = vadd.f32 0.0, %v1259
    %v1261 = vpop.f32.mrf.mxu0
    %v1262 = vadd.f32 0.0, %v1261
    %v1263 = vpop.f32.mrf.mxu0
    %v1264 = vadd.f32 0.0, %v1263
    %1265 = vdwg.mxu0
    %v1266 = vadd.f32 %v1172, %v1215
    %v1267 = vadd.f32 %v1173, %v1217
    %v1268 = vadd.f32 %v1174, %v1258
    %v1269 = vadd.f32 %v1175, %v1260
    %v1270 = vadd.f32 %v1176, %v1219
    %v1271 = vadd.f32 %v1177, %v1221
    %v1272 = vadd.f32 %v1178, %v1262
    %v1273 = vadd.f32 %v1179, %v1264
    %v1274 = vxor.u32 %v1266, 2147483648
    %v1275 = vxor.u32 %v1270, 2147483648
    %v1276 = vmul.f32 %v1274, 1.442695
    %v1277 = vpow.pop %v1276
    %v1278 = vmul.f32 %v1275, 1.442695
    %v1279 = vpow.pop %v1278
    %v1280 = vadd.f32 %v1277, 1.0
    %v1281 = vadd.f32 %v1279, 1.0
    %v1282 = vrcp.pop %v1280
    %v1283 = vmul.f32 1.0, %v1282
    %v1284 = vrcp.pop %v1281
    %v1285 = vmul.f32 1.0, %v1284
    %v1286 = vxor.u32 %v1267, 2147483648
    %v1287 = vxor.u32 %v1271, 2147483648
    %v1288 = vmul.f32 %v1286, 1.442695
    %v1289 = vpow.pop %v1288
    %v1290 = vmul.f32 %v1287, 1.442695
    %v1291 = vpow.pop %v1290
    %v1292 = vadd.f32 %v1289, 1.0
    %v1293 = vadd.f32 %v1291, 1.0
    %v1294 = vrcp.pop %v1292
    %v1295 = vmul.f32 1.0, %v1294
    %v1296 = vrcp.pop %v1293
    %v1297 = vmul.f32 1.0, %v1296
    %v1298 = vtanh.pop %v1268
    %v1299 = vtanh.pop %v1272
    %v1300 = vxor.u32 %v1269, 2147483648
    %v1301 = vxor.u32 %v1273, 2147483648
    %v1302 = vmul.f32 %v1300, 1.442695
    %v1303 = vpow.pop %v1302
    %v1304 = vmul.f32 %v1301, 1.442695
    %v1305 = vpow.pop %v1304
    %v1306 = vadd.f32 %v1303, 1.0
    %v1307 = vadd.f32 %v1305, 1.0
    %v1308 = vrcp.pop %v1306
    %v1309 = vmul.f32 1.0, %v1308
    %v1310 = vrcp.pop %v1307
    %v1311 = vmul.f32 1.0, %v1310
    %v1312 = vmul.f32 %v1295, %v1152
    %v1313 = vmul.f32 %v1297, %v1153
    %v1314 = vmul.f32 %v1283, %v1298
    %v1315 = vmul.f32 %v1285, %v1299
    %v1316 = vadd.f32 %v1312, %v1314
    %v1317 = vadd.f32 %v1313, %v1315
    %v1318 = vtanh.pop %v1316
    %v1319 = vtanh.pop %v1317
    %v1320 = vmul.f32 %v1309, %v1318
    %v1321 = vmul.f32 %v1311, %v1319
    %v1322 = vpack.c.bf16 %v1321, %v1320
    %v1324 = vunpack.c.l.b16 %v1322
    %v1325 = vunpack.c.h.b16 %v1322
    %v1326 = vpack.c.b16 %v1324, %v1324
    %v1327 = vpack.c.b16 %v1325, %v1325
    %s1330 = scalar_lea.vmem [#allocation9], 24
    %1331 = vst [vmem:[%s1330] sm:$0xf] %v1326
    %1332 = vst [vmem:[%s1330 + $0x4] sm:$0xf] %v1327
    %s1333 = smul.u32 8, 4
    %s1334 = smul.addr %s1333, 8
    %s1335 = scalar_lea.vmem [#allocation2], %s1334
    %v1336 = vld [vmem:[%s1335] sm:$0xff]
    %v1337 = vld [vmem:[%s1335 + $0x8] sm:$0xff]
    %v1338 = vld [vmem:[%s1335 + $0x10] sm:$0xff]
    %v1339 = vld [vmem:[%s1335 + $0x18] sm:$0xff]
    %v1340 = vld [vmem:[%s1335 + $0x20] sm:$0xff]
    %v1341 = vld [vmem:[%s1335 + $0x28] sm:$0xff]
    %v1342 = vld [vmem:[%s1335 + $0x30] sm:$0xff]
    %v1343 = vld [vmem:[%s1335 + $0x38] sm:$0xff]
    %1344 = vmatprep.subr.bf16.mxu0 %v654
    %1345 = vmatpush1.bf16.msra.mxu0 %v653
    %1346 = vmatprep.subr.bf16.mxu0 %v650
    %1347 = vmatpush1.bf16.msra.mxu0 %v649
    %1348 = vmatprep.subr.bf16.mxu0 %v646
    %1349 = vmatpush1.bf16.msra.mxu0 %v645
    %1350 = vmatprep.subr.bf16.mxu0 %v642
    %1351 = vmatpush1.bf16.msra.mxu0 %v641
    %1352 = vmatprep.subr.bf16.mxu0 %v638
    %1353 = vmatpush1.bf16.msra.mxu0 %v637
    %1354 = vmatprep.subr.bf16.mxu0 %v634
    %1355 = vmatpush1.bf16.msra.mxu0 %v633
    %1356 = vmatprep.subr.bf16.mxu0 %v630
    %1357 = vmatpush1.bf16.msra.mxu0 %v629
    %1358 = vmatprep.subr.bf16.mxu0 %v626
    %1359 = vmatpush1.bf16.msra.mxu0 %v625
    %1360 = vmatprep.subr.bf16.mxu0 0
    %1361 = vmatpush2.bf16.msra.mxu0 0
    %1362 = vmatprep.subr.bf16.mxu0 0
    %1363 = vmatpush2.bf16.msra.mxu0 0
    %1364 = vmatprep.subr.bf16.mxu0 0
    %1365 = vmatpush2.bf16.msra.mxu0 0
    %1366 = vmatprep.subr.bf16.mxu0 0
    %1367 = vmatpush2.bf16.msra.mxu0 0
    %1368 = vmatprep.subr.bf16.mxu0 0
    %1369 = vmatpush2.bf16.msra.mxu0 0
    %1370 = vmatprep.subr.bf16.mxu0 0
    %1371 = vmatpush2.bf16.msra.mxu0 0
    %1372 = vmatprep.subr.bf16.mxu0 0
    %1373 = vmatpush2.bf16.msra.mxu0 0
    %1374 = vmatprep.subr.bf16.mxu0 0
    %1375 = vmatpush2.bf16.msra.mxu0 0
    %1376 = vmatprep.mubr.bf16.mxu0 0
    %1377 = vmatmul.mubr.bf16.gmra.mxu0 %v1322
    %v1378 = vpop.f32.mrf.mxu0
    %v1379 = vadd.f32 0.0, %v1378
    %v1380 = vpop.f32.mrf.mxu0
    %v1381 = vadd.f32 0.0, %v1380
    %v1382 = vpop.f32.mrf.mxu0
    %v1383 = vadd.f32 0.0, %v1382
    %v1384 = vpop.f32.mrf.mxu0
    %v1385 = vadd.f32 0.0, %v1384
    %1386 = vdwg.mxu0
    %1387 = vmatprep.subr.bf16.mxu0 %v656
    %1388 = vmatpush1.bf16.msra.mxu0 %v655
    %1389 = vmatprep.subr.bf16.mxu0 %v652
    %1390 = vmatpush1.bf16.msra.mxu0 %v651
    %1391 = vmatprep.subr.bf16.mxu0 %v648
    %1392 = vmatpush1.bf16.msra.mxu0 %v647
    %1393 = vmatprep.subr.bf16.mxu0 %v644
    %1394 = vmatpush1.bf16.msra.mxu0 %v643
    %1395 = vmatprep.subr.bf16.mxu0 %v640
    %1396 = vmatpush1.bf16.msra.mxu0 %v639
    %1397 = vmatprep.subr.bf16.mxu0 %v636
    %1398 = vmatpush1.bf16.msra.mxu0 %v635
    %1399 = vmatprep.subr.bf16.mxu0 %v632
    %1400 = vmatpush1.bf16.msra.mxu0 %v631
    %1401 = vmatprep.subr.bf16.mxu0 %v628
    %1402 = vmatpush1.bf16.msra.mxu0 %v627
    %1403 = vmatprep.subr.bf16.mxu0 0
    %1404 = vmatpush2.bf16.msra.mxu0 0
    %1405 = vmatprep.subr.bf16.mxu0 0
    %1406 = vmatpush2.bf16.msra.mxu0 0
    %1407 = vmatprep.subr.bf16.mxu0 0
    %1408 = vmatpush2.bf16.msra.mxu0 0
    %1409 = vmatprep.subr.bf16.mxu0 0
    %1410 = vmatpush2.bf16.msra.mxu0 0
    %1411 = vmatprep.subr.bf16.mxu0 0
    %1412 = vmatpush2.bf16.msra.mxu0 0
    %1413 = vmatprep.subr.bf16.mxu0 0
    %1414 = vmatpush2.bf16.msra.mxu0 0
    %1415 = vmatprep.subr.bf16.mxu0 0
    %1416 = vmatpush2.bf16.msra.mxu0 0
    %1417 = vmatprep.subr.bf16.mxu0 0
    %1418 = vmatpush2.bf16.msra.mxu0 0
    %1419 = vmatprep.mubr.bf16.mxu0 0
    %1420 = vmatmul.mubr.bf16.gmra.mxu0 %v1322
    %v1421 = vpop.f32.mrf.mxu0
    %v1422 = vadd.f32 0.0, %v1421
    %v1423 = vpop.f32.mrf.mxu0
    %v1424 = vadd.f32 0.0, %v1423
    %v1425 = vpop.f32.mrf.mxu0
    %v1426 = vadd.f32 0.0, %v1425
    %v1427 = vpop.f32.mrf.mxu0
    %v1428 = vadd.f32 0.0, %v1427
    %1429 = vdwg.mxu0
    %v1430 = vadd.f32 %v1336, %v1379
    %v1431 = vadd.f32 %v1337, %v1381
    %v1432 = vadd.f32 %v1338, %v1422
    %v1433 = vadd.f32 %v1339, %v1424
    %v1434 = vadd.f32 %v1340, %v1383
    %v1435 = vadd.f32 %v1341, %v1385
    %v1436 = vadd.f32 %v1342, %v1426
    %v1437 = vadd.f32 %v1343, %v1428
    %v1438 = vxor.u32 %v1430, 2147483648
    %v1439 = vxor.u32 %v1434, 2147483648
    %v1440 = vmul.f32 %v1438, 1.442695
    %v1441 = vpow.pop %v1440
    %v1442 = vmul.f32 %v1439, 1.442695
    %v1443 = vpow.pop %v1442
    %v1444 = vadd.f32 %v1441, 1.0
    %v1445 = vadd.f32 %v1443, 1.0
    %v1446 = vrcp.pop %v1444
    %v1447 = vmul.f32 1.0, %v1446
    %v1448 = vrcp.pop %v1445
    %v1449 = vmul.f32 1.0, %v1448
    %v1450 = vxor.u32 %v1431, 2147483648
    %v1451 = vxor.u32 %v1435, 2147483648
    %v1452 = vmul.f32 %v1450, 1.442695
    %v1453 = vpow.pop %v1452
    %v1454 = vmul.f32 %v1451, 1.442695
    %v1455 = vpow.pop %v1454
    %v1456 = vadd.f32 %v1453, 1.0
    %v1457 = vadd.f32 %v1455, 1.0
    %v1458 = vrcp.pop %v1456
    %v1459 = vmul.f32 1.0, %v1458
    %v1460 = vrcp.pop %v1457
    %v1461 = vmul.f32 1.0, %v1460
    %v1462 = vtanh.pop %v1432
    %v1463 = vtanh.pop %v1436
    %v1464 = vxor.u32 %v1433, 2147483648
    %v1465 = vxor.u32 %v1437, 2147483648
    %v1466 = vmul.f32 %v1464, 1.442695
    %v1467 = vpow.pop %v1466
    %v1468 = vmul.f32 %v1465, 1.442695
    %v1469 = vpow.pop %v1468
    %v1470 = vadd.f32 %v1467, 1.0
    %v1471 = vadd.f32 %v1469, 1.0
    %v1472 = vrcp.pop %v1470
    %v1473 = vmul.f32 1.0, %v1472
    %v1474 = vrcp.pop %v1471
    %v1475 = vmul.f32 1.0, %v1474
    %v1476 = vmul.f32 %v1459, %v1316
    %v1477 = vmul.f32 %v1461, %v1317
    %v1478 = vmul.f32 %v1447, %v1462
    %v1479 = vmul.f32 %v1449, %v1463
    %v1480 = vadd.f32 %v1476, %v1478
    %v1481 = vadd.f32 %v1477, %v1479
    %v1482 = vtanh.pop %v1480
    %v1483 = vtanh.pop %v1481
    %v1484 = vmul.f32 %v1473, %v1482
    %v1485 = vmul.f32 %v1475, %v1483
    %v1486 = vpack.c.bf16 %v1485, %v1484
    %v1488 = vunpack.c.l.b16 %v1486
    %v1489 = vunpack.c.h.b16 %v1486
    %v1490 = vpack.c.b16 %v1488, %v1488
    %v1491 = vpack.c.b16 %v1489, %v1489
    %s1494 = scalar_lea.vmem [#allocation9], 32
    %1495 = vst [vmem:[%s1494] sm:$0xf] %v1490
    %1496 = vst [vmem:[%s1494 + $0x4] sm:$0xf] %v1491
    %s1497 = smul.u32 10, 4
    %s1498 = smul.addr %s1497, 8
    %s1499 = scalar_lea.vmem [#allocation2], %s1498
    %v1500 = vld [vmem:[%s1499] sm:$0xff]
    %v1501 = vld [vmem:[%s1499 + $0x8] sm:$0xff]
    %v1502 = vld [vmem:[%s1499 + $0x10] sm:$0xff]
    %v1503 = vld [vmem:[%s1499 + $0x18] sm:$0xff]
    %v1504 = vld [vmem:[%s1499 + $0x20] sm:$0xff]
    %v1505 = vld [vmem:[%s1499 + $0x28] sm:$0xff]
    %v1506 = vld [vmem:[%s1499 + $0x30] sm:$0xff]
    %v1507 = vld [vmem:[%s1499 + $0x38] sm:$0xff]
    %1508 = vmatprep.subr.bf16.mxu0 %v654
    %1509 = vmatpush1.bf16.msra.mxu0 %v653
    %1510 = vmatprep.subr.bf16.mxu0 %v650
    %1511 = vmatpush1.bf16.msra.mxu0 %v649
    %1512 = vmatprep.subr.bf16.mxu0 %v646
    %1513 = vmatpush1.bf16.msra.mxu0 %v645
    %1514 = vmatprep.subr.bf16.mxu0 %v642
    %1515 = vmatpush1.bf16.msra.mxu0 %v641
    %1516 = vmatprep.subr.bf16.mxu0 %v638
    %1517 = vmatpush1.bf16.msra.mxu0 %v637
    %1518 = vmatprep.subr.bf16.mxu0 %v634
    %1519 = vmatpush1.bf16.msra.mxu0 %v633
    %1520 = vmatprep.subr.bf16.mxu0 %v630
    %1521 = vmatpush1.bf16.msra.mxu0 %v629
    %1522 = vmatprep.subr.bf16.mxu0 %v626
    %1523 = vmatpush1.bf16.msra.mxu0 %v625
    %1524 = vmatprep.subr.bf16.mxu0 0
    %1525 = vmatpush2.bf16.msra.mxu0 0
    %1526 = vmatprep.subr.bf16.mxu0 0
    %1527 = vmatpush2.bf16.msra.mxu0 0
    %1528 = vmatprep.subr.bf16.mxu0 0
    %1529 = vmatpush2.bf16.msra.mxu0 0
    %1530 = vmatprep.subr.bf16.mxu0 0
    %1531 = vmatpush2.bf16.msra.mxu0 0
    %1532 = vmatprep.subr.bf16.mxu0 0
    %1533 = vmatpush2.bf16.msra.mxu0 0
    %1534 = vmatprep.subr.bf16.mxu0 0
    %1535 = vmatpush2.bf16.msra.mxu0 0
    %1536 = vmatprep.subr.bf16.mxu0 0
    %1537 = vmatpush2.bf16.msra.mxu0 0
    %1538 = vmatprep.subr.bf16.mxu0 0
    %1539 = vmatpush2.bf16.msra.mxu0 0
    %1540 = vmatprep.mubr.bf16.mxu0 0
    %1541 = vmatmul.mubr.bf16.gmra.mxu0 %v1486
    %v1542 = vpop.f32.mrf.mxu0
    %v1543 = vadd.f32 0.0, %v1542
    %v1544 = vpop.f32.mrf.mxu0
    %v1545 = vadd.f32 0.0, %v1544
    %v1546 = vpop.f32.mrf.mxu0
    %v1547 = vadd.f32 0.0, %v1546
    %v1548 = vpop.f32.mrf.mxu0
    %v1549 = vadd.f32 0.0, %v1548
    %1550 = vdwg.mxu0
    %1551 = vmatprep.subr.bf16.mxu0 %v656
    %1552 = vmatpush1.bf16.msra.mxu0 %v655
    %1553 = vmatprep.subr.bf16.mxu0 %v652
    %1554 = vmatpush1.bf16.msra.mxu0 %v651
    %1555 = vmatprep.subr.bf16.mxu0 %v648
    %1556 = vmatpush1.bf16.msra.mxu0 %v647
    %1557 = vmatprep.subr.bf16.mxu0 %v644
    %1558 = vmatpush1.bf16.msra.mxu0 %v643
    %1559 = vmatprep.subr.bf16.mxu0 %v640
    %1560 = vmatpush1.bf16.msra.mxu0 %v639
    %1561 = vmatprep.subr.bf16.mxu0 %v636
    %1562 = vmatpush1.bf16.msra.mxu0 %v635
    %1563 = vmatprep.subr.bf16.mxu0 %v632
    %1564 = vmatpush1.bf16.msra.mxu0 %v631
    %1565 = vmatprep.subr.bf16.mxu0 %v628
    %1566 = vmatpush1.bf16.msra.mxu0 %v627
    %1567 = vmatprep.subr.bf16.mxu0 0
    %1568 = vmatpush2.bf16.msra.mxu0 0
    %1569 = vmatprep.subr.bf16.mxu0 0
    %1570 = vmatpush2.bf16.msra.mxu0 0
    %1571 = vmatprep.subr.bf16.mxu0 0
    %1572 = vmatpush2.bf16.msra.mxu0 0
    %1573 = vmatprep.subr.bf16.mxu0 0
    %1574 = vmatpush2.bf16.msra.mxu0 0
    %1575 = vmatprep.subr.bf16.mxu0 0
    %1576 = vmatpush2.bf16.msra.mxu0 0
    %1577 = vmatprep.subr.bf16.mxu0 0
    %1578 = vmatpush2.bf16.msra.mxu0 0
    %1579 = vmatprep.subr.bf16.mxu0 0
    %1580 = vmatpush2.bf16.msra.mxu0 0
    %1581 = vmatprep.subr.bf16.mxu0 0
    %1582 = vmatpush2.bf16.msra.mxu0 0
    %1583 = vmatprep.mubr.bf16.mxu0 0
    %1584 = vmatmul.mubr.bf16.gmra.mxu0 %v1486
    %v1585 = vpop.f32.mrf.mxu0
    %v1586 = vadd.f32 0.0, %v1585
    %v1587 = vpop.f32.mrf.mxu0
    %v1588 = vadd.f32 0.0, %v1587
    %v1589 = vpop.f32.mrf.mxu0
    %v1590 = vadd.f32 0.0, %v1589
    %v1591 = vpop.f32.mrf.mxu0
    %v1592 = vadd.f32 0.0, %v1591
    %1593 = vdwg.mxu0
    %v1594 = vadd.f32 %v1500, %v1543
    %v1595 = vadd.f32 %v1501, %v1545
    %v1596 = vadd.f32 %v1502, %v1586
    %v1597 = vadd.f32 %v1503, %v1588
    %v1598 = vadd.f32 %v1504, %v1547
    %v1599 = vadd.f32 %v1505, %v1549
    %v1600 = vadd.f32 %v1506, %v1590
    %v1601 = vadd.f32 %v1507, %v1592
    %v1602 = vxor.u32 %v1594, 2147483648
    %v1603 = vxor.u32 %v1598, 2147483648
    %v1604 = vmul.f32 %v1602, 1.442695
    %v1605 = vpow.pop %v1604
    %v1606 = vmul.f32 %v1603, 1.442695
    %v1607 = vpow.pop %v1606
    %v1608 = vadd.f32 %v1605, 1.0
    %v1609 = vadd.f32 %v1607, 1.0
    %v1610 = vrcp.pop %v1608
    %v1611 = vmul.f32 1.0, %v1610
    %v1612 = vrcp.pop %v1609
    %v1613 = vmul.f32 1.0, %v1612
    %v1614 = vxor.u32 %v1595, 2147483648
    %v1615 = vxor.u32 %v1599, 2147483648
    %v1616 = vmul.f32 %v1614, 1.442695
    %v1617 = vpow.pop %v1616
    %v1618 = vmul.f32 %v1615, 1.442695
    %v1619 = vpow.pop %v1618
    %v1620 = vadd.f32 %v1617, 1.0
    %v1621 = vadd.f32 %v1619, 1.0
    %v1622 = vrcp.pop %v1620
    %v1623 = vmul.f32 1.0, %v1622
    %v1624 = vrcp.pop %v1621
    %v1625 = vmul.f32 1.0, %v1624
    %v1626 = vtanh.pop %v1596
    %v1627 = vtanh.pop %v1600
    %v1628 = vxor.u32 %v1597, 2147483648
    %v1629 = vxor.u32 %v1601, 2147483648
    %v1630 = vmul.f32 %v1628, 1.442695
    %v1631 = vpow.pop %v1630
    %v1632 = vmul.f32 %v1629, 1.442695
    %v1633 = vpow.pop %v1632
    %v1634 = vadd.f32 %v1631, 1.0
    %v1635 = vadd.f32 %v1633, 1.0
    %v1636 = vrcp.pop %v1634
    %v1637 = vmul.f32 1.0, %v1636
    %v1638 = vrcp.pop %v1635
    %v1639 = vmul.f32 1.0, %v1638
    %v1640 = vmul.f32 %v1623, %v1480
    %v1641 = vmul.f32 %v1625, %v1481
    %v1642 = vmul.f32 %v1611, %v1626
    %v1643 = vmul.f32 %v1613, %v1627
    %v1644 = vadd.f32 %v1640, %v1642
    %v1645 = vadd.f32 %v1641, %v1643
    %v1646 = vtanh.pop %v1644
    %v1647 = vtanh.pop %v1645
    %v1648 = vmul.f32 %v1637, %v1646
    %v1649 = vmul.f32 %v1639, %v1647
    %v1650 = vpack.c.bf16 %v1649, %v1648
    %v1652 = vunpack.c.l.b16 %v1650
    %v1653 = vunpack.c.h.b16 %v1650
    %v1654 = vpack.c.b16 %v1652, %v1652
    %v1655 = vpack.c.b16 %v1653, %v1653
    %s1658 = scalar_lea.vmem [#allocation9], 40
    %1659 = vst [vmem:[%s1658] sm:$0xf] %v1654
    %1660 = vst [vmem:[%s1658 + $0x4] sm:$0xf] %v1655
    %s1661 = smul.u32 12, 4
    %s1662 = smul.addr %s1661, 8
    %s1663 = scalar_lea.vmem [#allocation2], %s1662
    %v1664 = vld [vmem:[%s1663] sm:$0xff]
    %v1665 = vld [vmem:[%s1663 + $0x8] sm:$0xff]
    %v1666 = vld [vmem:[%s1663 + $0x10] sm:$0xff]
    %v1667 = vld [vmem:[%s1663 + $0x18] sm:$0xff]
    %v1668 = vld [vmem:[%s1663 + $0x20] sm:$0xff]
    %v1669 = vld [vmem:[%s1663 + $0x28] sm:$0xff]
    %v1670 = vld [vmem:[%s1663 + $0x30] sm:$0xff]
    %v1671 = vld [vmem:[%s1663 + $0x38] sm:$0xff]
    %1672 = vmatprep.subr.bf16.mxu0 %v654
    %1673 = vmatpush1.bf16.msra.mxu0 %v653
    %1674 = vmatprep.subr.bf16.mxu0 %v650
    %1675 = vmatpush1.bf16.msra.mxu0 %v649
    %1676 = vmatprep.subr.bf16.mxu0 %v646
    %1677 = vmatpush1.bf16.msra.mxu0 %v645
    %1678 = vmatprep.subr.bf16.mxu0 %v642
    %1679 = vmatpush1.bf16.msra.mxu0 %v641
    %1680 = vmatprep.subr.bf16.mxu0 %v638
    %1681 = vmatpush1.bf16.msra.mxu0 %v637
    %1682 = vmatprep.subr.bf16.mxu0 %v634
    %1683 = vmatpush1.bf16.msra.mxu0 %v633
    %1684 = vmatprep.subr.bf16.mxu0 %v630
    %1685 = vmatpush1.bf16.msra.mxu0 %v629
    %1686 = vmatprep.subr.bf16.mxu0 %v626
    %1687 = vmatpush1.bf16.msra.mxu0 %v625
    %1688 = vmatprep.subr.bf16.mxu0 0
    %1689 = vmatpush2.bf16.msra.mxu0 0
    %1690 = vmatprep.subr.bf16.mxu0 0
    %1691 = vmatpush2.bf16.msra.mxu0 0
    %1692 = vmatprep.subr.bf16.mxu0 0
    %1693 = vmatpush2.bf16.msra.mxu0 0
    %1694 = vmatprep.subr.bf16.mxu0 0
    %1695 = vmatpush2.bf16.msra.mxu0 0
    %1696 = vmatprep.subr.bf16.mxu0 0
    %1697 = vmatpush2.bf16.msra.mxu0 0
    %1698 = vmatprep.subr.bf16.mxu0 0
    %1699 = vmatpush2.bf16.msra.mxu0 0
    %1700 = vmatprep.subr.bf16.mxu0 0
    %1701 = vmatpush2.bf16.msra.mxu0 0
    %1702 = vmatprep.subr.bf16.mxu0 0
    %1703 = vmatpush2.bf16.msra.mxu0 0
    %1704 = vmatprep.mubr.bf16.mxu0 0
    %1705 = vmatmul.mubr.bf16.gmra.mxu0 %v1650
    %v1706 = vpop.f32.mrf.mxu0
    %v1707 = vadd.f32 0.0, %v1706
    %v1708 = vpop.f32.mrf.mxu0
    %v1709 = vadd.f32 0.0, %v1708
    %v1710 = vpop.f32.mrf.mxu0
    %v1711 = vadd.f32 0.0, %v1710
    %v1712 = vpop.f32.mrf.mxu0
    %v1713 = vadd.f32 0.0, %v1712
    %1714 = vdwg.mxu0
    %1715 = vmatprep.subr.bf16.mxu0 %v656
    %1716 = vmatpush1.bf16.msra.mxu0 %v655
    %1717 = vmatprep.subr.bf16.mxu0 %v652
    %1718 = vmatpush1.bf16.msra.mxu0 %v651
    %1719 = vmatprep.subr.bf16.mxu0 %v648
    %1720 = vmatpush1.bf16.msra.mxu0 %v647
    %1721 = vmatprep.subr.bf16.mxu0 %v644
    %1722 = vmatpush1.bf16.msra.mxu0 %v643
    %1723 = vmatprep.subr.bf16.mxu0 %v640
    %1724 = vmatpush1.bf16.msra.mxu0 %v639
    %1725 = vmatprep.subr.bf16.mxu0 %v636
    %1726 = vmatpush1.bf16.msra.mxu0 %v635
    %1727 = vmatprep.subr.bf16.mxu0 %v632
    %1728 = vmatpush1.bf16.msra.mxu0 %v631
    %1729 = vmatprep.subr.bf16.mxu0 %v628
    %1730 = vmatpush1.bf16.msra.mxu0 %v627
    %1731 = vmatprep.subr.bf16.mxu0 0
    %1732 = vmatpush2.bf16.msra.mxu0 0
    %1733 = vmatprep.subr.bf16.mxu0 0
    %1734 = vmatpush2.bf16.msra.mxu0 0
    %1735 = vmatprep.subr.bf16.mxu0 0
    %1736 = vmatpush2.bf16.msra.mxu0 0
    %1737 = vmatprep.subr.bf16.mxu0 0
    %1738 = vmatpush2.bf16.msra.mxu0 0
    %1739 = vmatprep.subr.bf16.mxu0 0
    %1740 = vmatpush2.bf16.msra.mxu0 0
    %1741 = vmatprep.subr.bf16.mxu0 0
    %1742 = vmatpush2.bf16.msra.mxu0 0
    %1743 = vmatprep.subr.bf16.mxu0 0
    %1744 = vmatpush2.bf16.msra.mxu0 0
    %1745 = vmatprep.subr.bf16.mxu0 0
    %1746 = vmatpush2.bf16.msra.mxu0 0
    %1747 = vmatprep.mubr.bf16.mxu0 0
    %1748 = vmatmul.mubr.bf16.gmra.mxu0 %v1650
    %v1749 = vpop.f32.mrf.mxu0
    %v1750 = vadd.f32 0.0, %v1749
    %v1751 = vpop.f32.mrf.mxu0
    %v1752 = vadd.f32 0.0, %v1751
    %v1753 = vpop.f32.mrf.mxu0
    %v1754 = vadd.f32 0.0, %v1753
    %v1755 = vpop.f32.mrf.mxu0
    %v1756 = vadd.f32 0.0, %v1755
    %1757 = vdwg.mxu0
    %v1758 = vadd.f32 %v1664, %v1707
    %v1759 = vadd.f32 %v1665, %v1709
    %v1760 = vadd.f32 %v1666, %v1750
    %v1761 = vadd.f32 %v1667, %v1752
    %v1762 = vadd.f32 %v1668, %v1711
    %v1763 = vadd.f32 %v1669, %v1713
    %v1764 = vadd.f32 %v1670, %v1754
    %v1765 = vadd.f32 %v1671, %v1756
    %v1766 = vxor.u32 %v1758, 2147483648
    %v1767 = vxor.u32 %v1762, 2147483648
    %v1768 = vmul.f32 %v1766, 1.442695
    %v1769 = vpow.pop %v1768
    %v1770 = vmul.f32 %v1767, 1.442695
    %v1771 = vpow.pop %v1770
    %v1772 = vadd.f32 %v1769, 1.0
    %v1773 = vadd.f32 %v1771, 1.0
    %v1774 = vrcp.pop %v1772
    %v1775 = vmul.f32 1.0, %v1774
    %v1776 = vrcp.pop %v1773
    %v1777 = vmul.f32 1.0, %v1776
    %v1778 = vxor.u32 %v1759, 2147483648
    %v1779 = vxor.u32 %v1763, 2147483648
    %v1780 = vmul.f32 %v1778, 1.442695
    %v1781 = vpow.pop %v1780
    %v1782 = vmul.f32 %v1779, 1.442695
    %v1783 = vpow.pop %v1782
    %v1784 = vadd.f32 %v1781, 1.0
    %v1785 = vadd.f32 %v1783, 1.0
    %v1786 = vrcp.pop %v1784
    %v1787 = vmul.f32 1.0, %v1786
    %v1788 = vrcp.pop %v1785
    %v1789 = vmul.f32 1.0, %v1788
    %v1790 = vtanh.pop %v1760
    %v1791 = vtanh.pop %v1764
    %v1792 = vxor.u32 %v1761, 2147483648
    %v1793 = vxor.u32 %v1765, 2147483648
    %v1794 = vmul.f32 %v1792, 1.442695
    %v1795 = vpow.pop %v1794
    %v1796 = vmul.f32 %v1793, 1.442695
    %v1797 = vpow.pop %v1796
    %v1798 = vadd.f32 %v1795, 1.0
    %v1799 = vadd.f32 %v1797, 1.0
    %v1800 = vrcp.pop %v1798
    %v1801 = vmul.f32 1.0, %v1800
    %v1802 = vrcp.pop %v1799
    %v1803 = vmul.f32 1.0, %v1802
    %v1804 = vmul.f32 %v1787, %v1644
    %v1805 = vmul.f32 %v1789, %v1645
    %v1806 = vmul.f32 %v1775, %v1790
    %v1807 = vmul.f32 %v1777, %v1791
    %v1808 = vadd.f32 %v1804, %v1806
    %v1809 = vadd.f32 %v1805, %v1807
    %v1810 = vtanh.pop %v1808
    %v1811 = vtanh.pop %v1809
    %v1812 = vmul.f32 %v1801, %v1810
    %v1813 = vmul.f32 %v1803, %v1811
    %v1814 = vpack.c.bf16 %v1813, %v1812
    %v1816 = vunpack.c.l.b16 %v1814
    %v1817 = vunpack.c.h.b16 %v1814
    %v1818 = vpack.c.b16 %v1816, %v1816
    %v1819 = vpack.c.b16 %v1817, %v1817
    %s1822 = scalar_lea.vmem [#allocation9], 48
    %1823 = vst [vmem:[%s1822] sm:$0xf] %v1818
    %1824 = vst [vmem:[%s1822 + $0x4] sm:$0xf] %v1819
    %s1825 = smul.u32 14, 4
    %s1826 = smul.addr %s1825, 8
    %s1827 = scalar_lea.vmem [#allocation2], %s1826
    %v1828 = vld [vmem:[%s1827] sm:$0xff]
    %v1829 = vld [vmem:[%s1827 + $0x8] sm:$0xff]
    %v1830 = vld [vmem:[%s1827 + $0x10] sm:$0xff]
    %v1831 = vld [vmem:[%s1827 + $0x18] sm:$0xff]
    %v1832 = vld [vmem:[%s1827 + $0x20] sm:$0xff]
    %v1833 = vld [vmem:[%s1827 + $0x28] sm:$0xff]
    %v1834 = vld [vmem:[%s1827 + $0x30] sm:$0xff]
    %v1835 = vld [vmem:[%s1827 + $0x38] sm:$0xff]
    %1836 = vmatprep.subr.bf16.mxu0 %v654
    %1837 = vmatpush1.bf16.msra.mxu0 %v653
    %1838 = vmatprep.subr.bf16.mxu0 %v650
    %1839 = vmatpush1.bf16.msra.mxu0 %v649
    %1840 = vmatprep.subr.bf16.mxu0 %v646
    %1841 = vmatpush1.bf16.msra.mxu0 %v645
    %1842 = vmatprep.subr.bf16.mxu0 %v642
    %1843 = vmatpush1.bf16.msra.mxu0 %v641
    %1844 = vmatprep.subr.bf16.mxu0 %v638
    %1845 = vmatpush1.bf16.msra.mxu0 %v637
    %1846 = vmatprep.subr.bf16.mxu0 %v634
    %1847 = vmatpush1.bf16.msra.mxu0 %v633
    %1848 = vmatprep.subr.bf16.mxu0 %v630
    %1849 = vmatpush1.bf16.msra.mxu0 %v629
    %1850 = vmatprep.subr.bf16.mxu0 %v626
    %1851 = vmatpush1.bf16.msra.mxu0 %v625
    %1852 = vmatprep.subr.bf16.mxu0 0
    %1853 = vmatpush2.bf16.msra.mxu0 0
    %1854 = vmatprep.subr.bf16.mxu0 0
    %1855 = vmatpush2.bf16.msra.mxu0 0
    %1856 = vmatprep.subr.bf16.mxu0 0
    %1857 = vmatpush2.bf16.msra.mxu0 0
    %1858 = vmatprep.subr.bf16.mxu0 0
    %1859 = vmatpush2.bf16.msra.mxu0 0
    %1860 = vmatprep.subr.bf16.mxu0 0
    %1861 = vmatpush2.bf16.msra.mxu0 0
    %1862 = vmatprep.subr.bf16.mxu0 0
    %1863 = vmatpush2.bf16.msra.mxu0 0
    %1864 = vmatprep.subr.bf16.mxu0 0
    %1865 = vmatpush2.bf16.msra.mxu0 0
    %1866 = vmatprep.subr.bf16.mxu0 0
    %1867 = vmatpush2.bf16.msra.mxu0 0
    %1868 = vmatprep.mubr.bf16.mxu0 0
    %1869 = vmatmul.mubr.bf16.gmra.mxu0 %v1814
    %v1870 = vpop.f32.mrf.mxu0
    %v1871 = vadd.f32 0.0, %v1870
    %v1872 = vpop.f32.mrf.mxu0
    %v1873 = vadd.f32 0.0, %v1872
    %v1874 = vpop.f32.mrf.mxu0
    %v1875 = vadd.f32 0.0, %v1874
    %v1876 = vpop.f32.mrf.mxu0
    %v1877 = vadd.f32 0.0, %v1876
    %1878 = vdwg.mxu0
    %1879 = vmatprep.subr.bf16.mxu0 %v656
    %1880 = vmatpush1.bf16.msra.mxu0 %v655
    %1881 = vmatprep.subr.bf16.mxu0 %v652
    %1882 = vmatpush1.bf16.msra.mxu0 %v651
    %1883 = vmatprep.subr.bf16.mxu0 %v648
    %1884 = vmatpush1.bf16.msra.mxu0 %v647
    %1885 = vmatprep.subr.bf16.mxu0 %v644
    %1886 = vmatpush1.bf16.msra.mxu0 %v643
    %1887 = vmatprep.subr.bf16.mxu0 %v640
    %1888 = vmatpush1.bf16.msra.mxu0 %v639
    %1889 = vmatprep.subr.bf16.mxu0 %v636
    %1890 = vmatpush1.bf16.msra.mxu0 %v635
    %1891 = vmatprep.subr.bf16.mxu0 %v632
    %1892 = vmatpush1.bf16.msra.mxu0 %v631
    %1893 = vmatprep.subr.bf16.mxu0 %v628
    %1894 = vmatpush1.bf16.msra.mxu0 %v627
    %1895 = vmatprep.subr.bf16.mxu0 0
    %1896 = vmatpush2.bf16.msra.mxu0 0
    %1897 = vmatprep.subr.bf16.mxu0 0
    %1898 = vmatpush2.bf16.msra.mxu0 0
    %1899 = vmatprep.subr.bf16.mxu0 0
    %1900 = vmatpush2.bf16.msra.mxu0 0
    %1901 = vmatprep.subr.bf16.mxu0 0
    %1902 = vmatpush2.bf16.msra.mxu0 0
    %1903 = vmatprep.subr.bf16.mxu0 0
    %1904 = vmatpush2.bf16.msra.mxu0 0
    %1905 = vmatprep.subr.bf16.mxu0 0
    %1906 = vmatpush2.bf16.msra.mxu0 0
    %1907 = vmatprep.subr.bf16.mxu0 0
    %1908 = vmatpush2.bf16.msra.mxu0 0
    %1909 = vmatprep.subr.bf16.mxu0 0
    %1910 = vmatpush2.bf16.msra.mxu0 0
    %1911 = vmatprep.mubr.bf16.mxu0 0
    %1912 = vmatmul.mubr.bf16.gmra.mxu0 %v1814
    %v1913 = vpop.f32.mrf.mxu0
    %v1914 = vadd.f32 0.0, %v1913
    %v1915 = vpop.f32.mrf.mxu0
    %v1916 = vadd.f32 0.0, %v1915
    %v1917 = vpop.f32.mrf.mxu0
    %v1918 = vadd.f32 0.0, %v1917
    %v1919 = vpop.f32.mrf.mxu0
    %v1920 = vadd.f32 0.0, %v1919
    %1921 = vdwg.mxu0
    %v1922 = vadd.f32 %v1828, %v1871
    %v1923 = vadd.f32 %v1829, %v1873
    %v1924 = vadd.f32 %v1830, %v1914
    %v1925 = vadd.f32 %v1831, %v1916
    %v1926 = vadd.f32 %v1832, %v1875
    %v1927 = vadd.f32 %v1833, %v1877
    %v1928 = vadd.f32 %v1834, %v1918
    %v1929 = vadd.f32 %v1835, %v1920
    %v1930 = vxor.u32 %v1922, 2147483648
    %v1931 = vxor.u32 %v1926, 2147483648
    %v1932 = vmul.f32 %v1930, 1.442695
    %v1933 = vpow.pop %v1932
    %v1934 = vmul.f32 %v1931, 1.442695
    %v1935 = vpow.pop %v1934
    %v1936 = vadd.f32 %v1933, 1.0
    %v1937 = vadd.f32 %v1935, 1.0
    %v1938 = vrcp.pop %v1936
    %v1939 = vmul.f32 1.0, %v1938
    %v1940 = vrcp.pop %v1937
    %v1941 = vmul.f32 1.0, %v1940
    %v1942 = vxor.u32 %v1923, 2147483648
    %v1943 = vxor.u32 %v1927, 2147483648
    %v1944 = vmul.f32 %v1942, 1.442695
    %v1945 = vpow.pop %v1944
    %v1946 = vmul.f32 %v1943, 1.442695
    %v1947 = vpow.pop %v1946
    %v1948 = vadd.f32 %v1945, 1.0
    %v1949 = vadd.f32 %v1947, 1.0
    %v1950 = vrcp.pop %v1948
    %v1951 = vmul.f32 1.0, %v1950
    %v1952 = vrcp.pop %v1949
    %v1953 = vmul.f32 1.0, %v1952
    %v1954 = vtanh.pop %v1924
    %v1955 = vtanh.pop %v1928
    %v1956 = vxor.u32 %v1925, 2147483648
    %v1957 = vxor.u32 %v1929, 2147483648
    %v1958 = vmul.f32 %v1956, 1.442695
    %v1959 = vpow.pop %v1958
    %v1960 = vmul.f32 %v1957, 1.442695
    %v1961 = vpow.pop %v1960
    %v1962 = vadd.f32 %v1959, 1.0
    %v1963 = vadd.f32 %v1961, 1.0
    %v1964 = vrcp.pop %v1962
    %v1965 = vmul.f32 1.0, %v1964
    %v1966 = vrcp.pop %v1963
    %v1967 = vmul.f32 1.0, %v1966
    %v1968 = vmul.f32 %v1951, %v1808
    %v1969 = vmul.f32 %v1953, %v1809
    %v1970 = vmul.f32 %v1939, %v1954
    %v1971 = vmul.f32 %v1941, %v1955
    %v1972 = vadd.f32 %v1968, %v1970
    %v1973 = vadd.f32 %v1969, %v1971
    %v1974 = vtanh.pop %v1972
    %v1975 = vtanh.pop %v1973
    %v1976 = vmul.f32 %v1965, %v1974
    %v1977 = vmul.f32 %v1967, %v1975
    %v1978 = vpack.c.bf16 %v1977, %v1976
    %v1980 = vunpack.c.l.b16 %v1978
    %v1981 = vunpack.c.h.b16 %v1978
    %v1982 = vpack.c.b16 %v1980, %v1980
    %v1983 = vpack.c.b16 %v1981, %v1981
    %s1986 = scalar_lea.vmem [#allocation9], 56
    %1987 = vst [vmem:[%s1986] sm:$0xf] %v1982
    %1988 = vst [vmem:[%s1986 + $0x4] sm:$0xf] %v1983
    %v1989 = vld [vmem:[#allocation9] sm:$0xf]
    %v1990 = vld [vmem:[#allocation9 + $0x4] sm:$0xf]
    %v1991 = vld [vmem:[#allocation9 + $0x8] sm:$0xf]
    %v1992 = vld [vmem:[#allocation9 + $0xc] sm:$0xf]
    %v1993 = vld [vmem:[#allocation9 + $0x10] sm:$0xf]
    %v1994 = vld [vmem:[#allocation9 + $0x14] sm:$0xf]
    %v1995 = vld [vmem:[#allocation9 + $0x18] sm:$0xf]
    %v1996 = vld [vmem:[#allocation9 + $0x1c] sm:$0xf]
    %v1997 = vld [vmem:[#allocation9 + $0x20] sm:$0xf]
    %v1998 = vld [vmem:[#allocation9 + $0x24] sm:$0xf]
    %v1999 = vld [vmem:[#allocation9 + $0x28] sm:$0xf]
    %v2000 = vld [vmem:[#allocation9 + $0x2c] sm:$0xf]
    %v2001 = vld [vmem:[#allocation9 + $0x30] sm:$0xf]
    %v2002 = vld [vmem:[#allocation9 + $0x34] sm:$0xf]
    %v2003 = vld [vmem:[#allocation9 + $0x38] sm:$0xf]
    %v2004 = vld [vmem:[#allocation9 + $0x3c] sm:$0xf]
    %v2005 = vld [vmem:[#allocation6] sm:$0xff]
    %v2006 = vld [vmem:[#allocation6 + $0x8] sm:$0xff]
    %v2007 = vld [vmem:[#allocation6 + $0x10] sm:$0xff]
    %v2008 = vld [vmem:[#allocation6 + $0x18] sm:$0xff]
    %v2009 = vld [vmem:[#allocation6 + $0x20] sm:$0xff]
    %v2010 = vld [vmem:[#allocation6 + $0x28] sm:$0xff]
    %v2011 = vld [vmem:[#allocation6 + $0x30] sm:$0xff]
    %v2012 = vld [vmem:[#allocation6 + $0x38] sm:$0xff]
    %v2013 = vld [vmem:[#allocation6 + $0x40] sm:$0xff]
    %v2014 = vld [vmem:[#allocation6 + $0x48] sm:$0xff]
    %v2015 = vld [vmem:[#allocation6 + $0x50] sm:$0xff]
    %v2016 = vld [vmem:[#allocation6 + $0x58] sm:$0xff]
    %v2017 = vld [vmem:[#allocation6 + $0x60] sm:$0xff]
    %v2018 = vld [vmem:[#allocation6 + $0x68] sm:$0xff]
    %v2019 = vld [vmem:[#allocation6 + $0x70] sm:$0xff]
    %v2020 = vld [vmem:[#allocation6 + $0x78] sm:$0xff]
    %v2021 = vld [vmem:[#allocation6 + $0x80] sm:$0xff]
    %v2022 = vld [vmem:[#allocation6 + $0x88] sm:$0xff]
    %v2023 = vld [vmem:[#allocation6 + $0x90] sm:$0xff]
    %v2024 = vld [vmem:[#allocation6 + $0x98] sm:$0xff]
    %v2025 = vld [vmem:[#allocation6 + $0xa0] sm:$0xff]
    %v2026 = vld [vmem:[#allocation6 + $0xa8] sm:$0xff]
    %v2027 = vld [vmem:[#allocation6 + $0xb0] sm:$0xff]
    %v2028 = vld [vmem:[#allocation6 + $0xb8] sm:$0xff]
    %v2029 = vld [vmem:[#allocation6 + $0xc0] sm:$0xff]
    %v2030 = vld [vmem:[#allocation6 + $0xc8] sm:$0xff]
    %v2031 = vld [vmem:[#allocation6 + $0xd0] sm:$0xff]
    %v2032 = vld [vmem:[#allocation6 + $0xd8] sm:$0xff]
    %v2033 = vld [vmem:[#allocation6 + $0xe0] sm:$0xff]
    %v2034 = vld [vmem:[#allocation6 + $0xe8] sm:$0xff]
    %v2035 = vld [vmem:[#allocation6 + $0xf0] sm:$0xff]
    %v2036 = vld [vmem:[#allocation6 + $0xf8] sm:$0xff]
    %v2037 = vld [vmem:[%s6] sm:$0xf]
    %v2039 = vlaneseq
    %v2040 = vshrl.u32 %v2039, 7
    %v2041 = vsub.s32 0, %v2040
    %v2042 = vrot.slane %v2037, %v2041
    %v2043 = vlaneseq
    %v2044 = vshrl.u32 %v2043, 7
    %v2045 = vsub.s32 1, %v2044
    %v2046 = vrot.slane %v2037, %v2045
    %v2047 = vlaneseq
    %v2048 = vshrl.u32 %v2047, 7
    %v2049 = vsub.s32 2, %v2048
    %v2050 = vrot.slane %v2037, %v2049
    %v2051 = vlaneseq
    %v2052 = vshrl.u32 %v2051, 7
    %v2053 = vsub.s32 3, %v2052
    %v2054 = vrot.slane %v2037, %v2053
    %v2075 = vunpack.c.l.b16 %v1989
    %v2076 = vunpack.c.l.b16 %v1990
    %v2077 = vunpack.c.l.b16 %v1991
    %v2078 = vunpack.c.l.b16 %v1992
    %v2079 = vunpack.c.l.b16 %v1993
    %v2080 = vunpack.c.l.b16 %v1994
    %v2081 = vunpack.c.l.b16 %v1995
    %v2082 = vunpack.c.l.b16 %v1996
    %v2083 = vunpack.c.l.b16 %v1997
    %v2084 = vunpack.c.l.b16 %v1998
    %v2085 = vunpack.c.l.b16 %v1999
    %v2086 = vunpack.c.l.b16 %v2000
    %v2087 = vunpack.c.l.b16 %v2001
    %v2088 = vunpack.c.l.b16 %v2002
    %v2089 = vunpack.c.l.b16 %v2003
    %v2090 = vunpack.c.l.b16 %v2004
    %v2091 = vpack.c.b16 %v2076, %v2075
    %v2092 = vpack.c.b16 %v2078, %v2077
    %v2093 = vpack.c.b16 %v2080, %v2079
    %v2094 = vpack.c.b16 %v2082, %v2081
    %v2095 = vpack.c.b16 %v2084, %v2083
    %v2096 = vpack.c.b16 %v2086, %v2085
    %v2097 = vpack.c.b16 %v2088, %v2087
    %v2098 = vpack.c.b16 %v2090, %v2089
    %v2139 = vunpack.c.l.b16 %v2005
    %v2140 = vunpack.c.h.b16 %v2005
    %v2141 = vunpack.c.l.b16 %v2006
    %v2142 = vunpack.c.h.b16 %v2006
    %v2143 = vunpack.c.l.b16 %v2007
    %v2144 = vunpack.c.h.b16 %v2007
    %v2145 = vunpack.c.l.b16 %v2008
    %v2146 = vunpack.c.h.b16 %v2008
    %v2147 = vunpack.c.l.b16 %v2009
    %v2148 = vunpack.c.h.b16 %v2009
    %v2149 = vunpack.c.l.b16 %v2010
    %v2150 = vunpack.c.h.b16 %v2010
    %v2151 = vunpack.c.l.b16 %v2011
    %v2152 = vunpack.c.h.b16 %v2011
    %v2153 = vunpack.c.l.b16 %v2012
    %v2154 = vunpack.c.h.b16 %v2012
    %v2155 = vunpack.c.l.b16 %v2013
    %v2156 = vunpack.c.h.b16 %v2013
    %v2157 = vunpack.c.l.b16 %v2014
    %v2158 = vunpack.c.h.b16 %v2014
    %v2159 = vunpack.c.l.b16 %v2015
    %v2160 = vunpack.c.h.b16 %v2015
    %v2161 = vunpack.c.l.b16 %v2016
    %v2162 = vunpack.c.h.b16 %v2016
    %v2163 = vunpack.c.l.b16 %v2017
    %v2164 = vunpack.c.h.b16 %v2017
    %v2165 = vunpack.c.l.b16 %v2018
    %v2166 = vunpack.c.h.b16 %v2018
    %v2167 = vunpack.c.l.b16 %v2019
    %v2168 = vunpack.c.h.b16 %v2019
    %v2169 = vunpack.c.l.b16 %v2020
    %v2170 = vunpack.c.h.b16 %v2020
    %v2171 = vunpack.c.l.b16 %v2021
    %v2172 = vunpack.c.h.b16 %v2021
    %v2173 = vunpack.c.l.b16 %v2022
    %v2174 = vunpack.c.h.b16 %v2022
    %v2175 = vunpack.c.l.b16 %v2023
    %v2176 = vunpack.c.h.b16 %v2023
    %v2177 = vunpack.c.l.b16 %v2024
    %v2178 = vunpack.c.h.b16 %v2024
    %v2179 = vunpack.c.l.b16 %v2025
    %v2180 = vunpack.c.h.b16 %v2025
    %v2181 = vunpack.c.l.b16 %v2026
    %v2182 = vunpack.c.h.b16 %v2026
    %v2183 = vunpack.c.l.b16 %v2027
    %v2184 = vunpack.c.h.b16 %v2027
    %v2185 = vunpack.c.l.b16 %v2028
    %v2186 = vunpack.c.h.b16 %v2028
    %v2187 = vunpack.c.l.b16 %v2029
    %v2188 = vunpack.c.h.b16 %v2029
    %v2189 = vunpack.c.l.b16 %v2030
    %v2190 = vunpack.c.h.b16 %v2030
    %v2191 = vunpack.c.l.b16 %v2031
    %v2192 = vunpack.c.h.b16 %v2031
    %v2193 = vunpack.c.l.b16 %v2032
    %v2194 = vunpack.c.h.b16 %v2032
    %v2195 = vunpack.c.l.b16 %v2033
    %v2196 = vunpack.c.h.b16 %v2033
    %v2197 = vunpack.c.l.b16 %v2034
    %v2198 = vunpack.c.h.b16 %v2034
    %v2199 = vunpack.c.l.b16 %v2035
    %v2200 = vunpack.c.h.b16 %v2035
    %v2201 = vunpack.c.l.b16 %v2036
    %v2202 = vunpack.c.h.b16 %v2036
    %v2203 = vpack.c.b16 %v2143, %v2139
    %v2204 = vpack.c.b16 %v2144, %v2140
    %v2205 = vpack.c.b16 %v2145, %v2141
    %v2206 = vpack.c.b16 %v2146, %v2142
    %v2207 = vpack.c.b16 %v2151, %v2147
    %v2208 = vpack.c.b16 %v2152, %v2148
    %v2209 = vpack.c.b16 %v2153, %v2149
    %v2210 = vpack.c.b16 %v2154, %v2150
    %v2211 = vpack.c.b16 %v2159, %v2155
    %v2212 = vpack.c.b16 %v2160, %v2156
    %v2213 = vpack.c.b16 %v2161, %v2157
    %v2214 = vpack.c.b16 %v2162, %v2158
    %v2215 = vpack.c.b16 %v2167, %v2163
    %v2216 = vpack.c.b16 %v2168, %v2164
    %v2217 = vpack.c.b16 %v2169, %v2165
    %v2218 = vpack.c.b16 %v2170, %v2166
    %v2219 = vpack.c.b16 %v2175, %v2171
    %v2220 = vpack.c.b16 %v2176, %v2172
    %v2221 = vpack.c.b16 %v2177, %v2173
    %v2222 = vpack.c.b16 %v2178, %v2174
    %v2223 = vpack.c.b16 %v2183, %v2179
    %v2224 = vpack.c.b16 %v2184, %v2180
    %v2225 = vpack.c.b16 %v2185, %v2181
    %v2226 = vpack.c.b16 %v2186, %v2182
    %v2227 = vpack.c.b16 %v2191, %v2187
    %v2228 = vpack.c.b16 %v2192, %v2188
    %v2229 = vpack.c.b16 %v2193, %v2189
    %v2230 = vpack.c.b16 %v2194, %v2190
    %v2231 = vpack.c.b16 %v2199, %v2195
    %v2232 = vpack.c.b16 %v2200, %v2196
    %v2233 = vpack.c.b16 %v2201, %v2197
    %v2234 = vpack.c.b16 %v2202, %v2198
    %2267 = vmatprep.subr.bf16.mxu0 %v2232
    %2268 = vmatpush1.bf16.msra.mxu0 %v2231
    %2269 = vmatprep.subr.bf16.mxu0 %v2228
    %2270 = vmatpush1.bf16.msra.mxu0 %v2227
    %2271 = vmatprep.subr.bf16.mxu0 %v2224
    %2272 = vmatpush1.bf16.msra.mxu0 %v2223
    %2273 = vmatprep.subr.bf16.mxu0 %v2220
    %2274 = vmatpush1.bf16.msra.mxu0 %v2219
    %2275 = vmatprep.subr.bf16.mxu0 %v2216
    %2276 = vmatpush1.bf16.msra.mxu0 %v2215
    %2277 = vmatprep.subr.bf16.mxu0 %v2212
    %2278 = vmatpush1.bf16.msra.mxu0 %v2211
    %2279 = vmatprep.subr.bf16.mxu0 %v2208
    %2280 = vmatpush1.bf16.msra.mxu0 %v2207
    %2281 = vmatprep.subr.bf16.mxu0 %v2204
    %2282 = vmatpush1.bf16.msra.mxu0 %v2203
    %2283 = vmatprep.subr.bf16.mxu0 0
    %2284 = vmatpush2.bf16.msra.mxu0 0
    %2285 = vmatprep.subr.bf16.mxu0 0
    %2286 = vmatpush2.bf16.msra.mxu0 0
    %2287 = vmatprep.subr.bf16.mxu0 0
    %2288 = vmatpush2.bf16.msra.mxu0 0
    %2289 = vmatprep.subr.bf16.mxu0 0
    %2290 = vmatpush2.bf16.msra.mxu0 0
    %2291 = vmatprep.subr.bf16.mxu0 0
    %2292 = vmatpush2.bf16.msra.mxu0 0
    %2293 = vmatprep.subr.bf16.mxu0 0
    %2294 = vmatpush2.bf16.msra.mxu0 0
    %2295 = vmatprep.subr.bf16.mxu0 0
    %2296 = vmatpush2.bf16.msra.mxu0 0
    %2297 = vmatprep.subr.bf16.mxu0 0
    %2298 = vmatpush2.bf16.msra.mxu0 0
    %2299 = vmatprep.mubr.bf16.mxu0 0
    %2300 = vmatmul.mubr.bf16.gmra.mxu0 %v2091
    %v2301 = vpop.f32.mrf.mxu0
    %v2302 = vadd.f32 %v2042, %v2301
    %v2303 = vpop.f32.mrf.mxu0
    %v2304 = vadd.f32 %v2046, %v2303
    %v2305 = vpop.f32.mrf.mxu0
    %v2306 = vadd.f32 %v2042, %v2305
    %v2307 = vpop.f32.mrf.mxu0
    %v2308 = vadd.f32 %v2046, %v2307
    %2309 = vmatprep.mubr.bf16.mxu0 0
    %2310 = vmatmul.mubr.bf16.gmra.mxu0 %v2092
    %v2311 = vpop.f32.mrf.mxu0
    %v2312 = vadd.f32 %v2042, %v2311
    %v2313 = vpop.f32.mrf.mxu0
    %v2314 = vadd.f32 %v2046, %v2313
    %v2315 = vpop.f32.mrf.mxu0
    %v2316 = vadd.f32 %v2042, %v2315
    %v2317 = vpop.f32.mrf.mxu0
    %v2318 = vadd.f32 %v2046, %v2317
    %2319 = vmatprep.mubr.bf16.mxu0 0
    %2320 = vmatmul.mubr.bf16.gmra.mxu0 %v2093
    %v2321 = vpop.f32.mrf.mxu0
    %v2322 = vadd.f32 %v2042, %v2321
    %v2323 = vpop.f32.mrf.mxu0
    %v2324 = vadd.f32 %v2046, %v2323
    %v2325 = vpop.f32.mrf.mxu0
    %v2326 = vadd.f32 %v2042, %v2325
    %v2327 = vpop.f32.mrf.mxu0
    %v2328 = vadd.f32 %v2046, %v2327
    %2329 = vmatprep.mubr.bf16.mxu0 0
    %2330 = vmatmul.mubr.bf16.gmra.mxu0 %v2094
    %v2331 = vpop.f32.mrf.mxu0
    %v2332 = vadd.f32 %v2042, %v2331
    %v2333 = vpop.f32.mrf.mxu0
    %v2334 = vadd.f32 %v2046, %v2333
    %v2335 = vpop.f32.mrf.mxu0
    %v2336 = vadd.f32 %v2042, %v2335
    %v2337 = vpop.f32.mrf.mxu0
    %v2338 = vadd.f32 %v2046, %v2337
    %2339 = vmatprep.mubr.bf16.mxu0 0
    %2340 = vmatmul.mubr.bf16.gmra.mxu0 %v2095
    %v2341 = vpop.f32.mrf.mxu0
    %v2342 = vadd.f32 %v2042, %v2341
    %v2343 = vpop.f32.mrf.mxu0
    %v2344 = vadd.f32 %v2046, %v2343
    %v2345 = vpop.f32.mrf.mxu0
    %v2346 = vadd.f32 %v2042, %v2345
    %v2347 = vpop.f32.mrf.mxu0
    %v2348 = vadd.f32 %v2046, %v2347
    %2349 = vmatprep.mubr.bf16.mxu0 0
    %2350 = vmatmul.mubr.bf16.gmra.mxu0 %v2096
    %v2351 = vpop.f32.mrf.mxu0
    %v2352 = vadd.f32 %v2042, %v2351
    %v2353 = vpop.f32.mrf.mxu0
    %v2354 = vadd.f32 %v2046, %v2353
    %v2355 = vpop.f32.mrf.mxu0
    %v2356 = vadd.f32 %v2042, %v2355
    %v2357 = vpop.f32.mrf.mxu0
    %v2358 = vadd.f32 %v2046, %v2357
    %2359 = vmatprep.mubr.bf16.mxu0 0
    %2360 = vmatmul.mubr.bf16.gmra.mxu0 %v2097
    %v2361 = vpop.f32.mrf.mxu0
    %v2362 = vadd.f32 %v2042, %v2361
    %v2363 = vpop.f32.mrf.mxu0
    %v2364 = vadd.f32 %v2046, %v2363
    %v2365 = vpop.f32.mrf.mxu0
    %v2366 = vadd.f32 %v2042, %v2365
    %v2367 = vpop.f32.mrf.mxu0
    %v2368 = vadd.f32 %v2046, %v2367
    %2369 = vmatprep.mubr.bf16.mxu0 0
    %2370 = vmatmul.mubr.bf16.gmra.mxu0 %v2098
    %v2371 = vpop.f32.mrf.mxu0
    %v2372 = vadd.f32 %v2042, %v2371
    %v2373 = vpop.f32.mrf.mxu0
    %v2374 = vadd.f32 %v2046, %v2373
    %v2375 = vpop.f32.mrf.mxu0
    %v2376 = vadd.f32 %v2042, %v2375
    %v2377 = vpop.f32.mrf.mxu0
    %v2378 = vadd.f32 %v2046, %v2377
    %2379 = vdwg.mxu0
    %2380 = vmatprep.subr.bf16.mxu0 %v2234
    %2381 = vmatpush1.bf16.msra.mxu0 %v2233
    %2382 = vmatprep.subr.bf16.mxu0 %v2230
    %2383 = vmatpush1.bf16.msra.mxu0 %v2229
    %2384 = vmatprep.subr.bf16.mxu0 %v2226
    %2385 = vmatpush1.bf16.msra.mxu0 %v2225
    %2386 = vmatprep.subr.bf16.mxu0 %v2222
    %2387 = vmatpush1.bf16.msra.mxu0 %v2221
    %2388 = vmatprep.subr.bf16.mxu0 %v2218
    %2389 = vmatpush1.bf16.msra.mxu0 %v2217
    %2390 = vmatprep.subr.bf16.mxu0 %v2214
    %2391 = vmatpush1.bf16.msra.mxu0 %v2213
    %2392 = vmatprep.subr.bf16.mxu0 %v2210
    %2393 = vmatpush1.bf16.msra.mxu0 %v2209
    %2394 = vmatprep.subr.bf16.mxu0 %v2206
    %2395 = vmatpush1.bf16.msra.mxu0 %v2205
    %2396 = vmatprep.subr.bf16.mxu0 0
    %2397 = vmatpush2.bf16.msra.mxu0 0
    %2398 = vmatprep.subr.bf16.mxu0 0
    %2399 = vmatpush2.bf16.msra.mxu0 0
    %2400 = vmatprep.subr.bf16.mxu0 0
    %2401 = vmatpush2.bf16.msra.mxu0 0
    %2402 = vmatprep.subr.bf16.mxu0 0
    %2403 = vmatpush2.bf16.msra.mxu0 0
    %2404 = vmatprep.subr.bf16.mxu0 0
    %2405 = vmatpush2.bf16.msra.mxu0 0
    %2406 = vmatprep.subr.bf16.mxu0 0
    %2407 = vmatpush2.bf16.msra.mxu0 0
    %2408 = vmatprep.subr.bf16.mxu0 0
    %2409 = vmatpush2.bf16.msra.mxu0 0
    %2410 = vmatprep.subr.bf16.mxu0 0
    %2411 = vmatpush2.bf16.msra.mxu0 0
    %2412 = vmatprep.mubr.bf16.mxu0 0
    %2413 = vmatmul.mubr.bf16.gmra.mxu0 %v2091
    %v2414 = vpop.f32.mrf.mxu0
    %v2415 = vadd.f32 %v2050, %v2414
    %v2416 = vpop.f32.mrf.mxu0
    %v2417 = vadd.f32 %v2054, %v2416
    %v2418 = vpop.f32.mrf.mxu0
    %v2419 = vadd.f32 %v2050, %v2418
    %v2420 = vpop.f32.mrf.mxu0
    %v2421 = vadd.f32 %v2054, %v2420
    %2422 = vmatprep.mubr.bf16.mxu0 0
    %2423 = vmatmul.mubr.bf16.gmra.mxu0 %v2092
    %v2424 = vpop.f32.mrf.mxu0
    %v2425 = vadd.f32 %v2050, %v2424
    %v2426 = vpop.f32.mrf.mxu0
    %v2427 = vadd.f32 %v2054, %v2426
    %v2428 = vpop.f32.mrf.mxu0
    %v2429 = vadd.f32 %v2050, %v2428
    %v2430 = vpop.f32.mrf.mxu0
    %v2431 = vadd.f32 %v2054, %v2430
    %2432 = vmatprep.mubr.bf16.mxu0 0
    %2433 = vmatmul.mubr.bf16.gmra.mxu0 %v2093
    %v2434 = vpop.f32.mrf.mxu0
    %v2435 = vadd.f32 %v2050, %v2434
    %v2436 = vpop.f32.mrf.mxu0
    %v2437 = vadd.f32 %v2054, %v2436
    %v2438 = vpop.f32.mrf.mxu0
    %v2439 = vadd.f32 %v2050, %v2438
    %v2440 = vpop.f32.mrf.mxu0
    %v2441 = vadd.f32 %v2054, %v2440
    %2442 = vmatprep.mubr.bf16.mxu0 0
    %2443 = vmatmul.mubr.bf16.gmra.mxu0 %v2094
    %v2444 = vpop.f32.mrf.mxu0
    %v2445 = vadd.f32 %v2050, %v2444
    %v2446 = vpop.f32.mrf.mxu0
    %v2447 = vadd.f32 %v2054, %v2446
    %v2448 = vpop.f32.mrf.mxu0
    %v2449 = vadd.f32 %v2050, %v2448
    %v2450 = vpop.f32.mrf.mxu0
    %v2451 = vadd.f32 %v2054, %v2450
    %2452 = vmatprep.mubr.bf16.mxu0 0
    %2453 = vmatmul.mubr.bf16.gmra.mxu0 %v2095
    %v2454 = vpop.f32.mrf.mxu0
    %v2455 = vadd.f32 %v2050, %v2454
    %v2456 = vpop.f32.mrf.mxu0
    %v2457 = vadd.f32 %v2054, %v2456
    %v2458 = vpop.f32.mrf.mxu0
    %v2459 = vadd.f32 %v2050, %v2458
    %v2460 = vpop.f32.mrf.mxu0
    %v2461 = vadd.f32 %v2054, %v2460
    %2462 = vmatprep.mubr.bf16.mxu0 0
    %2463 = vmatmul.mubr.bf16.gmra.mxu0 %v2096
    %v2464 = vpop.f32.mrf.mxu0
    %v2465 = vadd.f32 %v2050, %v2464
    %v2466 = vpop.f32.mrf.mxu0
    %v2467 = vadd.f32 %v2054, %v2466
    %v2468 = vpop.f32.mrf.mxu0
    %v2469 = vadd.f32 %v2050, %v2468
    %v2470 = vpop.f32.mrf.mxu0
    %v2471 = vadd.f32 %v2054, %v2470
    %2472 = vmatprep.mubr.bf16.mxu0 0
    %2473 = vmatmul.mubr.bf16.gmra.mxu0 %v2097
    %v2474 = vpop.f32.mrf.mxu0
    %v2475 = vadd.f32 %v2050, %v2474
    %v2476 = vpop.f32.mrf.mxu0
    %v2477 = vadd.f32 %v2054, %v2476
    %v2478 = vpop.f32.mrf.mxu0
    %v2479 = vadd.f32 %v2050, %v2478
    %v2480 = vpop.f32.mrf.mxu0
    %v2481 = vadd.f32 %v2054, %v2480
    %2482 = vmatprep.mubr.bf16.mxu0 0
    %2483 = vmatmul.mubr.bf16.gmra.mxu0 %v2098
    %v2484 = vpop.f32.mrf.mxu0
    %v2485 = vadd.f32 %v2050, %v2484
    %v2486 = vpop.f32.mrf.mxu0
    %v2487 = vadd.f32 %v2054, %v2486
    %v2488 = vpop.f32.mrf.mxu0
    %v2489 = vadd.f32 %v2050, %v2488
    %v2490 = vpop.f32.mrf.mxu0
    %v2491 = vadd.f32 %v2054, %v2490
    %2492 = vdwg.mxu0
    %2493 = vst [vmem:[#allocation2] sm:$0xff] %v2302
    %2494 = vst [vmem:[#allocation2 + $0x8] sm:$0xff] %v2304
    %2495 = vst [vmem:[#allocation2 + $0x10] sm:$0xff] %v2415
    %2496 = vst [vmem:[#allocation2 + $0x18] sm:$0xff] %v2417
    %2497 = vst [vmem:[#allocation2 + $0x20] sm:$0xff] %v2306
    %2498 = vst [vmem:[#allocation2 + $0x28] sm:$0xff] %v2308
    %2499 = vst [vmem:[#allocation2 + $0x30] sm:$0xff] %v2419
    %2500 = vst [vmem:[#allocation2 + $0x38] sm:$0xff] %v2421
    %2501 = vst [vmem:[#allocation2 + $0x40] sm:$0xff] %v2312
    %2502 = vst [vmem:[#allocation2 + $0x48] sm:$0xff] %v2314
    %2503 = vst [vmem:[#allocation2 + $0x50] sm:$0xff] %v2425
    %2504 = vst [vmem:[#allocation2 + $0x58] sm:$0xff] %v2427
    %2505 = vst [vmem:[#allocation2 + $0x60] sm:$0xff] %v2316
    %2506 = vst [vmem:[#allocation2 + $0x68] sm:$0xff] %v2318
    %2507 = vst [vmem:[#allocation2 + $0x70] sm:$0xff] %v2429
    %2508 = vst [vmem:[#allocation2 + $0x78] sm:$0xff] %v2431
    %2509 = vst [vmem:[#allocation2 + $0x80] sm:$0xff] %v2322
    %2510 = vst [vmem:[#allocation2 + $0x88] sm:$0xff] %v2324
    %2511 = vst [vmem:[#allocation2 + $0x90] sm:$0xff] %v2435
    %2512 = vst [vmem:[#allocation2 + $0x98] sm:$0xff] %v2437
    %2513 = vst [vmem:[#allocation2 + $0xa0] sm:$0xff] %v2326
    %2514 = vst [vmem:[#allocation2 + $0xa8] sm:$0xff] %v2328
    %2515 = vst [vmem:[#allocation2 + $0xb0] sm:$0xff] %v2439
    %2516 = vst [vmem:[#allocation2 + $0xb8] sm:$0xff] %v2441
    %2517 = vst [vmem:[#allocation2 + $0xc0] sm:$0xff] %v2332
    %2518 = vst [vmem:[#allocation2 + $0xc8] sm:$0xff] %v2334
    %2519 = vst [vmem:[#allocation2 + $0xd0] sm:$0xff] %v2445
    %2520 = vst [vmem:[#allocation2 + $0xd8] sm:$0xff] %v2447
    %2521 = vst [vmem:[#allocation2 + $0xe0] sm:$0xff] %v2336
    %2522 = vst [vmem:[#allocation2 + $0xe8] sm:$0xff] %v2338
    %2523 = vst [vmem:[#allocation2 + $0xf0] sm:$0xff] %v2449
    %2524 = vst [vmem:[#allocation2 + $0xf8] sm:$0xff] %v2451
    %2525 = vst [vmem:[#allocation2 + $0x100] sm:$0xff] %v2342
    %2526 = vst [vmem:[#allocation2 + $0x108] sm:$0xff] %v2344
    %2527 = vst [vmem:[#allocation2 + $0x110] sm:$0xff] %v2455
    %2528 = vst [vmem:[#allocation2 + $0x118] sm:$0xff] %v2457
    %2529 = vst [vmem:[#allocation2 + $0x120] sm:$0xff] %v2346
    %2530 = vst [vmem:[#allocation2 + $0x128] sm:$0xff] %v2348
    %2531 = vst [vmem:[#allocation2 + $0x130] sm:$0xff] %v2459
    %2532 = vst [vmem:[#allocation2 + $0x138] sm:$0xff] %v2461
    %2533 = vst [vmem:[#allocation2 + $0x140] sm:$0xff] %v2352
    %2534 = vst [vmem:[#allocation2 + $0x148] sm:$0xff] %v2354
    %2535 = vst [vmem:[#allocation2 + $0x150] sm:$0xff] %v2465
    %2536 = vst [vmem:[#allocation2 + $0x158] sm:$0xff] %v2467
    %2537 = vst [vmem:[#allocation2 + $0x160] sm:$0xff] %v2356
    %2538 = vst [vmem:[#allocation2 + $0x168] sm:$0xff] %v2358
    %2539 = vst [vmem:[#allocation2 + $0x170] sm:$0xff] %v2469
    %2540 = vst [vmem:[#allocation2 + $0x178] sm:$0xff] %v2471
    %2541 = vst [vmem:[#allocation2 + $0x180] sm:$0xff] %v2362
    %2542 = vst [vmem:[#allocation2 + $0x188] sm:$0xff] %v2364
    %2543 = vst [vmem:[#allocation2 + $0x190] sm:$0xff] %v2475
    %2544 = vst [vmem:[#allocation2 + $0x198] sm:$0xff] %v2477
    %2545 = vst [vmem:[#allocation2 + $0x1a0] sm:$0xff] %v2366
    %2546 = vst [vmem:[#allocation2 + $0x1a8] sm:$0xff] %v2368
    %2547 = vst [vmem:[#allocation2 + $0x1b0] sm:$0xff] %v2479
    %2548 = vst [vmem:[#allocation2 + $0x1b8] sm:$0xff] %v2481
    %2549 = vst [vmem:[#allocation2 + $0x1c0] sm:$0xff] %v2372
    %2550 = vst [vmem:[#allocation2 + $0x1c8] sm:$0xff] %v2374
    %2551 = vst [vmem:[#allocation2 + $0x1d0] sm:$0xff] %v2485
    %2552 = vst [vmem:[#allocation2 + $0x1d8] sm:$0xff] %v2487
    %2553 = vst [vmem:[#allocation2 + $0x1e0] sm:$0xff] %v2376
    %2554 = vst [vmem:[#allocation2 + $0x1e8] sm:$0xff] %v2378
    %2555 = vst [vmem:[#allocation2 + $0x1f0] sm:$0xff] %v2489
    %2556 = vst [vmem:[#allocation2 + $0x1f8] sm:$0xff] %v2491
    %v2557 = vld [vmem:[#allocation8] sm:$0xff]
    %v2558 = vld [vmem:[#allocation8 + $0x8] sm:$0xff]
    %v2559 = vld [vmem:[#allocation8 + $0x10] sm:$0xff]
    %v2560 = vld [vmem:[#allocation8 + $0x18] sm:$0xff]
    %v2561 = vld [vmem:[#allocation8 + $0x20] sm:$0xff]
    %v2562 = vld [vmem:[#allocation8 + $0x28] sm:$0xff]
    %v2563 = vld [vmem:[#allocation8 + $0x30] sm:$0xff]
    %v2564 = vld [vmem:[#allocation8 + $0x38] sm:$0xff]
    %v2565 = vld [vmem:[#allocation8 + $0x40] sm:$0xff]
    %v2566 = vld [vmem:[#allocation8 + $0x48] sm:$0xff]
    %v2567 = vld [vmem:[#allocation8 + $0x50] sm:$0xff]
    %v2568 = vld [vmem:[#allocation8 + $0x58] sm:$0xff]
    %v2569 = vld [vmem:[#allocation8 + $0x60] sm:$0xff]
    %v2570 = vld [vmem:[#allocation8 + $0x68] sm:$0xff]
    %v2571 = vld [vmem:[#allocation8 + $0x70] sm:$0xff]
    %v2572 = vld [vmem:[#allocation8 + $0x78] sm:$0xff]
    %v2573 = vld [vmem:[#allocation8 + $0x80] sm:$0xff]
    %v2574 = vld [vmem:[#allocation8 + $0x88] sm:$0xff]
    %v2575 = vld [vmem:[#allocation8 + $0x90] sm:$0xff]
    %v2576 = vld [vmem:[#allocation8 + $0x98] sm:$0xff]
    %v2577 = vld [vmem:[#allocation8 + $0xa0] sm:$0xff]
    %v2578 = vld [vmem:[#allocation8 + $0xa8] sm:$0xff]
    %v2579 = vld [vmem:[#allocation8 + $0xb0] sm:$0xff]
    %v2580 = vld [vmem:[#allocation8 + $0xb8] sm:$0xff]
    %v2581 = vld [vmem:[#allocation8 + $0xc0] sm:$0xff]
    %v2582 = vld [vmem:[#allocation8 + $0xc8] sm:$0xff]
    %v2583 = vld [vmem:[#allocation8 + $0xd0] sm:$0xff]
    %v2584 = vld [vmem:[#allocation8 + $0xd8] sm:$0xff]
    %v2585 = vld [vmem:[#allocation8 + $0xe0] sm:$0xff]
    %v2586 = vld [vmem:[#allocation8 + $0xe8] sm:$0xff]
    %v2587 = vld [vmem:[#allocation8 + $0xf0] sm:$0xff]
    %v2588 = vld [vmem:[#allocation8 + $0xf8] sm:$0xff]
    %v2589 = vld [vmem:[%s520] sm:$0xff]
    %v2590 = vld [vmem:[%s520 + $0x8] sm:$0xff]
    %v2591 = vld [vmem:[%s520 + $0x10] sm:$0xff]
    %v2592 = vld [vmem:[%s520 + $0x18] sm:$0xff]
    %v2593 = vld [vmem:[%s520 + $0x20] sm:$0xff]
    %v2594 = vld [vmem:[%s520 + $0x28] sm:$0xff]
    %v2595 = vld [vmem:[%s520 + $0x30] sm:$0xff]
    %v2596 = vld [vmem:[%s520 + $0x38] sm:$0xff]
    %v2629 = vunpack.c.l.b16 %v2557
    %v2630 = vunpack.c.h.b16 %v2557
    %v2631 = vunpack.c.l.b16 %v2558
    %v2632 = vunpack.c.h.b16 %v2558
    %v2633 = vunpack.c.l.b16 %v2559
    %v2634 = vunpack.c.h.b16 %v2559
    %v2635 = vunpack.c.l.b16 %v2560
    %v2636 = vunpack.c.h.b16 %v2560
    %v2637 = vunpack.c.l.b16 %v2561
    %v2638 = vunpack.c.h.b16 %v2561
    %v2639 = vunpack.c.l.b16 %v2562
    %v2640 = vunpack.c.h.b16 %v2562
    %v2641 = vunpack.c.l.b16 %v2563
    %v2642 = vunpack.c.h.b16 %v2563
    %v2643 = vunpack.c.l.b16 %v2564
    %v2644 = vunpack.c.h.b16 %v2564
    %v2645 = vunpack.c.l.b16 %v2565
    %v2646 = vunpack.c.h.b16 %v2565
    %v2647 = vunpack.c.l.b16 %v2566
    %v2648 = vunpack.c.h.b16 %v2566
    %v2649 = vunpack.c.l.b16 %v2567
    %v2650 = vunpack.c.h.b16 %v2567
    %v2651 = vunpack.c.l.b16 %v2568
    %v2652 = vunpack.c.h.b16 %v2568
    %v2653 = vunpack.c.l.b16 %v2569
    %v2654 = vunpack.c.h.b16 %v2569
    %v2655 = vunpack.c.l.b16 %v2570
    %v2656 = vunpack.c.h.b16 %v2570
    %v2657 = vunpack.c.l.b16 %v2571
    %v2658 = vunpack.c.h.b16 %v2571
    %v2659 = vunpack.c.l.b16 %v2572
    %v2660 = vunpack.c.h.b16 %v2572
    %v2661 = vunpack.c.l.b16 %v2573
    %v2662 = vunpack.c.h.b16 %v2573
    %v2663 = vunpack.c.l.b16 %v2574
    %v2664 = vunpack.c.h.b16 %v2574
    %v2665 = vunpack.c.l.b16 %v2575
    %v2666 = vunpack.c.h.b16 %v2575
    %v2667 = vunpack.c.l.b16 %v2576
    %v2668 = vunpack.c.h.b16 %v2576
    %v2669 = vunpack.c.l.b16 %v2577
    %v2670 = vunpack.c.h.b16 %v2577
    %v2671 = vunpack.c.l.b16 %v2578
    %v2672 = vunpack.c.h.b16 %v2578
    %v2673 = vunpack.c.l.b16 %v2579
    %v2674 = vunpack.c.h.b16 %v2579
    %v2675 = vunpack.c.l.b16 %v2580
    %v2676 = vunpack.c.h.b16 %v2580
    %v2677 = vunpack.c.l.b16 %v2581
    %v2678 = vunpack.c.h.b16 %v2581
    %v2679 = vunpack.c.l.b16 %v2582
    %v2680 = vunpack.c.h.b16 %v2582
    %v2681 = vunpack.c.l.b16 %v2583
    %v2682 = vunpack.c.h.b16 %v2583
    %v2683 = vunpack.c.l.b16 %v2584
    %v2684 = vunpack.c.h.b16 %v2584
    %v2685 = vunpack.c.l.b16 %v2585
    %v2686 = vunpack.c.h.b16 %v2585
    %v2687 = vunpack.c.l.b16 %v2586
    %v2688 = vunpack.c.h.b16 %v2586
    %v2689 = vunpack.c.l.b16 %v2587
    %v2690 = vunpack.c.h.b16 %v2587
    %v2691 = vunpack.c.l.b16 %v2588
    %v2692 = vunpack.c.h.b16 %v2588
    %v2693 = vpack.c.b16 %v2633, %v2629
    %v2694 = vpack.c.b16 %v2634, %v2630
    %v2695 = vpack.c.b16 %v2635, %v2631
    %v2696 = vpack.c.b16 %v2636, %v2632
    %v2697 = vpack.c.b16 %v2641, %v2637
    %v2698 = vpack.c.b16 %v2642, %v2638
    %v2699 = vpack.c.b16 %v2643, %v2639
    %v2700 = vpack.c.b16 %v2644, %v2640
    %v2701 = vpack.c.b16 %v2649, %v2645
    %v2702 = vpack.c.b16 %v2650, %v2646
    %v2703 = vpack.c.b16 %v2651, %v2647
    %v2704 = vpack.c.b16 %v2652, %v2648
    %v2705 = vpack.c.b16 %v2657, %v2653
    %v2706 = vpack.c.b16 %v2658, %v2654
    %v2707 = vpack.c.b16 %v2659, %v2655
    %v2708 = vpack.c.b16 %v2660, %v2656
    %v2709 = vpack.c.b16 %v2665, %v2661
    %v2710 = vpack.c.b16 %v2666, %v2662
    %v2711 = vpack.c.b16 %v2667, %v2663
    %v2712 = vpack.c.b16 %v2668, %v2664
    %v2713 = vpack.c.b16 %v2673, %v2669
    %v2714 = vpack.c.b16 %v2674, %v2670
    %v2715 = vpack.c.b16 %v2675, %v2671
    %v2716 = vpack.c.b16 %v2676, %v2672
    %v2717 = vpack.c.b16 %v2681, %v2677
    %v2718 = vpack.c.b16 %v2682, %v2678
    %v2719 = vpack.c.b16 %v2683, %v2679
    %v2720 = vpack.c.b16 %v2684, %v2680
    %v2721 = vpack.c.b16 %v2689, %v2685
    %v2722 = vpack.c.b16 %v2690, %v2686
    %v2723 = vpack.c.b16 %v2691, %v2687
    %v2724 = vpack.c.b16 %v2692, %v2688
    %2757 = vmatprep.subr.bf16.mxu0 %v2722
    %2758 = vmatpush1.bf16.msra.mxu0 %v2721
    %2759 = vmatprep.subr.bf16.mxu0 %v2718
    %2760 = vmatpush1.bf16.msra.mxu0 %v2717
    %2761 = vmatprep.subr.bf16.mxu0 %v2714
    %2762 = vmatpush1.bf16.msra.mxu0 %v2713
    %2763 = vmatprep.subr.bf16.mxu0 %v2710
    %2764 = vmatpush1.bf16.msra.mxu0 %v2709
    %2765 = vmatprep.subr.bf16.mxu0 %v2706
    %2766 = vmatpush1.bf16.msra.mxu0 %v2705
    %2767 = vmatprep.subr.bf16.mxu0 %v2702
    %2768 = vmatpush1.bf16.msra.mxu0 %v2701
    %2769 = vmatprep.subr.bf16.mxu0 %v2698
    %2770 = vmatpush1.bf16.msra.mxu0 %v2697
    %2771 = vmatprep.subr.bf16.mxu0 %v2694
    %2772 = vmatpush1.bf16.msra.mxu0 %v2693
    %2773 = vmatprep.subr.bf16.mxu0 0
    %2774 = vmatpush2.bf16.msra.mxu0 0
    %2775 = vmatprep.subr.bf16.mxu0 0
    %2776 = vmatpush2.bf16.msra.mxu0 0
    %2777 = vmatprep.subr.bf16.mxu0 0
    %2778 = vmatpush2.bf16.msra.mxu0 0
    %2779 = vmatprep.subr.bf16.mxu0 0
    %2780 = vmatpush2.bf16.msra.mxu0 0
    %2781 = vmatprep.subr.bf16.mxu0 0
    %2782 = vmatpush2.bf16.msra.mxu0 0
    %2783 = vmatprep.subr.bf16.mxu0 0
    %2784 = vmatpush2.bf16.msra.mxu0 0
    %2785 = vmatprep.subr.bf16.mxu0 0
    %2786 = vmatpush2.bf16.msra.mxu0 0
    %2787 = vmatprep.subr.bf16.mxu0 0
    %2788 = vmatpush2.bf16.msra.mxu0 0
    %2789 = vmatprep.mubr.bf16.mxu0 0
    %2790 = vmatmul.mubr.bf16.gmra.mxu0 0
    %v2791 = vpop.f32.mrf.mxu0
    %v2792 = vadd.f32 0.0, %v2791
    %v2793 = vpop.f32.mrf.mxu0
    %v2794 = vadd.f32 0.0, %v2793
    %v2795 = vpop.f32.mrf.mxu0
    %v2796 = vadd.f32 0.0, %v2795
    %v2797 = vpop.f32.mrf.mxu0
    %v2798 = vadd.f32 0.0, %v2797
    %2799 = vdwg.mxu0
    %2800 = vmatprep.subr.bf16.mxu0 %v2724
    %2801 = vmatpush1.bf16.msra.mxu0 %v2723
    %2802 = vmatprep.subr.bf16.mxu0 %v2720
    %2803 = vmatpush1.bf16.msra.mxu0 %v2719
    %2804 = vmatprep.subr.bf16.mxu0 %v2716
    %2805 = vmatpush1.bf16.msra.mxu0 %v2715
    %2806 = vmatprep.subr.bf16.mxu0 %v2712
    %2807 = vmatpush1.bf16.msra.mxu0 %v2711
    %2808 = vmatprep.subr.bf16.mxu0 %v2708
    %2809 = vmatpush1.bf16.msra.mxu0 %v2707
    %2810 = vmatprep.subr.bf16.mxu0 %v2704
    %2811 = vmatpush1.bf16.msra.mxu0 %v2703
    %2812 = vmatprep.subr.bf16.mxu0 %v2700
    %2813 = vmatpush1.bf16.msra.mxu0 %v2699
    %2814 = vmatprep.subr.bf16.mxu0 %v2696
    %2815 = vmatpush1.bf16.msra.mxu0 %v2695
    %2816 = vmatprep.subr.bf16.mxu0 0
    %2817 = vmatpush2.bf16.msra.mxu0 0
    %2818 = vmatprep.subr.bf16.mxu0 0
    %2819 = vmatpush2.bf16.msra.mxu0 0
    %2820 = vmatprep.subr.bf16.mxu0 0
    %2821 = vmatpush2.bf16.msra.mxu0 0
    %2822 = vmatprep.subr.bf16.mxu0 0
    %2823 = vmatpush2.bf16.msra.mxu0 0
    %2824 = vmatprep.subr.bf16.mxu0 0
    %2825 = vmatpush2.bf16.msra.mxu0 0
    %2826 = vmatprep.subr.bf16.mxu0 0
    %2827 = vmatpush2.bf16.msra.mxu0 0
    %2828 = vmatprep.subr.bf16.mxu0 0
    %2829 = vmatpush2.bf16.msra.mxu0 0
    %2830 = vmatprep.subr.bf16.mxu0 0
    %2831 = vmatpush2.bf16.msra.mxu0 0
    %2832 = vmatprep.mubr.bf16.mxu0 0
    %2833 = vmatmul.mubr.bf16.gmra.mxu0 0
    %v2834 = vpop.f32.mrf.mxu0
    %v2835 = vadd.f32 0.0, %v2834
    %v2836 = vpop.f32.mrf.mxu0
    %v2837 = vadd.f32 0.0, %v2836
    %v2838 = vpop.f32.mrf.mxu0
    %v2839 = vadd.f32 0.0, %v2838
    %v2840 = vpop.f32.mrf.mxu0
    %v2841 = vadd.f32 0.0, %v2840
    %2842 = vdwg.mxu0
    %v2843 = vadd.f32 %v2589, %v2792
    %v2844 = vadd.f32 %v2590, %v2794
    %v2845 = vadd.f32 %v2591, %v2835
    %v2846 = vadd.f32 %v2592, %v2837
    %v2847 = vadd.f32 %v2593, %v2796
    %v2848 = vadd.f32 %v2594, %v2798
    %v2849 = vadd.f32 %v2595, %v2839
    %v2850 = vadd.f32 %v2596, %v2841
    %v2851 = vxor.u32 %v2843, 2147483648
    %v2852 = vxor.u32 %v2847, 2147483648
    %v2853 = vmul.f32 %v2851, 1.442695
    %v2854 = vpow.pop %v2853
    %v2855 = vmul.f32 %v2852, 1.442695
    %v2856 = vpow.pop %v2855
    %v2857 = vadd.f32 %v2854, 1.0
    %v2858 = vadd.f32 %v2856, 1.0
    %v2859 = vrcp.pop %v2857
    %v2860 = vmul.f32 1.0, %v2859
    %v2861 = vrcp.pop %v2858
    %v2862 = vmul.f32 1.0, %v2861
    %v2863 = vxor.u32 %v2844, 2147483648
    %v2864 = vxor.u32 %v2848, 2147483648
    %v2865 = vmul.f32 %v2863, 1.442695
    %v2866 = vpow.pop %v2865
    %v2867 = vmul.f32 %v2864, 1.442695
    %v2868 = vpow.pop %v2867
    %v2869 = vadd.f32 %v2866, 1.0
    %v2870 = vadd.f32 %v2868, 1.0
    %v2871 = vrcp.pop %v2869
    %v2872 = vmul.f32 1.0, %v2871
    %v2873 = vrcp.pop %v2870
    %v2874 = vmul.f32 1.0, %v2873
    %v2875 = vtanh.pop %v2845
    %v2876 = vtanh.pop %v2849
    %v2877 = vxor.u32 %v2846, 2147483648
    %v2878 = vxor.u32 %v2850, 2147483648
    %v2879 = vmul.f32 %v2877, 1.442695
    %v2880 = vpow.pop %v2879
    %v2881 = vmul.f32 %v2878, 1.442695
    %v2882 = vpow.pop %v2881
    %v2883 = vadd.f32 %v2880, 1.0
    %v2884 = vadd.f32 %v2882, 1.0
    %v2885 = vrcp.pop %v2883
    %v2886 = vmul.f32 1.0, %v2885
    %v2887 = vrcp.pop %v2884
    %v2888 = vmul.f32 1.0, %v2887
    %v2889 = vmul.f32 %v2872, 0.0
    %v2890 = vmul.f32 %v2874, 0.0
    %v2891 = vmul.f32 %v2860, %v2875
    %v2892 = vmul.f32 %v2862, %v2876
    %v2893 = vadd.f32 %v2889, %v2891
    %v2894 = vadd.f32 %v2890, %v2892
    %v2895 = vtanh.pop %v2893
    %v2896 = vtanh.pop %v2894
    %v2897 = vmul.f32 %v2886, %v2895
    %v2898 = vmul.f32 %v2888, %v2896
    %v2899 = vpack.c.bf16 %v2898, %v2897
    %v2901 = vunpack.c.l.b16 %v2899
    %v2902 = vunpack.c.h.b16 %v2899
    %v2903 = vpack.c.b16 %v2901, %v2901
    %v2904 = vpack.c.b16 %v2902, %v2902
    %2907 = vst [vmem:[#allocation9] sm:$0xf] %v2903
    %2908 = vst [vmem:[#allocation9 + $0x4] sm:$0xf] %v2904
    %v2909 = vld [vmem:[%s843] sm:$0xff]
    %v2910 = vld [vmem:[%s843 + $0x8] sm:$0xff]
    %v2911 = vld [vmem:[%s843 + $0x10] sm:$0xff]
    %v2912 = vld [vmem:[%s843 + $0x18] sm:$0xff]
    %v2913 = vld [vmem:[%s843 + $0x20] sm:$0xff]
    %v2914 = vld [vmem:[%s843 + $0x28] sm:$0xff]
    %v2915 = vld [vmem:[%s843 + $0x30] sm:$0xff]
    %v2916 = vld [vmem:[%s843 + $0x38] sm:$0xff]
    %2917 = vmatprep.subr.bf16.mxu0 %v2722
    %2918 = vmatpush1.bf16.msra.mxu0 %v2721
    %2919 = vmatprep.subr.bf16.mxu0 %v2718
    %2920 = vmatpush1.bf16.msra.mxu0 %v2717
    %2921 = vmatprep.subr.bf16.mxu0 %v2714
    %2922 = vmatpush1.bf16.msra.mxu0 %v2713
    %2923 = vmatprep.subr.bf16.mxu0 %v2710
    %2924 = vmatpush1.bf16.msra.mxu0 %v2709
    %2925 = vmatprep.subr.bf16.mxu0 %v2706
    %2926 = vmatpush1.bf16.msra.mxu0 %v2705
    %2927 = vmatprep.subr.bf16.mxu0 %v2702
    %2928 = vmatpush1.bf16.msra.mxu0 %v2701
    %2929 = vmatprep.subr.bf16.mxu0 %v2698
    %2930 = vmatpush1.bf16.msra.mxu0 %v2697
    %2931 = vmatprep.subr.bf16.mxu0 %v2694
    %2932 = vmatpush1.bf16.msra.mxu0 %v2693
    %2933 = vmatprep.subr.bf16.mxu0 0
    %2934 = vmatpush2.bf16.msra.mxu0 0
    %2935 = vmatprep.subr.bf16.mxu0 0
    %2936 = vmatpush2.bf16.msra.mxu0 0
    %2937 = vmatprep.subr.bf16.mxu0 0
    %2938 = vmatpush2.bf16.msra.mxu0 0
    %2939 = vmatprep.subr.bf16.mxu0 0
    %2940 = vmatpush2.bf16.msra.mxu0 0
    %2941 = vmatprep.subr.bf16.mxu0 0
    %2942 = vmatpush2.bf16.msra.mxu0 0
    %2943 = vmatprep.subr.bf16.mxu0 0
    %2944 = vmatpush2.bf16.msra.mxu0 0
    %2945 = vmatprep.subr.bf16.mxu0 0
    %2946 = vmatpush2.bf16.msra.mxu0 0
    %2947 = vmatprep.subr.bf16.mxu0 0
    %2948 = vmatpush2.bf16.msra.mxu0 0
    %2949 = vmatprep.mubr.bf16.mxu0 0
    %2950 = vmatmul.mubr.bf16.gmra.mxu0 %v2899
    %v2951 = vpop.f32.mrf.mxu0
    %v2952 = vadd.f32 0.0, %v2951
    %v2953 = vpop.f32.mrf.mxu0
    %v2954 = vadd.f32 0.0, %v2953
    %v2955 = vpop.f32.mrf.mxu0
    %v2956 = vadd.f32 0.0, %v2955
    %v2957 = vpop.f32.mrf.mxu0
    %v2958 = vadd.f32 0.0, %v2957
    %2959 = vdwg.mxu0
    %2960 = vmatprep.subr.bf16.mxu0 %v2724
    %2961 = vmatpush1.bf16.msra.mxu0 %v2723
    %2962 = vmatprep.subr.bf16.mxu0 %v2720
    %2963 = vmatpush1.bf16.msra.mxu0 %v2719
    %2964 = vmatprep.subr.bf16.mxu0 %v2716
    %2965 = vmatpush1.bf16.msra.mxu0 %v2715
    %2966 = vmatprep.subr.bf16.mxu0 %v2712
    %2967 = vmatpush1.bf16.msra.mxu0 %v2711
    %2968 = vmatprep.subr.bf16.mxu0 %v2708
    %2969 = vmatpush1.bf16.msra.mxu0 %v2707
    %2970 = vmatprep.subr.bf16.mxu0 %v2704
    %2971 = vmatpush1.bf16.msra.mxu0 %v2703
    %2972 = vmatprep.subr.bf16.mxu0 %v2700
    %2973 = vmatpush1.bf16.msra.mxu0 %v2699
    %2974 = vmatprep.subr.bf16.mxu0 %v2696
    %2975 = vmatpush1.bf16.msra.mxu0 %v2695
    %2976 = vmatprep.subr.bf16.mxu0 0
    %2977 = vmatpush2.bf16.msra.mxu0 0
    %2978 = vmatprep.subr.bf16.mxu0 0
    %2979 = vmatpush2.bf16.msra.mxu0 0
    %2980 = vmatprep.subr.bf16.mxu0 0
    %2981 = vmatpush2.bf16.msra.mxu0 0
    %2982 = vmatprep.subr.bf16.mxu0 0
    %2983 = vmatpush2.bf16.msra.mxu0 0
    %2984 = vmatprep.subr.bf16.mxu0 0
    %2985 = vmatpush2.bf16.msra.mxu0 0
    %2986 = vmatprep.subr.bf16.mxu0 0
    %2987 = vmatpush2.bf16.msra.mxu0 0
    %2988 = vmatprep.subr.bf16.mxu0 0
    %2989 = vmatpush2.bf16.msra.mxu0 0
    %2990 = vmatprep.subr.bf16.mxu0 0
    %2991 = vmatpush2.bf16.msra.mxu0 0
    %2992 = vmatprep.mubr.bf16.mxu0 0
    %2993 = vmatmul.mubr.bf16.gmra.mxu0 %v2899
    %v2994 = vpop.f32.mrf.mxu0
    %v2995 = vadd.f32 0.0, %v2994
    %v2996 = vpop.f32.mrf.mxu0
    %v2997 = vadd.f32 0.0, %v2996
    %v2998 = vpop.f32.mrf.mxu0
    %v2999 = vadd.f32 0.0, %v2998
    %v3000 = vpop.f32.mrf.mxu0
    %v3001 = vadd.f32 0.0, %v3000
    %3002 = vdwg.mxu0
    %v3003 = vadd.f32 %v2909, %v2952
    %v3004 = vadd.f32 %v2910, %v2954
    %v3005 = vadd.f32 %v2911, %v2995
    %v3006 = vadd.f32 %v2912, %v2997
    %v3007 = vadd.f32 %v2913, %v2956
    %v3008 = vadd.f32 %v2914, %v2958
    %v3009 = vadd.f32 %v2915, %v2999
    %v3010 = vadd.f32 %v2916, %v3001
    %v3011 = vxor.u32 %v3003, 2147483648
    %v3012 = vxor.u32 %v3007, 2147483648
    %v3013 = vmul.f32 %v3011, 1.442695
    %v3014 = vpow.pop %v3013
    %v3015 = vmul.f32 %v3012, 1.442695
    %v3016 = vpow.pop %v3015
    %v3017 = vadd.f32 %v3014, 1.0
    %v3018 = vadd.f32 %v3016, 1.0
    %v3019 = vrcp.pop %v3017
    %v3020 = vmul.f32 1.0, %v3019
    %v3021 = vrcp.pop %v3018
    %v3022 = vmul.f32 1.0, %v3021
    %v3023 = vxor.u32 %v3004, 2147483648
    %v3024 = vxor.u32 %v3008, 2147483648
    %v3025 = vmul.f32 %v3023, 1.442695
    %v3026 = vpow.pop %v3025
    %v3027 = vmul.f32 %v3024, 1.442695
    %v3028 = vpow.pop %v3027
    %v3029 = vadd.f32 %v3026, 1.0
    %v3030 = vadd.f32 %v3028, 1.0
    %v3031 = vrcp.pop %v3029
    %v3032 = vmul.f32 1.0, %v3031
    %v3033 = vrcp.pop %v3030
    %v3034 = vmul.f32 1.0, %v3033
    %v3035 = vtanh.pop %v3005
    %v3036 = vtanh.pop %v3009
    %v3037 = vxor.u32 %v3006, 2147483648
    %v3038 = vxor.u32 %v3010, 2147483648
    %v3039 = vmul.f32 %v3037, 1.442695
    %v3040 = vpow.pop %v3039
    %v3041 = vmul.f32 %v3038, 1.442695
    %v3042 = vpow.pop %v3041
    %v3043 = vadd.f32 %v3040, 1.0
    %v3044 = vadd.f32 %v3042, 1.0
    %v3045 = vrcp.pop %v3043
    %v3046 = vmul.f32 1.0, %v3045
    %v3047 = vrcp.pop %v3044
    %v3048 = vmul.f32 1.0, %v3047
    %v3049 = vmul.f32 %v3032, %v2893
    %v3050 = vmul.f32 %v3034, %v2894
    %v3051 = vmul.f32 %v3020, %v3035
    %v3052 = vmul.f32 %v3022, %v3036
    %v3053 = vadd.f32 %v3049, %v3051
    %v3054 = vadd.f32 %v3050, %v3052
    %v3055 = vtanh.pop %v3053
    %v3056 = vtanh.pop %v3054
    %v3057 = vmul.f32 %v3046, %v3055
    %v3058 = vmul.f32 %v3048, %v3056
    %v3059 = vpack.c.bf16 %v3058, %v3057
    %v3061 = vunpack.c.l.b16 %v3059
    %v3062 = vunpack.c.h.b16 %v3059
    %v3063 = vpack.c.b16 %v3061, %v3061
    %v3064 = vpack.c.b16 %v3062, %v3062
    %3067 = vst [vmem:[%s1002] sm:$0xf] %v3063
    %3068 = vst [vmem:[%s1002 + $0x4] sm:$0xf] %v3064
    %v3069 = vld [vmem:[%s1007] sm:$0xff]
    %v3070 = vld [vmem:[%s1007 + $0x8] sm:$0xff]
    %v3071 = vld [vmem:[%s1007 + $0x10] sm:$0xff]
    %v3072 = vld [vmem:[%s1007 + $0x18] sm:$0xff]
    %v3073 = vld [vmem:[%s1007 + $0x20] sm:$0xff]
    %v3074 = vld [vmem:[%s1007 + $0x28] sm:$0xff]
    %v3075 = vld [vmem:[%s1007 + $0x30] sm:$0xff]
    %v3076 = vld [vmem:[%s1007 + $0x38] sm:$0xff]
    %3077 = vmatprep.subr.bf16.mxu0 %v2722
    %3078 = vmatpush1.bf16.msra.mxu0 %v2721
    %3079 = vmatprep.subr.bf16.mxu0 %v2718
    %3080 = vmatpush1.bf16.msra.mxu0 %v2717
    %3081 = vmatprep.subr.bf16.mxu0 %v2714
    %3082 = vmatpush1.bf16.msra.mxu0 %v2713
    %3083 = vmatprep.subr.bf16.mxu0 %v2710
    %3084 = vmatpush1.bf16.msra.mxu0 %v2709
    %3085 = vmatprep.subr.bf16.mxu0 %v2706
    %3086 = vmatpush1.bf16.msra.mxu0 %v2705
    %3087 = vmatprep.subr.bf16.mxu0 %v2702
    %3088 = vmatpush1.bf16.msra.mxu0 %v2701
    %3089 = vmatprep.subr.bf16.mxu0 %v2698
    %3090 = vmatpush1.bf16.msra.mxu0 %v2697
    %3091 = vmatprep.subr.bf16.mxu0 %v2694
    %3092 = vmatpush1.bf16.msra.mxu0 %v2693
    %3093 = vmatprep.subr.bf16.mxu0 0
    %3094 = vmatpush2.bf16.msra.mxu0 0
    %3095 = vmatprep.subr.bf16.mxu0 0
    %3096 = vmatpush2.bf16.msra.mxu0 0
    %3097 = vmatprep.subr.bf16.mxu0 0
    %3098 = vmatpush2.bf16.msra.mxu0 0
    %3099 = vmatprep.subr.bf16.mxu0 0
    %3100 = vmatpush2.bf16.msra.mxu0 0
    %3101 = vmatprep.subr.bf16.mxu0 0
    %3102 = vmatpush2.bf16.msra.mxu0 0
    %3103 = vmatprep.subr.bf16.mxu0 0
    %3104 = vmatpush2.bf16.msra.mxu0 0
    %3105 = vmatprep.subr.bf16.mxu0 0
    %3106 = vmatpush2.bf16.msra.mxu0 0
    %3107 = vmatprep.subr.bf16.mxu0 0
    %3108 = vmatpush2.bf16.msra.mxu0 0
    %3109 = vmatprep.mubr.bf16.mxu0 0
    %3110 = vmatmul.mubr.bf16.gmra.mxu0 %v3059
    %v3111 = vpop.f32.mrf.mxu0
    %v3112 = vadd.f32 0.0, %v3111
    %v3113 = vpop.f32.mrf.mxu0
    %v3114 = vadd.f32 0.0, %v3113
    %v3115 = vpop.f32.mrf.mxu0
    %v3116 = vadd.f32 0.0, %v3115
    %v3117 = vpop.f32.mrf.mxu0
    %v3118 = vadd.f32 0.0, %v3117
    %3119 = vdwg.mxu0
    %3120 = vmatprep.subr.bf16.mxu0 %v2724
    %3121 = vmatpush1.bf16.msra.mxu0 %v2723
    %3122 = vmatprep.subr.bf16.mxu0 %v2720
    %3123 = vmatpush1.bf16.msra.mxu0 %v2719
    %3124 = vmatprep.subr.bf16.mxu0 %v2716
    %3125 = vmatpush1.bf16.msra.mxu0 %v2715
    %3126 = vmatprep.subr.bf16.mxu0 %v2712
    %3127 = vmatpush1.bf16.msra.mxu0 %v2711
    %3128 = vmatprep.subr.bf16.mxu0 %v2708
    %3129 = vmatpush1.bf16.msra.mxu0 %v2707
    %3130 = vmatprep.subr.bf16.mxu0 %v2704
    %3131 = vmatpush1.bf16.msra.mxu0 %v2703
    %3132 = vmatprep.subr.bf16.mxu0 %v2700
    %3133 = vmatpush1.bf16.msra.mxu0 %v2699
    %3134 = vmatprep.subr.bf16.mxu0 %v2696
    %3135 = vmatpush1.bf16.msra.mxu0 %v2695
    %3136 = vmatprep.subr.bf16.mxu0 0
    %3137 = vmatpush2.bf16.msra.mxu0 0
    %3138 = vmatprep.subr.bf16.mxu0 0
    %3139 = vmatpush2.bf16.msra.mxu0 0
    %3140 = vmatprep.subr.bf16.mxu0 0
    %3141 = vmatpush2.bf16.msra.mxu0 0
    %3142 = vmatprep.subr.bf16.mxu0 0
    %3143 = vmatpush2.bf16.msra.mxu0 0
    %3144 = vmatprep.subr.bf16.mxu0 0
    %3145 = vmatpush2.bf16.msra.mxu0 0
    %3146 = vmatprep.subr.bf16.mxu0 0
    %3147 = vmatpush2.bf16.msra.mxu0 0
    %3148 = vmatprep.subr.bf16.mxu0 0
    %3149 = vmatpush2.bf16.msra.mxu0 0
    %3150 = vmatprep.subr.bf16.mxu0 0
    %3151 = vmatpush2.bf16.msra.mxu0 0
    %3152 = vmatprep.mubr.bf16.mxu0 0
    %3153 = vmatmul.mubr.bf16.gmra.mxu0 %v3059
    %v3154 = vpop.f32.mrf.mxu0
    %v3155 = vadd.f32 0.0, %v3154
    %v3156 = vpop.f32.mrf.mxu0
    %v3157 = vadd.f32 0.0, %v3156
    %v3158 = vpop.f32.mrf.mxu0
    %v3159 = vadd.f32 0.0, %v3158
    %v3160 = vpop.f32.mrf.mxu0
    %v3161 = vadd.f32 0.0, %v3160
    %3162 = vdwg.mxu0
    %v3163 = vadd.f32 %v3069, %v3112
    %v3164 = vadd.f32 %v3070, %v3114
    %v3165 = vadd.f32 %v3071, %v3155
    %v3166 = vadd.f32 %v3072, %v3157
    %v3167 = vadd.f32 %v3073, %v3116
    %v3168 = vadd.f32 %v3074, %v3118
    %v3169 = vadd.f32 %v3075, %v3159
    %v3170 = vadd.f32 %v3076, %v3161
    %v3171 = vxor.u32 %v3163, 2147483648
    %v3172 = vxor.u32 %v3167, 2147483648
    %v3173 = vmul.f32 %v3171, 1.442695
    %v3174 = vpow.pop %v3173
    %v3175 = vmul.f32 %v3172, 1.442695
    %v3176 = vpow.pop %v3175
    %v3177 = vadd.f32 %v3174, 1.0
    %v3178 = vadd.f32 %v3176, 1.0
    %v3179 = vrcp.pop %v3177
    %v3180 = vmul.f32 1.0, %v3179
    %v3181 = vrcp.pop %v3178
    %v3182 = vmul.f32 1.0, %v3181
    %v3183 = vxor.u32 %v3164, 2147483648
    %v3184 = vxor.u32 %v3168, 2147483648
    %v3185 = vmul.f32 %v3183, 1.442695
    %v3186 = vpow.pop %v3185
    %v3187 = vmul.f32 %v3184, 1.442695
    %v3188 = vpow.pop %v3187
    %v3189 = vadd.f32 %v3186, 1.0
    %v3190 = vadd.f32 %v3188, 1.0
    %v3191 = vrcp.pop %v3189
    %v3192 = vmul.f32 1.0, %v3191
    %v3193 = vrcp.pop %v3190
    %v3194 = vmul.f32 1.0, %v3193
    %v3195 = vtanh.pop %v3165
    %v3196 = vtanh.pop %v3169
    %v3197 = vxor.u32 %v3166, 2147483648
    %v3198 = vxor.u32 %v3170, 2147483648
    %v3199 = vmul.f32 %v3197, 1.442695
    %v3200 = vpow.pop %v3199
    %v3201 = vmul.f32 %v3198, 1.442695
    %v3202 = vpow.pop %v3201
    %v3203 = vadd.f32 %v3200, 1.0
    %v3204 = vadd.f32 %v3202, 1.0
    %v3205 = vrcp.pop %v3203
    %v3206 = vmul.f32 1.0, %v3205
    %v3207 = vrcp.pop %v3204
    %v3208 = vmul.f32 1.0, %v3207
    %v3209 = vmul.f32 %v3192, %v3053
    %v3210 = vmul.f32 %v3194, %v3054
    %v3211 = vmul.f32 %v3180, %v3195
    %v3212 = vmul.f32 %v3182, %v3196
    %v3213 = vadd.f32 %v3209, %v3211
    %v3214 = vadd.f32 %v3210, %v3212
    %v3215 = vtanh.pop %v3213
    %v3216 = vtanh.pop %v3214
    %v3217 = vmul.f32 %v3206, %v3215
    %v3218 = vmul.f32 %v3208, %v3216
    %v3219 = vpack.c.bf16 %v3218, %v3217
    %v3221 = vunpack.c.l.b16 %v3219
    %v3222 = vunpack.c.h.b16 %v3219
    %v3223 = vpack.c.b16 %v3221, %v3221
    %v3224 = vpack.c.b16 %v3222, %v3222
    %3227 = vst [vmem:[%s1166] sm:$0xf] %v3223
    %3228 = vst [vmem:[%s1166 + $0x4] sm:$0xf] %v3224
    %v3229 = vld [vmem:[%s1171] sm:$0xff]
    %v3230 = vld [vmem:[%s1171 + $0x8] sm:$0xff]
    %v3231 = vld [vmem:[%s1171 + $0x10] sm:$0xff]
    %v3232 = vld [vmem:[%s1171 + $0x18] sm:$0xff]
    %v3233 = vld [vmem:[%s1171 + $0x20] sm:$0xff]
    %v3234 = vld [vmem:[%s1171 + $0x28] sm:$0xff]
    %v3235 = vld [vmem:[%s1171 + $0x30] sm:$0xff]
    %v3236 = vld [vmem:[%s1171 + $0x38] sm:$0xff]
    %3237 = vmatprep.subr.bf16.mxu0 %v2722
    %3238 = vmatpush1.bf16.msra.mxu0 %v2721
    %3239 = vmatprep.subr.bf16.mxu0 %v2718
    %3240 = vmatpush1.bf16.msra.mxu0 %v2717
    %3241 = vmatprep.subr.bf16.mxu0 %v2714
    %3242 = vmatpush1.bf16.msra.mxu0 %v2713
    %3243 = vmatprep.subr.bf16.mxu0 %v2710
    %3244 = vmatpush1.bf16.msra.mxu0 %v2709
    %3245 = vmatprep.subr.bf16.mxu0 %v2706
    %3246 = vmatpush1.bf16.msra.mxu0 %v2705
    %3247 = vmatprep.subr.bf16.mxu0 %v2702
    %3248 = vmatpush1.bf16.msra.mxu0 %v2701
    %3249 = vmatprep.subr.bf16.mxu0 %v2698
    %3250 = vmatpush1.bf16.msra.mxu0 %v2697
    %3251 = vmatprep.subr.bf16.mxu0 %v2694
    %3252 = vmatpush1.bf16.msra.mxu0 %v2693
    %3253 = vmatprep.subr.bf16.mxu0 0
    %3254 = vmatpush2.bf16.msra.mxu0 0
    %3255 = vmatprep.subr.bf16.mxu0 0
    %3256 = vmatpush2.bf16.msra.mxu0 0
    %3257 = vmatprep.subr.bf16.mxu0 0
    %3258 = vmatpush2.bf16.msra.mxu0 0
    %3259 = vmatprep.subr.bf16.mxu0 0
    %3260 = vmatpush2.bf16.msra.mxu0 0
    %3261 = vmatprep.subr.bf16.mxu0 0
    %3262 = vmatpush2.bf16.msra.mxu0 0
    %3263 = vmatprep.subr.bf16.mxu0 0
    %3264 = vmatpush2.bf16.msra.mxu0 0
    %3265 = vmatprep.subr.bf16.mxu0 0
    %3266 = vmatpush2.bf16.msra.mxu0 0
    %3267 = vmatprep.subr.bf16.mxu0 0
    %3268 = vmatpush2.bf16.msra.mxu0 0
    %3269 = vmatprep.mubr.bf16.mxu0 0
    %3270 = vmatmul.mubr.bf16.gmra.mxu0 %v3219
    %v3271 = vpop.f32.mrf.mxu0
    %v3272 = vadd.f32 0.0, %v3271
    %v3273 = vpop.f32.mrf.mxu0
    %v3274 = vadd.f32 0.0, %v3273
    %v3275 = vpop.f32.mrf.mxu0
    %v3276 = vadd.f32 0.0, %v3275
    %v3277 = vpop.f32.mrf.mxu0
    %v3278 = vadd.f32 0.0, %v3277
    %3279 = vdwg.mxu0
    %3280 = vmatprep.subr.bf16.mxu0 %v2724
    %3281 = vmatpush1.bf16.msra.mxu0 %v2723
    %3282 = vmatprep.subr.bf16.mxu0 %v2720
    %3283 = vmatpush1.bf16.msra.mxu0 %v2719
    %3284 = vmatprep.subr.bf16.mxu0 %v2716
    %3285 = vmatpush1.bf16.msra.mxu0 %v2715
    %3286 = vmatprep.subr.bf16.mxu0 %v2712
    %3287 = vmatpush1.bf16.msra.mxu0 %v2711
    %3288 = vmatprep.subr.bf16.mxu0 %v2708
    %3289 = vmatpush1.bf16.msra.mxu0 %v2707
    %3290 = vmatprep.subr.bf16.mxu0 %v2704
    %3291 = vmatpush1.bf16.msra.mxu0 %v2703
    %3292 = vmatprep.subr.bf16.mxu0 %v2700
    %3293 = vmatpush1.bf16.msra.mxu0 %v2699
    %3294 = vmatprep.subr.bf16.mxu0 %v2696
    %3295 = vmatpush1.bf16.msra.mxu0 %v2695
    %3296 = vmatprep.subr.bf16.mxu0 0
    %3297 = vmatpush2.bf16.msra.mxu0 0
    %3298 = vmatprep.subr.bf16.mxu0 0
    %3299 = vmatpush2.bf16.msra.mxu0 0
    %3300 = vmatprep.subr.bf16.mxu0 0
    %3301 = vmatpush2.bf16.msra.mxu0 0
    %3302 = vmatprep.subr.bf16.mxu0 0
    %3303 = vmatpush2.bf16.msra.mxu0 0
    %3304 = vmatprep.subr.bf16.mxu0 0
    %3305 = vmatpush2.bf16.msra.mxu0 0
    %3306 = vmatprep.subr.bf16.mxu0 0
    %3307 = vmatpush2.bf16.msra.mxu0 0
    %3308 = vmatprep.subr.bf16.mxu0 0
    %3309 = vmatpush2.bf16.msra.mxu0 0
    %3310 = vmatprep.subr.bf16.mxu0 0
    %3311 = vmatpush2.bf16.msra.mxu0 0
    %3312 = vmatprep.mubr.bf16.mxu0 0
    %3313 = vmatmul.mubr.bf16.gmra.mxu0 %v3219
    %v3314 = vpop.f32.mrf.mxu0
    %v3315 = vadd.f32 0.0, %v3314
    %v3316 = vpop.f32.mrf.mxu0
    %v3317 = vadd.f32 0.0, %v3316
    %v3318 = vpop.f32.mrf.mxu0
    %v3319 = vadd.f32 0.0, %v3318
    %v3320 = vpop.f32.mrf.mxu0
    %v3321 = vadd.f32 0.0, %v3320
    %3322 = vdwg.mxu0
    %v3323 = vadd.f32 %v3229, %v3272
    %v3324 = vadd.f32 %v3230, %v3274
    %v3325 = vadd.f32 %v3231, %v3315
    %v3326 = vadd.f32 %v3232, %v3317
    %v3327 = vadd.f32 %v3233, %v3276
    %v3328 = vadd.f32 %v3234, %v3278
    %v3329 = vadd.f32 %v3235, %v3319
    %v3330 = vadd.f32 %v3236, %v3321
    %v3331 = vxor.u32 %v3323, 2147483648
    %v3332 = vxor.u32 %v3327, 2147483648
    %v3333 = vmul.f32 %v3331, 1.442695
    %v3334 = vpow.pop %v3333
    %v3335 = vmul.f32 %v3332, 1.442695
    %v3336 = vpow.pop %v3335
    %v3337 = vadd.f32 %v3334, 1.0
    %v3338 = vadd.f32 %v3336, 1.0
    %v3339 = vrcp.pop %v3337
    %v3340 = vmul.f32 1.0, %v3339
    %v3341 = vrcp.pop %v3338
    %v3342 = vmul.f32 1.0, %v3341
    %v3343 = vxor.u32 %v3324, 2147483648
    %v3344 = vxor.u32 %v3328, 2147483648
    %v3345 = vmul.f32 %v3343, 1.442695
    %v3346 = vpow.pop %v3345
    %v3347 = vmul.f32 %v3344, 1.442695
    %v3348 = vpow.pop %v3347
    %v3349 = vadd.f32 %v3346, 1.0
    %v3350 = vadd.f32 %v3348, 1.0
    %v3351 = vrcp.pop %v3349
    %v3352 = vmul.f32 1.0, %v3351
    %v3353 = vrcp.pop %v3350
    %v3354 = vmul.f32 1.0, %v3353
    %v3355 = vtanh.pop %v3325
    %v3356 = vtanh.pop %v3329
    %v3357 = vxor.u32 %v3326, 2147483648
    %v3358 = vxor.u32 %v3330, 2147483648
    %v3359 = vmul.f32 %v3357, 1.442695
    %v3360 = vpow.pop %v3359
    %v3361 = vmul.f32 %v3358, 1.442695
    %v3362 = vpow.pop %v3361
    %v3363 = vadd.f32 %v3360, 1.0
    %v3364 = vadd.f32 %v3362, 1.0
    %v3365 = vrcp.pop %v3363
    %v3366 = vmul.f32 1.0, %v3365
    %v3367 = vrcp.pop %v3364
    %v3368 = vmul.f32 1.0, %v3367
    %v3369 = vmul.f32 %v3352, %v3213
    %v3370 = vmul.f32 %v3354, %v3214
    %v3371 = vmul.f32 %v3340, %v3355
    %v3372 = vmul.f32 %v3342, %v3356
    %v3373 = vadd.f32 %v3369, %v3371
    %v3374 = vadd.f32 %v3370, %v3372
    %v3375 = vtanh.pop %v3373
    %v3376 = vtanh.pop %v3374
    %v3377 = vmul.f32 %v3366, %v3375
    %v3378 = vmul.f32 %v3368, %v3376
    %v3379 = vpack.c.bf16 %v3378, %v3377
    %v3381 = vunpack.c.l.b16 %v3379
    %v3382 = vunpack.c.h.b16 %v3379
    %v3383 = vpack.c.b16 %v3381, %v3381
    %v3384 = vpack.c.b16 %v3382, %v3382
    %3387 = vst [vmem:[%s1330] sm:$0xf] %v3383
    %3388 = vst [vmem:[%s1330 + $0x4] sm:$0xf] %v3384
    %v3389 = vld [vmem:[%s1335] sm:$0xff]
    %v3390 = vld [vmem:[%s1335 + $0x8] sm:$0xff]
    %v3391 = vld [vmem:[%s1335 + $0x10] sm:$0xff]
    %v3392 = vld [vmem:[%s1335 + $0x18] sm:$0xff]
    %v3393 = vld [vmem:[%s1335 + $0x20] sm:$0xff]
    %v3394 = vld [vmem:[%s1335 + $0x28] sm:$0xff]
    %v3395 = vld [vmem:[%s1335 + $0x30] sm:$0xff]
    %v3396 = vld [vmem:[%s1335 + $0x38] sm:$0xff]
    %3397 = vmatprep.subr.bf16.mxu0 %v2722
    %3398 = vmatpush1.bf16.msra.mxu0 %v2721
    %3399 = vmatprep.subr.bf16.mxu0 %v2718
    %3400 = vmatpush1.bf16.msra.mxu0 %v2717
    %3401 = vmatprep.subr.bf16.mxu0 %v2714
    %3402 = vmatpush1.bf16.msra.mxu0 %v2713
    %3403 = vmatprep.subr.bf16.mxu0 %v2710
    %3404 = vmatpush1.bf16.msra.mxu0 %v2709
    %3405 = vmatprep.subr.bf16.mxu0 %v2706
    %3406 = vmatpush1.bf16.msra.mxu0 %v2705
    %3407 = vmatprep.subr.bf16.mxu0 %v2702
    %3408 = vmatpush1.bf16.msra.mxu0 %v2701
    %3409 = vmatprep.subr.bf16.mxu0 %v2698
    %3410 = vmatpush1.bf16.msra.mxu0 %v2697
    %3411 = vmatprep.subr.bf16.mxu0 %v2694
    %3412 = vmatpush1.bf16.msra.mxu0 %v2693
    %3413 = vmatprep.subr.bf16.mxu0 0
    %3414 = vmatpush2.bf16.msra.mxu0 0
    %3415 = vmatprep.subr.bf16.mxu0 0
    %3416 = vmatpush2.bf16.msra.mxu0 0
    %3417 = vmatprep.subr.bf16.mxu0 0
    %3418 = vmatpush2.bf16.msra.mxu0 0
    %3419 = vmatprep.subr.bf16.mxu0 0
    %3420 = vmatpush2.bf16.msra.mxu0 0
    %3421 = vmatprep.subr.bf16.mxu0 0
    %3422 = vmatpush2.bf16.msra.mxu0 0
    %3423 = vmatprep.subr.bf16.mxu0 0
    %3424 = vmatpush2.bf16.msra.mxu0 0
    %3425 = vmatprep.subr.bf16.mxu0 0
    %3426 = vmatpush2.bf16.msra.mxu0 0
    %3427 = vmatprep.subr.bf16.mxu0 0
    %3428 = vmatpush2.bf16.msra.mxu0 0
    %3429 = vmatprep.mubr.bf16.mxu0 0
    %3430 = vmatmul.mubr.bf16.gmra.mxu0 %v3379
    %v3431 = vpop.f32.mrf.mxu0
    %v3432 = vadd.f32 0.0, %v3431
    %v3433 = vpop.f32.mrf.mxu0
    %v3434 = vadd.f32 0.0, %v3433
    %v3435 = vpop.f32.mrf.mxu0
    %v3436 = vadd.f32 0.0, %v3435
    %v3437 = vpop.f32.mrf.mxu0
    %v3438 = vadd.f32 0.0, %v3437
    %3439 = vdwg.mxu0
    %3440 = vmatprep.subr.bf16.mxu0 %v2724
    %3441 = vmatpush1.bf16.msra.mxu0 %v2723
    %3442 = vmatprep.subr.bf16.mxu0 %v2720
    %3443 = vmatpush1.bf16.msra.mxu0 %v2719
    %3444 = vmatprep.subr.bf16.mxu0 %v2716
    %3445 = vmatpush1.bf16.msra.mxu0 %v2715
    %3446 = vmatprep.subr.bf16.mxu0 %v2712
    %3447 = vmatpush1.bf16.msra.mxu0 %v2711
    %3448 = vmatprep.subr.bf16.mxu0 %v2708
    %3449 = vmatpush1.bf16.msra.mxu0 %v2707
    %3450 = vmatprep.subr.bf16.mxu0 %v2704
    %3451 = vmatpush1.bf16.msra.mxu0 %v2703
    %3452 = vmatprep.subr.bf16.mxu0 %v2700
    %3453 = vmatpush1.bf16.msra.mxu0 %v2699
    %3454 = vmatprep.subr.bf16.mxu0 %v2696
    %3455 = vmatpush1.bf16.msra.mxu0 %v2695
    %3456 = vmatprep.subr.bf16.mxu0 0
    %3457 = vmatpush2.bf16.msra.mxu0 0
    %3458 = vmatprep.subr.bf16.mxu0 0
    %3459 = vmatpush2.bf16.msra.mxu0 0
    %3460 = vmatprep.subr.bf16.mxu0 0
    %3461 = vmatpush2.bf16.msra.mxu0 0
    %3462 = vmatprep.subr.bf16.mxu0 0
    %3463 = vmatpush2.bf16.msra.mxu0 0
    %3464 = vmatprep.subr.bf16.mxu0 0
    %3465 = vmatpush2.bf16.msra.mxu0 0
    %3466 = vmatprep.subr.bf16.mxu0 0
    %3467 = vmatpush2.bf16.msra.mxu0 0
    %3468 = vmatprep.subr.bf16.mxu0 0
    %3469 = vmatpush2.bf16.msra.mxu0 0
    %3470 = vmatprep.subr.bf16.mxu0 0
    %3471 = vmatpush2.bf16.msra.mxu0 0
    %3472 = vmatprep.mubr.bf16.mxu0 0
    %3473 = vmatmul.mubr.bf16.gmra.mxu0 %v3379
    %v3474 = vpop.f32.mrf.mxu0
    %v3475 = vadd.f32 0.0, %v3474
    %v3476 = vpop.f32.mrf.mxu0
    %v3477 = vadd.f32 0.0, %v3476
    %v3478 = vpop.f32.mrf.mxu0
    %v3479 = vadd.f32 0.0, %v3478
    %v3480 = vpop.f32.mrf.mxu0
    %v3481 = vadd.f32 0.0, %v3480
    %3482 = vdwg.mxu0
    %v3483 = vadd.f32 %v3389, %v3432
    %v3484 = vadd.f32 %v3390, %v3434
    %v3485 = vadd.f32 %v3391, %v3475
    %v3486 = vadd.f32 %v3392, %v3477
    %v3487 = vadd.f32 %v3393, %v3436
    %v3488 = vadd.f32 %v3394, %v3438
    %v3489 = vadd.f32 %v3395, %v3479
    %v3490 = vadd.f32 %v3396, %v3481
    %v3491 = vxor.u32 %v3483, 2147483648
    %v3492 = vxor.u32 %v3487, 2147483648
    %v3493 = vmul.f32 %v3491, 1.442695
    %v3494 = vpow.pop %v3493
    %v3495 = vmul.f32 %v3492, 1.442695
    %v3496 = vpow.pop %v3495
    %v3497 = vadd.f32 %v3494, 1.0
    %v3498 = vadd.f32 %v3496, 1.0
    %v3499 = vrcp.pop %v3497
    %v3500 = vmul.f32 1.0, %v3499
    %v3501 = vrcp.pop %v3498
    %v3502 = vmul.f32 1.0, %v3501
    %v3503 = vxor.u32 %v3484, 2147483648
    %v3504 = vxor.u32 %v3488, 2147483648
    %v3505 = vmul.f32 %v3503, 1.442695
    %v3506 = vpow.pop %v3505
    %v3507 = vmul.f32 %v3504, 1.442695
    %v3508 = vpow.pop %v3507
    %v3509 = vadd.f32 %v3506, 1.0
    %v3510 = vadd.f32 %v3508, 1.0
    %v3511 = vrcp.pop %v3509
    %v3512 = vmul.f32 1.0, %v3511
    %v3513 = vrcp.pop %v3510
    %v3514 = vmul.f32 1.0, %v3513
    %v3515 = vtanh.pop %v3485
    %v3516 = vtanh.pop %v3489
    %v3517 = vxor.u32 %v3486, 2147483648
    %v3518 = vxor.u32 %v3490, 2147483648
    %v3519 = vmul.f32 %v3517, 1.442695
    %v3520 = vpow.pop %v3519
    %v3521 = vmul.f32 %v3518, 1.442695
    %v3522 = vpow.pop %v3521
    %v3523 = vadd.f32 %v3520, 1.0
    %v3524 = vadd.f32 %v3522, 1.0
    %v3525 = vrcp.pop %v3523
    %v3526 = vmul.f32 1.0, %v3525
    %v3527 = vrcp.pop %v3524
    %v3528 = vmul.f32 1.0, %v3527
    %v3529 = vmul.f32 %v3512, %v3373
    %v3530 = vmul.f32 %v3514, %v3374
    %v3531 = vmul.f32 %v3500, %v3515
    %v3532 = vmul.f32 %v3502, %v3516
    %v3533 = vadd.f32 %v3529, %v3531
    %v3534 = vadd.f32 %v3530, %v3532
    %v3535 = vtanh.pop %v3533
    %v3536 = vtanh.pop %v3534
    %v3537 = vmul.f32 %v3526, %v3535
    %v3538 = vmul.f32 %v3528, %v3536
    %v3539 = vpack.c.bf16 %v3538, %v3537
    %v3541 = vunpack.c.l.b16 %v3539
    %v3542 = vunpack.c.h.b16 %v3539
    %v3543 = vpack.c.b16 %v3541, %v3541
    %v3544 = vpack.c.b16 %v3542, %v3542
    %3547 = vst [vmem:[%s1494] sm:$0xf] %v3543
    %3548 = vst [vmem:[%s1494 + $0x4] sm:$0xf] %v3544
    %v3549 = vld [vmem:[%s1499] sm:$0xff]
    %v3550 = vld [vmem:[%s1499 + $0x8] sm:$0xff]
    %v3551 = vld [vmem:[%s1499 + $0x10] sm:$0xff]
    %v3552 = vld [vmem:[%s1499 + $0x18] sm:$0xff]
    %v3553 = vld [vmem:[%s1499 + $0x20] sm:$0xff]
    %v3554 = vld [vmem:[%s1499 + $0x28] sm:$0xff]
    %v3555 = vld [vmem:[%s1499 + $0x30] sm:$0xff]
    %v3556 = vld [vmem:[%s1499 + $0x38] sm:$0xff]
    %3557 = vmatprep.subr.bf16.mxu0 %v2722
    %3558 = vmatpush1.bf16.msra.mxu0 %v2721
    %3559 = vmatprep.subr.bf16.mxu0 %v2718
    %3560 = vmatpush1.bf16.msra.mxu0 %v2717
    %3561 = vmatprep.subr.bf16.mxu0 %v2714
    %3562 = vmatpush1.bf16.msra.mxu0 %v2713
    %3563 = vmatprep.subr.bf16.mxu0 %v2710
    %3564 = vmatpush1.bf16.msra.mxu0 %v2709
    %3565 = vmatprep.subr.bf16.mxu0 %v2706
    %3566 = vmatpush1.bf16.msra.mxu0 %v2705
    %3567 = vmatprep.subr.bf16.mxu0 %v2702
    %3568 = vmatpush1.bf16.msra.mxu0 %v2701
    %3569 = vmatprep.subr.bf16.mxu0 %v2698
    %3570 = vmatpush1.bf16.msra.mxu0 %v2697
    %3571 = vmatprep.subr.bf16.mxu0 %v2694
    %3572 = vmatpush1.bf16.msra.mxu0 %v2693
    %3573 = vmatprep.subr.bf16.mxu0 0
    %3574 = vmatpush2.bf16.msra.mxu0 0
    %3575 = vmatprep.subr.bf16.mxu0 0
    %3576 = vmatpush2.bf16.msra.mxu0 0
    %3577 = vmatprep.subr.bf16.mxu0 0
    %3578 = vmatpush2.bf16.msra.mxu0 0
    %3579 = vmatprep.subr.bf16.mxu0 0
    %3580 = vmatpush2.bf16.msra.mxu0 0
    %3581 = vmatprep.subr.bf16.mxu0 0
    %3582 = vmatpush2.bf16.msra.mxu0 0
    %3583 = vmatprep.subr.bf16.mxu0 0
    %3584 = vmatpush2.bf16.msra.mxu0 0
    %3585 = vmatprep.subr.bf16.mxu0 0
    %3586 = vmatpush2.bf16.msra.mxu0 0
    %3587 = vmatprep.subr.bf16.mxu0 0
    %3588 = vmatpush2.bf16.msra.mxu0 0
    %3589 = vmatprep.mubr.bf16.mxu0 0
    %3590 = vmatmul.mubr.bf16.gmra.mxu0 %v3539
    %v3591 = vpop.f32.mrf.mxu0
    %v3592 = vadd.f32 0.0, %v3591
    %v3593 = vpop.f32.mrf.mxu0
    %v3594 = vadd.f32 0.0, %v3593
    %v3595 = vpop.f32.mrf.mxu0
    %v3596 = vadd.f32 0.0, %v3595
    %v3597 = vpop.f32.mrf.mxu0
    %v3598 = vadd.f32 0.0, %v3597
    %3599 = vdwg.mxu0
    %3600 = vmatprep.subr.bf16.mxu0 %v2724
    %3601 = vmatpush1.bf16.msra.mxu0 %v2723
    %3602 = vmatprep.subr.bf16.mxu0 %v2720
    %3603 = vmatpush1.bf16.msra.mxu0 %v2719
    %3604 = vmatprep.subr.bf16.mxu0 %v2716
    %3605 = vmatpush1.bf16.msra.mxu0 %v2715
    %3606 = vmatprep.subr.bf16.mxu0 %v2712
    %3607 = vmatpush1.bf16.msra.mxu0 %v2711
    %3608 = vmatprep.subr.bf16.mxu0 %v2708
    %3609 = vmatpush1.bf16.msra.mxu0 %v2707
    %3610 = vmatprep.subr.bf16.mxu0 %v2704
    %3611 = vmatpush1.bf16.msra.mxu0 %v2703
    %3612 = vmatprep.subr.bf16.mxu0 %v2700
    %3613 = vmatpush1.bf16.msra.mxu0 %v2699
    %3614 = vmatprep.subr.bf16.mxu0 %v2696
    %3615 = vmatpush1.bf16.msra.mxu0 %v2695
    %3616 = vmatprep.subr.bf16.mxu0 0
    %3617 = vmatpush2.bf16.msra.mxu0 0
    %3618 = vmatprep.subr.bf16.mxu0 0
    %3619 = vmatpush2.bf16.msra.mxu0 0
    %3620 = vmatprep.subr.bf16.mxu0 0
    %3621 = vmatpush2.bf16.msra.mxu0 0
    %3622 = vmatprep.subr.bf16.mxu0 0
    %3623 = vmatpush2.bf16.msra.mxu0 0
    %3624 = vmatprep.subr.bf16.mxu0 0
    %3625 = vmatpush2.bf16.msra.mxu0 0
    %3626 = vmatprep.subr.bf16.mxu0 0
    %3627 = vmatpush2.bf16.msra.mxu0 0
    %3628 = vmatprep.subr.bf16.mxu0 0
    %3629 = vmatpush2.bf16.msra.mxu0 0
    %3630 = vmatprep.subr.bf16.mxu0 0
    %3631 = vmatpush2.bf16.msra.mxu0 0
    %3632 = vmatprep.mubr.bf16.mxu0 0
    %3633 = vmatmul.mubr.bf16.gmra.mxu0 %v3539
    %v3634 = vpop.f32.mrf.mxu0
    %v3635 = vadd.f32 0.0, %v3634
    %v3636 = vpop.f32.mrf.mxu0
    %v3637 = vadd.f32 0.0, %v3636
    %v3638 = vpop.f32.mrf.mxu0
    %v3639 = vadd.f32 0.0, %v3638
    %v3640 = vpop.f32.mrf.mxu0
    %v3641 = vadd.f32 0.0, %v3640
    %3642 = vdwg.mxu0
    %v3643 = vadd.f32 %v3549, %v3592
    %v3644 = vadd.f32 %v3550, %v3594
    %v3645 = vadd.f32 %v3551, %v3635
    %v3646 = vadd.f32 %v3552, %v3637
    %v3647 = vadd.f32 %v3553, %v3596
    %v3648 = vadd.f32 %v3554, %v3598
    %v3649 = vadd.f32 %v3555, %v3639
    %v3650 = vadd.f32 %v3556, %v3641
    %v3651 = vxor.u32 %v3643, 2147483648
    %v3652 = vxor.u32 %v3647, 2147483648
    %v3653 = vmul.f32 %v3651, 1.442695
    %v3654 = vpow.pop %v3653
    %v3655 = vmul.f32 %v3652, 1.442695
    %v3656 = vpow.pop %v3655
    %v3657 = vadd.f32 %v3654, 1.0
    %v3658 = vadd.f32 %v3656, 1.0
    %v3659 = vrcp.pop %v3657
    %v3660 = vmul.f32 1.0, %v3659
    %v3661 = vrcp.pop %v3658
    %v3662 = vmul.f32 1.0, %v3661
    %v3663 = vxor.u32 %v3644, 2147483648
    %v3664 = vxor.u32 %v3648, 2147483648
    %v3665 = vmul.f32 %v3663, 1.442695
    %v3666 = vpow.pop %v3665
    %v3667 = vmul.f32 %v3664, 1.442695
    %v3668 = vpow.pop %v3667
    %v3669 = vadd.f32 %v3666, 1.0
    %v3670 = vadd.f32 %v3668, 1.0
    %v3671 = vrcp.pop %v3669
    %v3672 = vmul.f32 1.0, %v3671
    %v3673 = vrcp.pop %v3670
    %v3674 = vmul.f32 1.0, %v3673
    %v3675 = vtanh.pop %v3645
    %v3676 = vtanh.pop %v3649
    %v3677 = vxor.u32 %v3646, 2147483648
    %v3678 = vxor.u32 %v3650, 2147483648
    %v3679 = vmul.f32 %v3677, 1.442695
    %v3680 = vpow.pop %v3679
    %v3681 = vmul.f32 %v3678, 1.442695
    %v3682 = vpow.pop %v3681
    %v3683 = vadd.f32 %v3680, 1.0
    %v3684 = vadd.f32 %v3682, 1.0
    %v3685 = vrcp.pop %v3683
    %v3686 = vmul.f32 1.0, %v3685
    %v3687 = vrcp.pop %v3684
    %v3688 = vmul.f32 1.0, %v3687
    %v3689 = vmul.f32 %v3672, %v3533
    %v3690 = vmul.f32 %v3674, %v3534
    %v3691 = vmul.f32 %v3660, %v3675
    %v3692 = vmul.f32 %v3662, %v3676
    %v3693 = vadd.f32 %v3689, %v3691
    %v3694 = vadd.f32 %v3690, %v3692
    %v3695 = vtanh.pop %v3693
    %v3696 = vtanh.pop %v3694
    %v3697 = vmul.f32 %v3686, %v3695
    %v3698 = vmul.f32 %v3688, %v3696
    %v3699 = vpack.c.bf16 %v3698, %v3697
    %v3701 = vunpack.c.l.b16 %v3699
    %v3702 = vunpack.c.h.b16 %v3699
    %v3703 = vpack.c.b16 %v3701, %v3701
    %v3704 = vpack.c.b16 %v3702, %v3702
    %3707 = vst [vmem:[%s1658] sm:$0xf] %v3703
    %3708 = vst [vmem:[%s1658 + $0x4] sm:$0xf] %v3704
    %v3709 = vld [vmem:[%s1663] sm:$0xff]
    %v3710 = vld [vmem:[%s1663 + $0x8] sm:$0xff]
    %v3711 = vld [vmem:[%s1663 + $0x10] sm:$0xff]
    %v3712 = vld [vmem:[%s1663 + $0x18] sm:$0xff]
    %v3713 = vld [vmem:[%s1663 + $0x20] sm:$0xff]
    %v3714 = vld [vmem:[%s1663 + $0x28] sm:$0xff]
    %v3715 = vld [vmem:[%s1663 + $0x30] sm:$0xff]
    %v3716 = vld [vmem:[%s1663 + $0x38] sm:$0xff]
    %3717 = vmatprep.subr.bf16.mxu0 %v2722
    %3718 = vmatpush1.bf16.msra.mxu0 %v2721
    %3719 = vmatprep.subr.bf16.mxu0 %v2718
    %3720 = vmatpush1.bf16.msra.mxu0 %v2717
    %3721 = vmatprep.subr.bf16.mxu0 %v2714
    %3722 = vmatpush1.bf16.msra.mxu0 %v2713
    %3723 = vmatprep.subr.bf16.mxu0 %v2710
    %3724 = vmatpush1.bf16.msra.mxu0 %v2709
    %3725 = vmatprep.subr.bf16.mxu0 %v2706
    %3726 = vmatpush1.bf16.msra.mxu0 %v2705
    %3727 = vmatprep.subr.bf16.mxu0 %v2702
    %3728 = vmatpush1.bf16.msra.mxu0 %v2701
    %3729 = vmatprep.subr.bf16.mxu0 %v2698
    %3730 = vmatpush1.bf16.msra.mxu0 %v2697
    %3731 = vmatprep.subr.bf16.mxu0 %v2694
    %3732 = vmatpush1.bf16.msra.mxu0 %v2693
    %3733 = vmatprep.subr.bf16.mxu0 0
    %3734 = vmatpush2.bf16.msra.mxu0 0
    %3735 = vmatprep.subr.bf16.mxu0 0
    %3736 = vmatpush2.bf16.msra.mxu0 0
    %3737 = vmatprep.subr.bf16.mxu0 0
    %3738 = vmatpush2.bf16.msra.mxu0 0
    %3739 = vmatprep.subr.bf16.mxu0 0
    %3740 = vmatpush2.bf16.msra.mxu0 0
    %3741 = vmatprep.subr.bf16.mxu0 0
    %3742 = vmatpush2.bf16.msra.mxu0 0
    %3743 = vmatprep.subr.bf16.mxu0 0
    %3744 = vmatpush2.bf16.msra.mxu0 0
    %3745 = vmatprep.subr.bf16.mxu0 0
    %3746 = vmatpush2.bf16.msra.mxu0 0
    %3747 = vmatprep.subr.bf16.mxu0 0
    %3748 = vmatpush2.bf16.msra.mxu0 0
    %3749 = vmatprep.mubr.bf16.mxu0 0
    %3750 = vmatmul.mubr.bf16.gmra.mxu0 %v3699
    %v3751 = vpop.f32.mrf.mxu0
    %v3752 = vadd.f32 0.0, %v3751
    %v3753 = vpop.f32.mrf.mxu0
    %v3754 = vadd.f32 0.0, %v3753
    %v3755 = vpop.f32.mrf.mxu0
    %v3756 = vadd.f32 0.0, %v3755
    %v3757 = vpop.f32.mrf.mxu0
    %v3758 = vadd.f32 0.0, %v3757
    %3759 = vdwg.mxu0
    %3760 = vmatprep.subr.bf16.mxu0 %v2724
    %3761 = vmatpush1.bf16.msra.mxu0 %v2723
    %3762 = vmatprep.subr.bf16.mxu0 %v2720
    %3763 = vmatpush1.bf16.msra.mxu0 %v2719
    %3764 = vmatprep.subr.bf16.mxu0 %v2716
    %3765 = vmatpush1.bf16.msra.mxu0 %v2715
    %3766 = vmatprep.subr.bf16.mxu0 %v2712
    %3767 = vmatpush1.bf16.msra.mxu0 %v2711
    %3768 = vmatprep.subr.bf16.mxu0 %v2708
    %3769 = vmatpush1.bf16.msra.mxu0 %v2707
    %3770 = vmatprep.subr.bf16.mxu0 %v2704
    %3771 = vmatpush1.bf16.msra.mxu0 %v2703
    %3772 = vmatprep.subr.bf16.mxu0 %v2700
    %3773 = vmatpush1.bf16.msra.mxu0 %v2699
    %3774 = vmatprep.subr.bf16.mxu0 %v2696
    %3775 = vmatpush1.bf16.msra.mxu0 %v2695
    %3776 = vmatprep.subr.bf16.mxu0 0
    %3777 = vmatpush2.bf16.msra.mxu0 0
    %3778 = vmatprep.subr.bf16.mxu0 0
    %3779 = vmatpush2.bf16.msra.mxu0 0
    %3780 = vmatprep.subr.bf16.mxu0 0
    %3781 = vmatpush2.bf16.msra.mxu0 0
    %3782 = vmatprep.subr.bf16.mxu0 0
    %3783 = vmatpush2.bf16.msra.mxu0 0
    %3784 = vmatprep.subr.bf16.mxu0 0
    %3785 = vmatpush2.bf16.msra.mxu0 0
    %3786 = vmatprep.subr.bf16.mxu0 0
    %3787 = vmatpush2.bf16.msra.mxu0 0
    %3788 = vmatprep.subr.bf16.mxu0 0
    %3789 = vmatpush2.bf16.msra.mxu0 0
    %3790 = vmatprep.subr.bf16.mxu0 0
    %3791 = vmatpush2.bf16.msra.mxu0 0
    %3792 = vmatprep.mubr.bf16.mxu0 0
    %3793 = vmatmul.mubr.bf16.gmra.mxu0 %v3699
    %v3794 = vpop.f32.mrf.mxu0
    %v3795 = vadd.f32 0.0, %v3794
    %v3796 = vpop.f32.mrf.mxu0
    %v3797 = vadd.f32 0.0, %v3796
    %v3798 = vpop.f32.mrf.mxu0
    %v3799 = vadd.f32 0.0, %v3798
    %v3800 = vpop.f32.mrf.mxu0
    %v3801 = vadd.f32 0.0, %v3800
    %3802 = vdwg.mxu0
    %v3803 = vadd.f32 %v3709, %v3752
    %v3804 = vadd.f32 %v3710, %v3754
    %v3805 = vadd.f32 %v3711, %v3795
    %v3806 = vadd.f32 %v3712, %v3797
    %v3807 = vadd.f32 %v3713, %v3756
    %v3808 = vadd.f32 %v3714, %v3758
    %v3809 = vadd.f32 %v3715, %v3799
    %v3810 = vadd.f32 %v3716, %v3801
    %v3811 = vxor.u32 %v3803, 2147483648
    %v3812 = vxor.u32 %v3807, 2147483648
    %v3813 = vmul.f32 %v3811, 1.442695
    %v3814 = vpow.pop %v3813
    %v3815 = vmul.f32 %v3812, 1.442695
    %v3816 = vpow.pop %v3815
    %v3817 = vadd.f32 %v3814, 1.0
    %v3818 = vadd.f32 %v3816, 1.0
    %v3819 = vrcp.pop %v3817
    %v3820 = vmul.f32 1.0, %v3819
    %v3821 = vrcp.pop %v3818
    %v3822 = vmul.f32 1.0, %v3821
    %v3823 = vxor.u32 %v3804, 2147483648
    %v3824 = vxor.u32 %v3808, 2147483648
    %v3825 = vmul.f32 %v3823, 1.442695
    %v3826 = vpow.pop %v3825
    %v3827 = vmul.f32 %v3824, 1.442695
    %v3828 = vpow.pop %v3827
    %v3829 = vadd.f32 %v3826, 1.0
    %v3830 = vadd.f32 %v3828, 1.0
    %v3831 = vrcp.pop %v3829
    %v3832 = vmul.f32 1.0, %v3831
    %v3833 = vrcp.pop %v3830
    %v3834 = vmul.f32 1.0, %v3833
    %v3835 = vtanh.pop %v3805
    %v3836 = vtanh.pop %v3809
    %v3837 = vxor.u32 %v3806, 2147483648
    %v3838 = vxor.u32 %v3810, 2147483648
    %v3839 = vmul.f32 %v3837, 1.442695
    %v3840 = vpow.pop %v3839
    %v3841 = vmul.f32 %v3838, 1.442695
    %v3842 = vpow.pop %v3841
    %v3843 = vadd.f32 %v3840, 1.0
    %v3844 = vadd.f32 %v3842, 1.0
    %v3845 = vrcp.pop %v3843
    %v3846 = vmul.f32 1.0, %v3845
    %v3847 = vrcp.pop %v3844
    %v3848 = vmul.f32 1.0, %v3847
    %v3849 = vmul.f32 %v3832, %v3693
    %v3850 = vmul.f32 %v3834, %v3694
    %v3851 = vmul.f32 %v3820, %v3835
    %v3852 = vmul.f32 %v3822, %v3836
    %v3853 = vadd.f32 %v3849, %v3851
    %v3854 = vadd.f32 %v3850, %v3852
    %v3855 = vtanh.pop %v3853
    %v3856 = vtanh.pop %v3854
    %v3857 = vmul.f32 %v3846, %v3855
    %v3858 = vmul.f32 %v3848, %v3856
    %v3859 = vpack.c.bf16 %v3858, %v3857
    %v3861 = vunpack.c.l.b16 %v3859
    %v3862 = vunpack.c.h.b16 %v3859
    %v3863 = vpack.c.b16 %v3861, %v3861
    %v3864 = vpack.c.b16 %v3862, %v3862
    %3867 = vst [vmem:[%s1822] sm:$0xf] %v3863
    %3868 = vst [vmem:[%s1822 + $0x4] sm:$0xf] %v3864
    %v3869 = vld [vmem:[%s1827] sm:$0xff]
    %v3870 = vld [vmem:[%s1827 + $0x8] sm:$0xff]
    %v3871 = vld [vmem:[%s1827 + $0x10] sm:$0xff]
    %v3872 = vld [vmem:[%s1827 + $0x18] sm:$0xff]
    %v3873 = vld [vmem:[%s1827 + $0x20] sm:$0xff]
    %v3874 = vld [vmem:[%s1827 + $0x28] sm:$0xff]
    %v3875 = vld [vmem:[%s1827 + $0x30] sm:$0xff]
    %v3876 = vld [vmem:[%s1827 + $0x38] sm:$0xff]
    %3877 = vmatprep.subr.bf16.mxu0 %v2722
    %3878 = vmatpush1.bf16.msra.mxu0 %v2721
    %3879 = vmatprep.subr.bf16.mxu0 %v2718
    %3880 = vmatpush1.bf16.msra.mxu0 %v2717
    %3881 = vmatprep.subr.bf16.mxu0 %v2714
    %3882 = vmatpush1.bf16.msra.mxu0 %v2713
    %3883 = vmatprep.subr.bf16.mxu0 %v2710
    %3884 = vmatpush1.bf16.msra.mxu0 %v2709
    %3885 = vmatprep.subr.bf16.mxu0 %v2706
    %3886 = vmatpush1.bf16.msra.mxu0 %v2705
    %3887 = vmatprep.subr.bf16.mxu0 %v2702
    %3888 = vmatpush1.bf16.msra.mxu0 %v2701
    %3889 = vmatprep.subr.bf16.mxu0 %v2698
    %3890 = vmatpush1.bf16.msra.mxu0 %v2697
    %3891 = vmatprep.subr.bf16.mxu0 %v2694
    %3892 = vmatpush1.bf16.msra.mxu0 %v2693
    %3893 = vmatprep.subr.bf16.mxu0 0
    %3894 = vmatpush2.bf16.msra.mxu0 0
    %3895 = vmatprep.subr.bf16.mxu0 0
    %3896 = vmatpush2.bf16.msra.mxu0 0
    %3897 = vmatprep.subr.bf16.mxu0 0
    %3898 = vmatpush2.bf16.msra.mxu0 0
    %3899 = vmatprep.subr.bf16.mxu0 0
    %3900 = vmatpush2.bf16.msra.mxu0 0
    %3901 = vmatprep.subr.bf16.mxu0 0
    %3902 = vmatpush2.bf16.msra.mxu0 0
    %3903 = vmatprep.subr.bf16.mxu0 0
    %3904 = vmatpush2.bf16.msra.mxu0 0
    %3905 = vmatprep.subr.bf16.mxu0 0
    %3906 = vmatpush2.bf16.msra.mxu0 0
    %3907 = vmatprep.subr.bf16.mxu0 0
    %3908 = vmatpush2.bf16.msra.mxu0 0
    %3909 = vmatprep.mubr.bf16.mxu0 0
    %3910 = vmatmul.mubr.bf16.gmra.mxu0 %v3859
    %v3911 = vpop.f32.mrf.mxu0
    %v3912 = vadd.f32 0.0, %v3911
    %v3913 = vpop.f32.mrf.mxu0
    %v3914 = vadd.f32 0.0, %v3913
    %v3915 = vpop.f32.mrf.mxu0
    %v3916 = vadd.f32 0.0, %v3915
    %v3917 = vpop.f32.mrf.mxu0
    %v3918 = vadd.f32 0.0, %v3917
    %3919 = vdwg.mxu0
    %3920 = vmatprep.subr.bf16.mxu0 %v2724
    %3921 = vmatpush1.bf16.msra.mxu0 %v2723
    %3922 = vmatprep.subr.bf16.mxu0 %v2720
    %3923 = vmatpush1.bf16.msra.mxu0 %v2719
    %3924 = vmatprep.subr.bf16.mxu0 %v2716
    %3925 = vmatpush1.bf16.msra.mxu0 %v2715
    %3926 = vmatprep.subr.bf16.mxu0 %v2712
    %3927 = vmatpush1.bf16.msra.mxu0 %v2711
    %3928 = vmatprep.subr.bf16.mxu0 %v2708
    %3929 = vmatpush1.bf16.msra.mxu0 %v2707
    %3930 = vmatprep.subr.bf16.mxu0 %v2704
    %3931 = vmatpush1.bf16.msra.mxu0 %v2703
    %3932 = vmatprep.subr.bf16.mxu0 %v2700
    %3933 = vmatpush1.bf16.msra.mxu0 %v2699
    %3934 = vmatprep.subr.bf16.mxu0 %v2696
    %3935 = vmatpush1.bf16.msra.mxu0 %v2695
    %3936 = vmatprep.subr.bf16.mxu0 0
    %3937 = vmatpush2.bf16.msra.mxu0 0
    %3938 = vmatprep.subr.bf16.mxu0 0
    %3939 = vmatpush2.bf16.msra.mxu0 0
    %3940 = vmatprep.subr.bf16.mxu0 0
    %3941 = vmatpush2.bf16.msra.mxu0 0
    %3942 = vmatprep.subr.bf16.mxu0 0
    %3943 = vmatpush2.bf16.msra.mxu0 0
    %3944 = vmatprep.subr.bf16.mxu0 0
    %3945 = vmatpush2.bf16.msra.mxu0 0
    %3946 = vmatprep.subr.bf16.mxu0 0
    %3947 = vmatpush2.bf16.msra.mxu0 0
    %3948 = vmatprep.subr.bf16.mxu0 0
    %3949 = vmatpush2.bf16.msra.mxu0 0
    %3950 = vmatprep.subr.bf16.mxu0 0
    %3951 = vmatpush2.bf16.msra.mxu0 0
    %3952 = vmatprep.mubr.bf16.mxu0 0
    %3953 = vmatmul.mubr.bf16.gmra.mxu0 %v3859
    %v3954 = vpop.f32.mrf.mxu0
    %v3955 = vadd.f32 0.0, %v3954
    %v3956 = vpop.f32.mrf.mxu0
    %v3957 = vadd.f32 0.0, %v3956
    %v3958 = vpop.f32.mrf.mxu0
    %v3959 = vadd.f32 0.0, %v3958
    %v3960 = vpop.f32.mrf.mxu0
    %v3961 = vadd.f32 0.0, %v3960
    %3962 = vdwg.mxu0
    %v3963 = vadd.f32 %v3869, %v3912
    %v3964 = vadd.f32 %v3870, %v3914
    %v3965 = vadd.f32 %v3871, %v3955
    %v3966 = vadd.f32 %v3872, %v3957
    %v3967 = vadd.f32 %v3873, %v3916
    %v3968 = vadd.f32 %v3874, %v3918
    %v3969 = vadd.f32 %v3875, %v3959
    %v3970 = vadd.f32 %v3876, %v3961
    %v3971 = vxor.u32 %v3963, 2147483648
    %v3972 = vxor.u32 %v3967, 2147483648
    %v3973 = vmul.f32 %v3971, 1.442695
    %v3974 = vpow.pop %v3973
    %v3975 = vmul.f32 %v3972, 1.442695
    %v3976 = vpow.pop %v3975
    %v3977 = vadd.f32 %v3974, 1.0
    %v3978 = vadd.f32 %v3976, 1.0
    %v3979 = vrcp.pop %v3977
    %v3980 = vmul.f32 1.0, %v3979
    %v3981 = vrcp.pop %v3978
    %v3982 = vmul.f32 1.0, %v3981
    %v3983 = vxor.u32 %v3964, 2147483648
    %v3984 = vxor.u32 %v3968, 2147483648
    %v3985 = vmul.f32 %v3983, 1.442695
    %v3986 = vpow.pop %v3985
    %v3987 = vmul.f32 %v3984, 1.442695
    %v3988 = vpow.pop %v3987
    %v3989 = vadd.f32 %v3986, 1.0
    %v3990 = vadd.f32 %v3988, 1.0
    %v3991 = vrcp.pop %v3989
    %v3992 = vmul.f32 1.0, %v3991
    %v3993 = vrcp.pop %v3990
    %v3994 = vmul.f32 1.0, %v3993
    %v3995 = vtanh.pop %v3965
    %v3996 = vtanh.pop %v3969
    %v3997 = vxor.u32 %v3966, 2147483648
    %v3998 = vxor.u32 %v3970, 2147483648
    %v3999 = vmul.f32 %v3997, 1.442695
    %v4000 = vpow.pop %v3999
    %v4001 = vmul.f32 %v3998, 1.442695
    %v4002 = vpow.pop %v4001
    %v4003 = vadd.f32 %v4000, 1.0
    %v4004 = vadd.f32 %v4002, 1.0
    %v4005 = vrcp.pop %v4003
    %v4006 = vmul.f32 1.0, %v4005
    %v4007 = vrcp.pop %v4004
    %v4008 = vmul.f32 1.0, %v4007
    %v4009 = vmul.f32 %v3992, %v3853
    %v4010 = vmul.f32 %v3994, %v3854
    %v4011 = vmul.f32 %v3980, %v3995
    %v4012 = vmul.f32 %v3982, %v3996
    %v4013 = vadd.f32 %v4009, %v4011
    %v4014 = vadd.f32 %v4010, %v4012
    %v4015 = vtanh.pop %v4013
    %v4016 = vtanh.pop %v4014
    %v4017 = vmul.f32 %v4006, %v4015
    %v4018 = vmul.f32 %v4008, %v4016
    %v4019 = vpack.c.bf16 %v4018, %v4017
    %v4021 = vunpack.c.l.b16 %v4019
    %v4022 = vunpack.c.h.b16 %v4019
    %v4023 = vpack.c.b16 %v4021, %v4021
    %v4024 = vpack.c.b16 %v4022, %v4022
    %4027 = vst [vmem:[%s1986] sm:$0xf] %v4023
    %4028 = vst [vmem:[%s1986 + $0x4] sm:$0xf] %v4024
    // Predicated region
    $region42: #{tpu_custom_call.1} parent=1 // pred_check
      _
    $region43: #{tpu_custom_call.1} parent=1 // pred_check_branch
      %4030 = sbr.rel (0) target = $region45
    $region44: #{tpu_custom_call.1} parent=1 // pred_region
      %s4032 = ssub.s32 1024, 1024
      %4033 = vsyncadd [#allocation5], %s4032
      %s4034 = sshll.u32 [#allocation9], 4
      %s4035 = int_to_ptr.vmem [resolvable:$true] %s4034
      %4040 = dma.vmem_to_hbm [thread:$0]  %s4035, 1024, %s7, [#allocation5], 64, 64, 4
    $region45: #{tpu_custom_call.1} parent=1 // pred_fallthru
      _
    // Predicated region
    $region46: #{tpu_custom_call.1} parent=1 // pred_check
      _
    $region47: #{tpu_custom_call.1} parent=1 // pred_check_branch
      %4042 = sbr.rel (0) target = $region49
    $region48: #{tpu_custom_call.1} parent=1 // pred_region
      %4043 = dma.done [#allocation5], 1024
    $region49: #{tpu_custom_call.1} parent=1 // pred_fallthru
      _
    %4044 = vsyncpa [#allocation4], 1
    %4045 = vsyncpa [#allocation7], 1
    %4046 = vsyncpa [#allocation5], 1

</llo_original>
